<compile_context>
chip_gen: v7x
topology: tpu7x:2x2x1
jax: 0.10.0
libtpu: 0.0.40
codegen_flags: <defaults>
</compile_context>

<pallas_src>
import jax
import jax.numpy as jnp
from jax.experimental import pallas as pl
from jax.experimental.pallas import tpu as pltpu

# --- hyperparameters (the PyTorch globals n_class, emb_size, n_hidden) ---
N_CLASS = 16
EMB_SIZE = 8
N_HIDDEN = 32
BATCH = 2
SEQ_LEN = 8

HP = 128       # per-gate lane padding: one full 128-lane block per gate
B_PAD = 8      # batch padded to the f32 sublane count
C_PAD = 128    # class dim padded to a full lane block (lane-dense output store)


# ------------------------------ fused kernel ------------------------------
def _make_kernel(T: int, B: int, BP: int, HPc: int):
    """Builds the fused kernel for static (T, real-batch, padded-batch, padded-H) sizes."""

    def kernel(ids_ref, table_ref, wh1_ref, w2_ref, b2_ref, wo_ref, bo_ref,
               out_ref, gx_ref):

        def gates(g):
            # sigmoid(x) = 0.5*(tanh(x/2)+1): one EUP tanh per gate, no exp/divide on the
            # serial chain. Gate slices are whole 128-lane blocks (no cross-lane work).
            i_g = 0.5 * (jnp.tanh(0.5 * g[:, 0 * HPc:1 * HPc]) + 1.0)
            f_g = 0.5 * (jnp.tanh(0.5 * g[:, 1 * HPc:2 * HPc]) + 1.0)
            o_g = 0.5 * (jnp.tanh(0.5 * g[:, 2 * HPc:3 * HPc]) + 1.0)
            c_t = jnp.tanh(g[:, 3 * HPc:4 * HPc])
            return i_g, f_g, o_g, c_t

        # ---- embedding + layer-1 input projection (done up front, off the chain) ----
        # gx[t*BP + b, :] = emb[id(b,t)] @ wx1 + b1 = table[id(b,t), :]
        gx_ref[...] = jnp.zeros_like(gx_ref)          # padded batch rows: deterministic 0
        for t in range(T):
            for b in range(B):
                idx = ids_ref[b * T + t]              # SMEM scalar token id
                gx_ref[pl.ds(t * BP + b, 1), :] = table_ref[pl.ds(idx, 1), :]

        # ---- interleaved 2-layer recurrence -----------------------------------------
        # layer-1 step 0: h1_{-1} = 0 -> the recurrent matmul contributes nothing
        g1 = gx_ref[pl.ds(0, BP), :]
        i1, f1, o1, ct1 = gates(g1)
        c1 = i1 * ct1
        h1 = o1 * jnp.tanh(c1)

        h2 = jnp.zeros((BP, HPc), jnp.float32)
        c2 = jnp.zeros((BP, HPc), jnp.float32)

        # Fully unrolled static time loop (T=8 is small -> good LLO visibility).
        # TODO(synk): if T grows past ~32 switch to lax.fori_loop(..., unroll=k) or a grid
        # axis so live ranges stay within the 64-vreg file.
        for t in range(T):
            # layer-2 step t: fused K=2*HPc matmul over [h1_t ; h2_{t-1}] (uses OLD h1)
            x2 = jnp.concatenate([h1, h2], axis=1)                         # (BP, 2*HPc)
            g2 = jnp.dot(x2, w2_ref[...],
                         preferred_element_type=jnp.float32) + b2_ref[...]

            if t + 1 < T:
                # layer-1 step t+1: needs only h1_t -> independent of g2's matmul above,
                # so both matmuls of this super-step pipeline through the MXU.
                g1 = gx_ref[pl.ds((t + 1) * BP, BP), :] + jnp.dot(
                    h1, wh1_ref[...], preferred_element_type=jnp.float32)
                i1, f1, o1, ct1 = gates(g1)
                c1 = f1 * c1 + i1 * ct1
                h1 = o1 * jnp.tanh(c1)

            i2, f2, o2, ct2 = gates(g2)
            c2 = f2 * c2 + i2 * ct2
            h2 = o2 * jnp.tanh(c2)

        # ---- classification head: single lane-dense padded store --------------------
        out_ref[...] = jnp.dot(h2, wo_ref[...],
                               preferred_element_type=jnp.float32) + bo_ref[...]

    return kernel


# --------------------------- parameter preparation ------------------------
def _pad_gate_cols(w, H, HPc):
    """(K, 4H) -> (K, 4*HPc): each gate's H columns land in its own HPc-lane block."""
    K = w.shape[0]
    blocks = []
    for g in range(4):
        blk = jnp.zeros((K, HPc), w.dtype).at[:, :H].set(w[:, g * H:(g + 1) * H])
        blocks.append(blk)
    return jnp.concatenate(blocks, axis=1)


def _pad_rows(w, K_pad):
    return jnp.zeros((K_pad,) + w.shape[1:], w.dtype).at[:w.shape[0]].set(w)


def prepare_kernel_params(params):
    """One-time repack into padded, gate-block-aligned kernel params (all param-only work
    — including emb @ wx1 + b1 and the [wx2; wh2] row stack — happens here, not per call)."""
    H, HPc = N_HIDDEN, HP

    wx1p = _pad_gate_cols(params["l1_wx"], H, HPc)                        # (E, 4*HP)
    b1p = _pad_gate_cols(params["l1_b"].reshape(1, 4 * H), H, HPc)        # (1, 4*HP)
    table = params["emb"] @ wx1p + b1p                                    # (n_class, 4*HP)

    wh1 = _pad_rows(_pad_gate_cols(params["l1_wh"], H, HPc), HPc)         # (HP, 4*HP)
    wx2p = _pad_rows(_pad_gate_cols(params["l2_wx"], H, HPc), HPc)        # (HP, 4*HP)
    wh2p = _pad_rows(_pad_gate_cols(params["l2_wh"], H, HPc), HPc)        # (HP, 4*HP)
    w2 = jnp.concatenate([wx2p, wh2p], axis=0)                            # (2*HP, 4*HP)
    b2 = _pad_gate_cols(params["l2_b"].reshape(1, 4 * H), H, HPc)         # (1, 4*HP)

    wo = jnp.zeros((HPc, C_PAD), jnp.float32).at[:H, :N_CLASS].set(params["W"])
    bo = jnp.zeros((1, C_PAD), jnp.float32).at[:, :N_CLASS].set(params["b"])

    # Invariant: padded gate lanes / padded rows are exactly zero, so padded lanes stay
    # inert through the recurrence and can never leak into real lanes.
    lane_pad = (jnp.arange(4 * HPc) % HPc) >= H
    assert bool(jnp.all(table[:, lane_pad] == 0))
    assert bool(jnp.all(b2[:, lane_pad] == 0))
    assert bool(jnp.all(wh1[:, lane_pad] == 0)) and bool(jnp.all(wh1[H:, :] == 0))
    assert bool(jnp.all(w2[:, lane_pad] == 0))
    assert bool(jnp.all(w2[H:HPc, :] == 0)) and bool(jnp.all(w2[HPc + H:, :] == 0))
    assert bool(jnp.all(wo[H:, :] == 0)) and bool(jnp.all(wo[:, N_CLASS:] == 0))
    assert bool(jnp.all(bo[:, N_CLASS:] == 0))

    return {"table": table, "wh1": wh1, "w2": w2, "b2": b2, "wo": wo, "bo": bo}


# ------------------------------ forward ----------------------------------
@jax.jit
def text_lstm_forward(kp, X):
    """X: (B, T) int token ids -> logits (B, n_class). Mirrors TextLSTM.forward."""
    B, T = X.shape
    assert B <= B_PAD
    ids = X.reshape(B * T).astype(jnp.int32)   # free flatten; row index = b*T + t (SMEM)

    out = pl.pallas_call(
        _make_kernel(T, B, B_PAD, HP),
        out_shape=jax.ShapeDtypeStruct((B_PAD, C_PAD), jnp.float32),
        in_specs=[
            pl.BlockSpec(memory_space=pltpu.MemorySpace.SMEM),   # token ids (scalars)
            pl.BlockSpec(memory_space=pltpu.MemorySpace.VMEM),   # table = emb@wx1 + b1
            pl.BlockSpec(memory_space=pltpu.MemorySpace.VMEM),   # wh1
            pl.BlockSpec(memory_space=pltpu.MemorySpace.VMEM),   # w2 = [wx2; wh2]
            pl.BlockSpec(memory_space=pltpu.MemorySpace.VMEM),   # b2
            pl.BlockSpec(memory_space=pltpu.MemorySpace.VMEM),   # wo
            pl.BlockSpec(memory_space=pltpu.MemorySpace.VMEM),   # bo
        ],
        out_specs=pl.BlockSpec(memory_space=pltpu.MemorySpace.VMEM),
        scratch_shapes=[
            pltpu.VMEM((T * B_PAD, 4 * HP), jnp.float32),        # gathered gate x-projections
        ],
    )(ids, kp["table"], kp["wh1"], kp["w2"], kp["b2"], kp["wo"], kp["bo"])
    return out[:B, :N_CLASS]


# ------------------------------ parameters -------------------------------
def init_params(key):
    ks = jax.random.split(key, 8)

    def lin(k, fan_in, shape):
        bound = 1.0 / jnp.sqrt(fan_in)
        return jax.random.uniform(k, shape, jnp.float32, -bound, bound)

    return {
        "emb": jax.random.normal(ks[0], (N_CLASS, EMB_SIZE), jnp.float32),
        # layer 1: wx (E, 4H), wh (H, 4H), b (4H,) -- gate order [i, f, o, c]
        "l1_wx": lin(ks[1], EMB_SIZE, (EMB_SIZE, 4 * N_HIDDEN)),
        "l1_wh": lin(ks[2], N_HIDDEN, (N_HIDDEN, 4 * N_HIDDEN)),
        "l1_b": jnp.zeros((4 * N_HIDDEN,), jnp.float32),
        # layer 2: wx (H, 4H), wh (H, 4H), b (4H,)
        "l2_wx": lin(ks[3], N_HIDDEN, (N_HIDDEN, 4 * N_HIDDEN)),
        "l2_wh": lin(ks[4], N_HIDDEN, (N_HIDDEN, 4 * N_HIDDEN)),
        "l2_b": jnp.zeros((4 * N_HIDDEN,), jnp.float32),
        # head
        "W": lin(ks[5], N_HIDDEN, (N_HIDDEN, N_CLASS)),
        "b": jnp.zeros((N_CLASS,), jnp.float32),
    }


# ---------------------------- pure-JAX reference --------------------------
def _ref_lstm(x, wx, wh, b):
    T, B, _ = x.shape
    H = wh.shape[0]

    def step(carry, xt):
        h, c = carry
        g = xt @ wx + h @ wh + b
        i = jax.nn.sigmoid(g[:, 0 * H:1 * H])
        f = jax.nn.sigmoid(g[:, 1 * H:2 * H])
        o = jax.nn.sigmoid(g[:, 2 * H:3 * H])
        ct = jnp.tanh(g[:, 3 * H:4 * H])
        c = f * c + i * ct
        h = o * jnp.tanh(c)
        return (h, c), h

    init = (jnp.zeros((B, H), jnp.float32), jnp.zeros((B, H), jnp.float32))
    _, outs = jax.lax.scan(step, init, x)
    return outs


def _ref_forward(params, X):
    emb = jnp.take(params["emb"], X, axis=0)
    x = jnp.transpose(emb, (1, 0, 2))
    o1 = _ref_lstm(x, params["l1_wx"], params["l1_wh"], params["l1_b"])
    o2 = _ref_lstm(o1, params["l2_wx"], params["l2_wh"], params["l2_b"])
    return o2[-1] @ params["W"] + params["b"]


if __name__ == "__main__":
    key = jax.random.PRNGKey(0)
    pkey, xkey = jax.random.split(key)
    params = init_params(pkey)
    kparams = prepare_kernel_params(params)
    X = jax.random.randint(xkey, (BATCH, SEQ_LEN), 0, N_CLASS, dtype=jnp.int32)

    logits = jax.block_until_ready(text_lstm_forward(kparams, X))
    ref = jax.block_until_ready(_ref_forward(params, X))

    assert logits.shape == (BATCH, N_CLASS)
    assert jnp.allclose(logits, ref, atol=1e-4, rtol=1e-4), (logits, ref)
    print("KERNEL_OK")
</pallas_src>

<mosaic_0001>
module attributes {stable_mosaic.version = 11 : i64} {
  func.func @kernel(%arg0: memref<16xi32, #tpu.memory_space<smem>>, %arg1: memref<16x512xf32, #tpu.memory_space<vmem>>, %arg2: memref<128x512xf32, #tpu.memory_space<vmem>>, %arg3: memref<256x512xf32, #tpu.memory_space<vmem>>, %arg4: memref<1x512xf32, #tpu.memory_space<vmem>>, %arg5: memref<128x128xf32, #tpu.memory_space<vmem>>, %arg6: memref<1x128xf32, #tpu.memory_space<vmem>>, %arg7: memref<8x128xf32, #tpu.memory_space<vmem>>, %arg8: memref<64x512xf32, #tpu.memory_space<vmem>>) attributes {dimension_semantics = [], scalar_prefetch = 0 : i64, scratch_operands = 1 : i64, tpu.core_type = #tpu.core_type<tc>} {
    %cst = arith.constant 0.000000e+00 : f32
    %0 = vector.broadcast %cst : f32 to vector<64x512xf32>
    %c0 = arith.constant 0 : index
    %c0_0 = arith.constant 0 : index
    %1 = vector.load %arg8[%c0, %c0_0] : memref<64x512xf32, #tpu.memory_space<vmem>>, vector<64x512xf32>
    tpu.vector_store %arg8[%c0, %c0_0], %0 {strides = array<i32>} : memref<64x512xf32, #tpu.memory_space<vmem>>, vector<64x512xf32>,
    %c0_1 = arith.constant 0 : index
    %2 = memref.load %arg0[%c0_1] : memref<16xi32, #tpu.memory_space<smem>>
    %3 = arith.index_cast %2 : i32 to index
    %c0_2 = arith.constant 0 : index
    %4 = vector.load %arg1[%3, %c0_2] : memref<16x512xf32, #tpu.memory_space<vmem>>, vector<1x512xf32>
    %c0_3 = arith.constant 0 : index
    %c0_4 = arith.constant 0 : index
    %5 = vector.load %arg8[%c0_3, %c0_4] : memref<64x512xf32, #tpu.memory_space<vmem>>, vector<1x512xf32>
    tpu.vector_store %arg8[%c0_3, %c0_4], %4 {strides = array<i32>} : memref<64x512xf32, #tpu.memory_space<vmem>>, vector<1x512xf32>,
    %c8 = arith.constant 8 : index
    %6 = memref.load %arg0[%c8] : memref<16xi32, #tpu.memory_space<smem>>
    %7 = arith.index_cast %6 : i32 to index
    %c0_5 = arith.constant 0 : index
    %8 = vector.load %arg1[%7, %c0_5] : memref<16x512xf32, #tpu.memory_space<vmem>>, vector<1x512xf32>
    %c1 = arith.constant 1 : index
    %c0_6 = arith.constant 0 : index
    %9 = vector.load %arg8[%c1, %c0_6] : memref<64x512xf32, #tpu.memory_space<vmem>>, vector<1x512xf32>
    tpu.vector_store %arg8[%c1, %c0_6], %8 {strides = array<i32>} : memref<64x512xf32, #tpu.memory_space<vmem>>, vector<1x512xf32>,
    %c1_7 = arith.constant 1 : index
    %10 = memref.load %arg0[%c1_7] : memref<16xi32, #tpu.memory_space<smem>>
    %11 = arith.index_cast %10 : i32 to index
    %c0_8 = arith.constant 0 : index
    %12 = vector.load %arg1[%11, %c0_8] : memref<16x512xf32, #tpu.memory_space<vmem>>, vector<1x512xf32>
    %c8_9 = arith.constant 8 : index
    %c0_10 = arith.constant 0 : index
    %13 = vector.load %arg8[%c8_9, %c0_10] : memref<64x512xf32, #tpu.memory_space<vmem>>, vector<1x512xf32>
    tpu.vector_store %arg8[%c8_9, %c0_10], %12 {strides = array<i32>} : memref<64x512xf32, #tpu.memory_space<vmem>>, vector<1x512xf32>,
    %c9 = arith.constant 9 : index
    %14 = memref.load %arg0[%c9] : memref<16xi32, #tpu.memory_space<smem>>
    %15 = arith.index_cast %14 : i32 to index
    %c0_11 = arith.constant 0 : index
    %16 = vector.load %arg1[%15, %c0_11] : memref<16x512xf32, #tpu.memory_space<vmem>>, vector<1x512xf32>
    %c9_12 = arith.constant 9 : index
    %c0_13 = arith.constant 0 : index
    %17 = vector.load %arg8[%c9_12, %c0_13] : memref<64x512xf32, #tpu.memory_space<vmem>>, vector<1x512xf32>
    tpu.vector_store %arg8[%c9_12, %c0_13], %16 {strides = array<i32>} : memref<64x512xf32, #tpu.memory_space<vmem>>, vector<1x512xf32>,
    %c2 = arith.constant 2 : index
    %18 = memref.load %arg0[%c2] : memref<16xi32, #tpu.memory_space<smem>>
    %19 = arith.index_cast %18 : i32 to index
    %c0_14 = arith.constant 0 : index
    %20 = vector.load %arg1[%19, %c0_14] : memref<16x512xf32, #tpu.memory_space<vmem>>, vector<1x512xf32>
    %c16 = arith.constant 16 : index
    %c0_15 = arith.constant 0 : index
    %21 = vector.load %arg8[%c16, %c0_15] : memref<64x512xf32, #tpu.memory_space<vmem>>, vector<1x512xf32>
    tpu.vector_store %arg8[%c16, %c0_15], %20 {strides = array<i32>} : memref<64x512xf32, #tpu.memory_space<vmem>>, vector<1x512xf32>,
    %c10 = arith.constant 10 : index
    %22 = memref.load %arg0[%c10] : memref<16xi32, #tpu.memory_space<smem>>
    %23 = arith.index_cast %22 : i32 to index
    %c0_16 = arith.constant 0 : index
    %24 = vector.load %arg1[%23, %c0_16] : memref<16x512xf32, #tpu.memory_space<vmem>>, vector<1x512xf32>
    %c17 = arith.constant 17 : index
    %c0_17 = arith.constant 0 : index
    %25 = vector.load %arg8[%c17, %c0_17] : memref<64x512xf32, #tpu.memory_space<vmem>>, vector<1x512xf32>
    tpu.vector_store %arg8[%c17, %c0_17], %24 {strides = array<i32>} : memref<64x512xf32, #tpu.memory_space<vmem>>, vector<1x512xf32>,
    %c3 = arith.constant 3 : index
    %26 = memref.load %arg0[%c3] : memref<16xi32, #tpu.memory_space<smem>>
    %27 = arith.index_cast %26 : i32 to index
    %c0_18 = arith.constant 0 : index
    %28 = vector.load %arg1[%27, %c0_18] : memref<16x512xf32, #tpu.memory_space<vmem>>, vector<1x512xf32>
    %c24 = arith.constant 24 : index
    %c0_19 = arith.constant 0 : index
    %29 = vector.load %arg8[%c24, %c0_19] : memref<64x512xf32, #tpu.memory_space<vmem>>, vector<1x512xf32>
    tpu.vector_store %arg8[%c24, %c0_19], %28 {strides = array<i32>} : memref<64x512xf32, #tpu.memory_space<vmem>>, vector<1x512xf32>,
    %c11 = arith.constant 11 : index
    %30 = memref.load %arg0[%c11] : memref<16xi32, #tpu.memory_space<smem>>
    %31 = arith.index_cast %30 : i32 to index
    %c0_20 = arith.constant 0 : index
    %32 = vector.load %arg1[%31, %c0_20] : memref<16x512xf32, #tpu.memory_space<vmem>>, vector<1x512xf32>
    %c25 = arith.constant 25 : index
    %c0_21 = arith.constant 0 : index
    %33 = vector.load %arg8[%c25, %c0_21] : memref<64x512xf32, #tpu.memory_space<vmem>>, vector<1x512xf32>
    tpu.vector_store %arg8[%c25, %c0_21], %32 {strides = array<i32>} : memref<64x512xf32, #tpu.memory_space<vmem>>, vector<1x512xf32>,
    %c4 = arith.constant 4 : index
    %34 = memref.load %arg0[%c4] : memref<16xi32, #tpu.memory_space<smem>>
    %35 = arith.index_cast %34 : i32 to index
    %c0_22 = arith.constant 0 : index
    %36 = vector.load %arg1[%35, %c0_22] : memref<16x512xf32, #tpu.memory_space<vmem>>, vector<1x512xf32>
    %c32 = arith.constant 32 : index
    %c0_23 = arith.constant 0 : index
    %37 = vector.load %arg8[%c32, %c0_23] : memref<64x512xf32, #tpu.memory_space<vmem>>, vector<1x512xf32>
    tpu.vector_store %arg8[%c32, %c0_23], %36 {strides = array<i32>} : memref<64x512xf32, #tpu.memory_space<vmem>>, vector<1x512xf32>,
    %c12 = arith.constant 12 : index
    %38 = memref.load %arg0[%c12] : memref<16xi32, #tpu.memory_space<smem>>
    %39 = arith.index_cast %38 : i32 to index
    %c0_24 = arith.constant 0 : index
    %40 = vector.load %arg1[%39, %c0_24] : memref<16x512xf32, #tpu.memory_space<vmem>>, vector<1x512xf32>
    %c33 = arith.constant 33 : index
    %c0_25 = arith.constant 0 : index
    %41 = vector.load %arg8[%c33, %c0_25] : memref<64x512xf32, #tpu.memory_space<vmem>>, vector<1x512xf32>
    tpu.vector_store %arg8[%c33, %c0_25], %40 {strides = array<i32>} : memref<64x512xf32, #tpu.memory_space<vmem>>, vector<1x512xf32>,
    %c5 = arith.constant 5 : index
    %42 = memref.load %arg0[%c5] : memref<16xi32, #tpu.memory_space<smem>>
    %43 = arith.index_cast %42 : i32 to index
    %c0_26 = arith.constant 0 : index
    %44 = vector.load %arg1[%43, %c0_26] : memref<16x512xf32, #tpu.memory_space<vmem>>, vector<1x512xf32>
    %c40 = arith.constant 40 : index
    %c0_27 = arith.constant 0 : index
    %45 = vector.load %arg8[%c40, %c0_27] : memref<64x512xf32, #tpu.memory_space<vmem>>, vector<1x512xf32>
    tpu.vector_store %arg8[%c40, %c0_27], %44 {strides = array<i32>} : memref<64x512xf32, #tpu.memory_space<vmem>>, vector<1x512xf32>,
    %c13 = arith.constant 13 : index
    %46 = memref.load %arg0[%c13] : memref<16xi32, #tpu.memory_space<smem>>
    %47 = arith.index_cast %46 : i32 to index
    %c0_28 = arith.constant 0 : index
    %48 = vector.load %arg1[%47, %c0_28] : memref<16x512xf32, #tpu.memory_space<vmem>>, vector<1x512xf32>
    %c41 = arith.constant 41 : index
    %c0_29 = arith.constant 0 : index
    %49 = vector.load %arg8[%c41, %c0_29] : memref<64x512xf32, #tpu.memory_space<vmem>>, vector<1x512xf32>
    tpu.vector_store %arg8[%c41, %c0_29], %48 {strides = array<i32>} : memref<64x512xf32, #tpu.memory_space<vmem>>, vector<1x512xf32>,
    %c6 = arith.constant 6 : index
    %50 = memref.load %arg0[%c6] : memref<16xi32, #tpu.memory_space<smem>>
    %51 = arith.index_cast %50 : i32 to index
    %c0_30 = arith.constant 0 : index
    %52 = vector.load %arg1[%51, %c0_30] : memref<16x512xf32, #tpu.memory_space<vmem>>, vector<1x512xf32>
    %c48 = arith.constant 48 : index
    %c0_31 = arith.constant 0 : index
    %53 = vector.load %arg8[%c48, %c0_31] : memref<64x512xf32, #tpu.memory_space<vmem>>, vector<1x512xf32>
    tpu.vector_store %arg8[%c48, %c0_31], %52 {strides = array<i32>} : memref<64x512xf32, #tpu.memory_space<vmem>>, vector<1x512xf32>,
    %c14 = arith.constant 14 : index
    %54 = memref.load %arg0[%c14] : memref<16xi32, #tpu.memory_space<smem>>
    %55 = arith.index_cast %54 : i32 to index
    %c0_32 = arith.constant 0 : index
    %56 = vector.load %arg1[%55, %c0_32] : memref<16x512xf32, #tpu.memory_space<vmem>>, vector<1x512xf32>
    %c49 = arith.constant 49 : index
    %c0_33 = arith.constant 0 : index
    %57 = vector.load %arg8[%c49, %c0_33] : memref<64x512xf32, #tpu.memory_space<vmem>>, vector<1x512xf32>
    tpu.vector_store %arg8[%c49, %c0_33], %56 {strides = array<i32>} : memref<64x512xf32, #tpu.memory_space<vmem>>, vector<1x512xf32>,
    %c7 = arith.constant 7 : index
    %58 = memref.load %arg0[%c7] : memref<16xi32, #tpu.memory_space<smem>>
    %59 = arith.index_cast %58 : i32 to index
    %c0_34 = arith.constant 0 : index
    %60 = vector.load %arg1[%59, %c0_34] : memref<16x512xf32, #tpu.memory_space<vmem>>, vector<1x512xf32>
    %c56 = arith.constant 56 : index
    %c0_35 = arith.constant 0 : index
    %61 = vector.load %arg8[%c56, %c0_35] : memref<64x512xf32, #tpu.memory_space<vmem>>, vector<1x512xf32>
    tpu.vector_store %arg8[%c56, %c0_35], %60 {strides = array<i32>} : memref<64x512xf32, #tpu.memory_space<vmem>>, vector<1x512xf32>,
    %c15 = arith.constant 15 : index
    %62 = memref.load %arg0[%c15] : memref<16xi32, #tpu.memory_space<smem>>
    %63 = arith.index_cast %62 : i32 to index
    %c0_36 = arith.constant 0 : index
    %64 = vector.load %arg1[%63, %c0_36] : memref<16x512xf32, #tpu.memory_space<vmem>>, vector<1x512xf32>
    %c57 = arith.constant 57 : index
    %c0_37 = arith.constant 0 : index
    %65 = vector.load %arg8[%c57, %c0_37] : memref<64x512xf32, #tpu.memory_space<vmem>>, vector<1x512xf32>
    tpu.vector_store %arg8[%c57, %c0_37], %64 {strides = array<i32>} : memref<64x512xf32, #tpu.memory_space<vmem>>, vector<1x512xf32>,
    %c0_38 = arith.constant 0 : index
    %c0_39 = arith.constant 0 : index
    %66 = vector.load %arg8[%c0_38, %c0_39] : memref<64x512xf32, #tpu.memory_space<vmem>>, vector<8x512xf32>
    %67 = vector.extract_strided_slice %66 {offsets = [0, 0], sizes = [8, 128], strides = [1, 1]} : vector<8x512xf32> to vector<8x128xf32>
    %cst_40 = arith.constant 5.000000e-01 : f32
    %68 = vector.broadcast %cst_40 : f32 to vector<8x128xf32>
    %69 = arith.mulf %68, %67 : vector<8x128xf32>
    %70 = math.tanh %69 : vector<8x128xf32>
    %cst_41 = arith.constant 1.000000e+00 : f32
    %71 = vector.broadcast %cst_41 : f32 to vector<8x128xf32>
    %72 = arith.addf %70, %71 : vector<8x128xf32>
    %cst_42 = arith.constant 5.000000e-01 : f32
    %73 = vector.broadcast %cst_42 : f32 to vector<8x128xf32>
    %74 = arith.mulf %73, %72 : vector<8x128xf32>
    %75 = vector.extract_strided_slice %66 {offsets = [0, 256], sizes = [8, 128], strides = [1, 1]} : vector<8x512xf32> to vector<8x128xf32>
    %cst_43 = arith.constant 5.000000e-01 : f32
    %76 = vector.broadcast %cst_43 : f32 to vector<8x128xf32>
    %77 = arith.mulf %76, %75 : vector<8x128xf32>
    %78 = math.tanh %77 : vector<8x128xf32>
    %cst_44 = arith.constant 1.000000e+00 : f32
    %79 = vector.broadcast %cst_44 : f32 to vector<8x128xf32>
    %80 = arith.addf %78, %79 : vector<8x128xf32>
    %cst_45 = arith.constant 5.000000e-01 : f32
    %81 = vector.broadcast %cst_45 : f32 to vector<8x128xf32>
    %82 = arith.mulf %81, %80 : vector<8x128xf32>
    %83 = vector.extract_strided_slice %66 {offsets = [0, 384], sizes = [8, 128], strides = [1, 1]} : vector<8x512xf32> to vector<8x128xf32>
    %84 = math.tanh %83 : vector<8x128xf32>
    %85 = arith.mulf %74, %84 : vector<8x128xf32>
    %86 = math.tanh %85 : vector<8x128xf32>
    %87 = arith.mulf %82, %86 : vector<8x128xf32>
    %cst_46 = arith.constant 0.000000e+00 : f32
    %88 = vector.broadcast %cst_46 : f32 to vector<8x128xf32>
    %cst_47 = arith.constant 0.000000e+00 : f32
    %89 = vector.broadcast %cst_47 : f32 to vector<8x128xf32>
    %90 = tpu.concatenate %87, %88 in 1 : vector<8x128xf32>, vector<8x128xf32> -> vector<8x256xf32>
    %c0_48 = arith.constant 0 : index
    %c0_49 = arith.constant 0 : index
    %91 = vector.load %arg3[%c0_48, %c0_49] : memref<256x512xf32, #tpu.memory_space<vmem>>, vector<256x512xf32>
    %cst_50 = arith.constant dense<0.000000e+00> : vector<8x512xf32>
    %92 = tpu.matmul %90, %91, %cst_50 {dimension_numbers = #tpu.dot_dimension_numbers<[1], [0], [0], [1], [0, 0, 1, 1], [], []>} : vector<8x256xf32>, vector<256x512xf32>, vector<8x512xf32> -> vector<8x512xf32>
    %c0_51 = arith.constant 0 : index
    %c0_52 = arith.constant 0 : index
    %93 = vector.load %arg4[%c0_51, %c0_52] : memref<1x512xf32, #tpu.memory_space<vmem>>, vector<1x512xf32>
    %94 = vector.broadcast %93 : vector<1x512xf32> to vector<8x512xf32>
    %95 = arith.addf %92, %94 : vector<8x512xf32>
    %c8_53 = arith.constant 8 : index
    %c0_54 = arith.constant 0 : index
    %96 = vector.load %arg8[%c8_53, %c0_54] : memref<64x512xf32, #tpu.memory_space<vmem>>, vector<8x512xf32>
    %c0_55 = arith.constant 0 : index
    %c0_56 = arith.constant 0 : index
    %97 = vector.load %arg2[%c0_55, %c0_56] : memref<128x512xf32, #tpu.memory_space<vmem>>, vector<128x512xf32>
    %cst_57 = arith.constant dense<0.000000e+00> : vector<8x512xf32>
    %98 = tpu.matmul %87, %97, %cst_57 {dimension_numbers = #tpu.dot_dimension_numbers<[1], [0], [0], [1], [0, 0, 1, 1], [], []>} : vector<8x128xf32>, vector<128x512xf32>, vector<8x512xf32> -> vector<8x512xf32>
    %99 = arith.addf %96, %98 : vector<8x512xf32>
    %100 = vector.extract_strided_slice %99 {offsets = [0, 0], sizes = [8, 128], strides = [1, 1]} : vector<8x512xf32> to vector<8x128xf32>
    %cst_58 = arith.constant 5.000000e-01 : f32
    %101 = vector.broadcast %cst_58 : f32 to vector<8x128xf32>
    %102 = arith.mulf %101, %100 : vector<8x128xf32>
    %103 = math.tanh %102 : vector<8x128xf32>
    %cst_59 = arith.constant 1.000000e+00 : f32
    %104 = vector.broadcast %cst_59 : f32 to vector<8x128xf32>
    %105 = arith.addf %103, %104 : vector<8x128xf32>
    %cst_60 = arith.constant 5.000000e-01 : f32
    %106 = vector.broadcast %cst_60 : f32 to vector<8x128xf32>
    %107 = arith.mulf %106, %105 : vector<8x128xf32>
    %108 = vector.extract_strided_slice %99 {offsets = [0, 128], sizes = [8, 128], strides = [1, 1]} : vector<8x512xf32> to vector<8x128xf32>
    %cst_61 = arith.constant 5.000000e-01 : f32
    %109 = vector.broadcast %cst_61 : f32 to vector<8x128xf32>
    %110 = arith.mulf %109, %108 : vector<8x128xf32>
    %111 = math.tanh %110 : vector<8x128xf32>
    %cst_62 = arith.constant 1.000000e+00 : f32
    %112 = vector.broadcast %cst_62 : f32 to vector<8x128xf32>
    %113 = arith.addf %111, %112 : vector<8x128xf32>
    %cst_63 = arith.constant 5.000000e-01 : f32
    %114 = vector.broadcast %cst_63 : f32 to vector<8x128xf32>
    %115 = arith.mulf %114, %113 : vector<8x128xf32>
    %116 = vector.extract_strided_slice %99 {offsets = [0, 256], sizes = [8, 128], strides = [1, 1]} : vector<8x512xf32> to vector<8x128xf32>
    %cst_64 = arith.constant 5.000000e-01 : f32
    %117 = vector.broadcast %cst_64 : f32 to vector<8x128xf32>
    %118 = arith.mulf %117, %116 : vector<8x128xf32>
    %119 = math.tanh %118 : vector<8x128xf32>
    %cst_65 = arith.constant 1.000000e+00 : f32
    %120 = vector.broadcast %cst_65 : f32 to vector<8x128xf32>
    %121 = arith.addf %119, %120 : vector<8x128xf32>
    %cst_66 = arith.constant 5.000000e-01 : f32
    %122 = vector.broadcast %cst_66 : f32 to vector<8x128xf32>
    %123 = arith.mulf %122, %121 : vector<8x128xf32>
    %124 = vector.extract_strided_slice %99 {offsets = [0, 384], sizes = [8, 128], strides = [1, 1]} : vector<8x512xf32> to vector<8x128xf32>
    %125 = math.tanh %124 : vector<8x128xf32>
    %126 = arith.mulf %115, %85 : vector<8x128xf32>
    %127 = arith.mulf %107, %125 : vector<8x128xf32>
    %128 = arith.addf %126, %127 : vector<8x128xf32>
    %129 = math.tanh %128 : vector<8x128xf32>
    %130 = arith.mulf %123, %129 : vector<8x128xf32>
    %131 = vector.extract_strided_slice %95 {offsets = [0, 0], sizes = [8, 128], strides = [1, 1]} : vector<8x512xf32> to vector<8x128xf32>
    %cst_67 = arith.constant 5.000000e-01 : f32
    %132 = vector.broadcast %cst_67 : f32 to vector<8x128xf32>
    %133 = arith.mulf %132, %131 : vector<8x128xf32>
    %134 = math.tanh %133 : vector<8x128xf32>
    %cst_68 = arith.constant 1.000000e+00 : f32
    %135 = vector.broadcast %cst_68 : f32 to vector<8x128xf32>
    %136 = arith.addf %134, %135 : vector<8x128xf32>
    %cst_69 = arith.constant 5.000000e-01 : f32
    %137 = vector.broadcast %cst_69 : f32 to vector<8x128xf32>
    %138 = arith.mulf %137, %136 : vector<8x128xf32>
    %139 = vector.extract_strided_slice %95 {offsets = [0, 128], sizes = [8, 128], strides = [1, 1]} : vector<8x512xf32> to vector<8x128xf32>
    %cst_70 = arith.constant 5.000000e-01 : f32
    %140 = vector.broadcast %cst_70 : f32 to vector<8x128xf32>
    %141 = arith.mulf %140, %139 : vector<8x128xf32>
    %142 = math.tanh %141 : vector<8x128xf32>
    %cst_71 = arith.constant 1.000000e+00 : f32
    %143 = vector.broadcast %cst_71 : f32 to vector<8x128xf32>
    %144 = arith.addf %142, %143 : vector<8x128xf32>
    %cst_72 = arith.constant 5.000000e-01 : f32
    %145 = vector.broadcast %cst_72 : f32 to vector<8x128xf32>
    %146 = arith.mulf %145, %144 : vector<8x128xf32>
    %147 = vector.extract_strided_slice %95 {offsets = [0, 256], sizes = [8, 128], strides = [1, 1]} : vector<8x512xf32> to vector<8x128xf32>
    %cst_73 = arith.constant 5.000000e-01 : f32
    %148 = vector.broadcast %cst_73 : f32 to vector<8x128xf32>
    %149 = arith.mulf %148, %147 : vector<8x128xf32>
    %150 = math.tanh %149 : vector<8x128xf32>
    %cst_74 = arith.constant 1.000000e+00 : f32
    %151 = vector.broadcast %cst_74 : f32 to vector<8x128xf32>
    %152 = arith.addf %150, %151 : vector<8x128xf32>
    %cst_75 = arith.constant 5.000000e-01 : f32
    %153 = vector.broadcast %cst_75 : f32 to vector<8x128xf32>
    %154 = arith.mulf %153, %152 : vector<8x128xf32>
    %155 = vector.extract_strided_slice %95 {offsets = [0, 384], sizes = [8, 128], strides = [1, 1]} : vector<8x512xf32> to vector<8x128xf32>
    %156 = math.tanh %155 : vector<8x128xf32>
    %157 = arith.mulf %146, %89 : vector<8x128xf32>
    %158 = arith.mulf %138, %156 : vector<8x128xf32>
    %159 = arith.addf %157, %158 : vector<8x128xf32>
    %160 = math.tanh %159 : vector<8x128xf32>
    %161 = arith.mulf %154, %160 : vector<8x128xf32>
    %162 = tpu.concatenate %130, %161 in 1 : vector<8x128xf32>, vector<8x128xf32> -> vector<8x256xf32>
    %c0_76 = arith.constant 0 : index
    %c0_77 = arith.constant 0 : index
    %163 = vector.load %arg3[%c0_76, %c0_77] : memref<256x512xf32, #tpu.memory_space<vmem>>, vector<256x512xf32>
    %cst_78 = arith.constant dense<0.000000e+00> : vector<8x512xf32>
    %164 = tpu.matmul %162, %163, %cst_78 {dimension_numbers = #tpu.dot_dimension_numbers<[1], [0], [0], [1], [0, 0, 1, 1], [], []>} : vector<8x256xf32>, vector<256x512xf32>, vector<8x512xf32> -> vector<8x512xf32>
    %c0_79 = arith.constant 0 : index
    %c0_80 = arith.constant 0 : index
    %165 = vector.load %arg4[%c0_79, %c0_80] : memref<1x512xf32, #tpu.memory_space<vmem>>, vector<1x512xf32>
    %166 = vector.broadcast %165 : vector<1x512xf32> to vector<8x512xf32>
    %167 = arith.addf %164, %166 : vector<8x512xf32>
    %c16_81 = arith.constant 16 : index
    %c0_82 = arith.constant 0 : index
    %168 = vector.load %arg8[%c16_81, %c0_82] : memref<64x512xf32, #tpu.memory_space<vmem>>, vector<8x512xf32>
    %c0_83 = arith.constant 0 : index
    %c0_84 = arith.constant 0 : index
    %169 = vector.load %arg2[%c0_83, %c0_84] : memref<128x512xf32, #tpu.memory_space<vmem>>, vector<128x512xf32>
    %cst_85 = arith.constant dense<0.000000e+00> : vector<8x512xf32>
    %170 = tpu.matmul %130, %169, %cst_85 {dimension_numbers = #tpu.dot_dimension_numbers<[1], [0], [0], [1], [0, 0, 1, 1], [], []>} : vector<8x128xf32>, vector<128x512xf32>, vector<8x512xf32> -> vector<8x512xf32>
    %171 = arith.addf %168, %170 : vector<8x512xf32>
    %172 = vector.extract_strided_slice %171 {offsets = [0, 0], sizes = [8, 128], strides = [1, 1]} : vector<8x512xf32> to vector<8x128xf32>
    %cst_86 = arith.constant 5.000000e-01 : f32
    %173 = vector.broadcast %cst_86 : f32 to vector<8x128xf32>
    %174 = arith.mulf %173, %172 : vector<8x128xf32>
    %175 = math.tanh %174 : vector<8x128xf32>
    %cst_87 = arith.constant 1.000000e+00 : f32
    %176 = vector.broadcast %cst_87 : f32 to vector<8x128xf32>
    %177 = arith.addf %175, %176 : vector<8x128xf32>
    %cst_88 = arith.constant 5.000000e-01 : f32
    %178 = vector.broadcast %cst_88 : f32 to vector<8x128xf32>
    %179 = arith.mulf %178, %177 : vector<8x128xf32>
    %180 = vector.extract_strided_slice %171 {offsets = [0, 128], sizes = [8, 128], strides = [1, 1]} : vector<8x512xf32> to vector<8x128xf32>
    %cst_89 = arith.constant 5.000000e-01 : f32
    %181 = vector.broadcast %cst_89 : f32 to vector<8x128xf32>
    %182 = arith.mulf %181, %180 : vector<8x128xf32>
    %183 = math.tanh %182 : vector<8x128xf32>
    %cst_90 = arith.constant 1.000000e+00 : f32
    %184 = vector.broadcast %cst_90 : f32 to vector<8x128xf32>
    %185 = arith.addf %183, %184 : vector<8x128xf32>
    %cst_91 = arith.constant 5.000000e-01 : f32
    %186 = vector.broadcast %cst_91 : f32 to vector<8x128xf32>
    %187 = arith.mulf %186, %185 : vector<8x128xf32>
    %188 = vector.extract_strided_slice %171 {offsets = [0, 256], sizes = [8, 128], strides = [1, 1]} : vector<8x512xf32> to vector<8x128xf32>
    %cst_92 = arith.constant 5.000000e-01 : f32
    %189 = vector.broadcast %cst_92 : f32 to vector<8x128xf32>
    %190 = arith.mulf %189, %188 : vector<8x128xf32>
    %191 = math.tanh %190 : vector<8x128xf32>
    %cst_93 = arith.constant 1.000000e+00 : f32
    %192 = vector.broadcast %cst_93 : f32 to vector<8x128xf32>
    %193 = arith.addf %191, %192 : vector<8x128xf32>
    %cst_94 = arith.constant 5.000000e-01 : f32
    %194 = vector.broadcast %cst_94 : f32 to vector<8x128xf32>
    %195 = arith.mulf %194, %193 : vector<8x128xf32>
    %196 = vector.extract_strided_slice %171 {offsets = [0, 384], sizes = [8, 128], strides = [1, 1]} : vector<8x512xf32> to vector<8x128xf32>
    %197 = math.tanh %196 : vector<8x128xf32>
    %198 = arith.mulf %187, %128 : vector<8x128xf32>
    %199 = arith.mulf %179, %197 : vector<8x128xf32>
    %200 = arith.addf %198, %199 : vector<8x128xf32>
    %201 = math.tanh %200 : vector<8x128xf32>
    %202 = arith.mulf %195, %201 : vector<8x128xf32>
    %203 = vector.extract_strided_slice %167 {offsets = [0, 0], sizes = [8, 128], strides = [1, 1]} : vector<8x512xf32> to vector<8x128xf32>
    %cst_95 = arith.constant 5.000000e-01 : f32
    %204 = vector.broadcast %cst_95 : f32 to vector<8x128xf32>
    %205 = arith.mulf %204, %203 : vector<8x128xf32>
    %206 = math.tanh %205 : vector<8x128xf32>
    %cst_96 = arith.constant 1.000000e+00 : f32
    %207 = vector.broadcast %cst_96 : f32 to vector<8x128xf32>
    %208 = arith.addf %206, %207 : vector<8x128xf32>
    %cst_97 = arith.constant 5.000000e-01 : f32
    %209 = vector.broadcast %cst_97 : f32 to vector<8x128xf32>
    %210 = arith.mulf %209, %208 : vector<8x128xf32>
    %211 = vector.extract_strided_slice %167 {offsets = [0, 128], sizes = [8, 128], strides = [1, 1]} : vector<8x512xf32> to vector<8x128xf32>
    %cst_98 = arith.constant 5.000000e-01 : f32
    %212 = vector.broadcast %cst_98 : f32 to vector<8x128xf32>
    %213 = arith.mulf %212, %211 : vector<8x128xf32>
    %214 = math.tanh %213 : vector<8x128xf32>
    %cst_99 = arith.constant 1.000000e+00 : f32
    %215 = vector.broadcast %cst_99 : f32 to vector<8x128xf32>
    %216 = arith.addf %214, %215 : vector<8x128xf32>
    %cst_100 = arith.constant 5.000000e-01 : f32
    %217 = vector.broadcast %cst_100 : f32 to vector<8x128xf32>
    %218 = arith.mulf %217, %216 : vector<8x128xf32>
    %219 = vector.extract_strided_slice %167 {offsets = [0, 256], sizes = [8, 128], strides = [1, 1]} : vector<8x512xf32> to vector<8x128xf32>
    %cst_101 = arith.constant 5.000000e-01 : f32
    %220 = vector.broadcast %cst_101 : f32 to vector<8x128xf32>
    %221 = arith.mulf %220, %219 : vector<8x128xf32>
    %222 = math.tanh %221 : vector<8x128xf32>
    %cst_102 = arith.constant 1.000000e+00 : f32
    %223 = vector.broadcast %cst_102 : f32 to vector<8x128xf32>
    %224 = arith.addf %222, %223 : vector<8x128xf32>
    %cst_103 = arith.constant 5.000000e-01 : f32
    %225 = vector.broadcast %cst_103 : f32 to vector<8x128xf32>
    %226 = arith.mulf %225, %224 : vector<8x128xf32>
    %227 = vector.extract_strided_slice %167 {offsets = [0, 384], sizes = [8, 128], strides = [1, 1]} : vector<8x512xf32> to vector<8x128xf32>
    %228 = math.tanh %227 : vector<8x128xf32>
    %229 = arith.mulf %218, %159 : vector<8x128xf32>
    %230 = arith.mulf %210, %228 : vector<8x128xf32>
    %231 = arith.addf %229, %230 : vector<8x128xf32>
    %232 = math.tanh %231 : vector<8x128xf32>
    %233 = arith.mulf %226, %232 : vector<8x128xf32>
    %234 = tpu.concatenate %202, %233 in 1 : vector<8x128xf32>, vector<8x128xf32> -> vector<8x256xf32>
    %c0_104 = arith.constant 0 : index
    %c0_105 = arith.constant 0 : index
    %235 = vector.load %arg3[%c0_104, %c0_105] : memref<256x512xf32, #tpu.memory_space<vmem>>, vector<256x512xf32>
    %cst_106 = arith.constant dense<0.000000e+00> : vector<8x512xf32>
    %236 = tpu.matmul %234, %235, %cst_106 {dimension_numbers = #tpu.dot_dimension_numbers<[1], [0], [0], [1], [0, 0, 1, 1], [], []>} : vector<8x256xf32>, vector<256x512xf32>, vector<8x512xf32> -> vector<8x512xf32>
    %c0_107 = arith.constant 0 : index
    %c0_108 = arith.constant 0 : index
    %237 = vector.load %arg4[%c0_107, %c0_108] : memref<1x512xf32, #tpu.memory_space<vmem>>, vector<1x512xf32>
    %238 = vector.broadcast %237 : vector<1x512xf32> to vector<8x512xf32>
    %239 = arith.addf %236, %238 : vector<8x512xf32>
    %c24_109 = arith.constant 24 : index
    %c0_110 = arith.constant 0 : index
    %240 = vector.load %arg8[%c24_109, %c0_110] : memref<64x512xf32, #tpu.memory_space<vmem>>, vector<8x512xf32>
    %c0_111 = arith.constant 0 : index
    %c0_112 = arith.constant 0 : index
    %241 = vector.load %arg2[%c0_111, %c0_112] : memref<128x512xf32, #tpu.memory_space<vmem>>, vector<128x512xf32>
    %cst_113 = arith.constant dense<0.000000e+00> : vector<8x512xf32>
    %242 = tpu.matmul %202, %241, %cst_113 {dimension_numbers = #tpu.dot_dimension_numbers<[1], [0], [0], [1], [0, 0, 1, 1], [], []>} : vector<8x128xf32>, vector<128x512xf32>, vector<8x512xf32> -> vector<8x512xf32>
    %243 = arith.addf %240, %242 : vector<8x512xf32>
    %244 = vector.extract_strided_slice %243 {offsets = [0, 0], sizes = [8, 128], strides = [1, 1]} : vector<8x512xf32> to vector<8x128xf32>
    %cst_114 = arith.constant 5.000000e-01 : f32
    %245 = vector.broadcast %cst_114 : f32 to vector<8x128xf32>
    %246 = arith.mulf %245, %244 : vector<8x128xf32>
    %247 = math.tanh %246 : vector<8x128xf32>
    %cst_115 = arith.constant 1.000000e+00 : f32
    %248 = vector.broadcast %cst_115 : f32 to vector<8x128xf32>
    %249 = arith.addf %247, %248 : vector<8x128xf32>
    %cst_116 = arith.constant 5.000000e-01 : f32
    %250 = vector.broadcast %cst_116 : f32 to vector<8x128xf32>
    %251 = arith.mulf %250, %249 : vector<8x128xf32>
    %252 = vector.extract_strided_slice %243 {offsets = [0, 128], sizes = [8, 128], strides = [1, 1]} : vector<8x512xf32> to vector<8x128xf32>
    %cst_117 = arith.constant 5.000000e-01 : f32
    %253 = vector.broadcast %cst_117 : f32 to vector<8x128xf32>
    %254 = arith.mulf %253, %252 : vector<8x128xf32>
    %255 = math.tanh %254 : vector<8x128xf32>
    %cst_118 = arith.constant 1.000000e+00 : f32
    %256 = vector.broadcast %cst_118 : f32 to vector<8x128xf32>
    %257 = arith.addf %255, %256 : vector<8x128xf32>
    %cst_119 = arith.constant 5.000000e-01 : f32
    %258 = vector.broadcast %cst_119 : f32 to vector<8x128xf32>
    %259 = arith.mulf %258, %257 : vector<8x128xf32>
    %260 = vector.extract_strided_slice %243 {offsets = [0, 256], sizes = [8, 128], strides = [1, 1]} : vector<8x512xf32> to vector<8x128xf32>
    %cst_120 = arith.constant 5.000000e-01 : f32
    %261 = vector.broadcast %cst_120 : f32 to vector<8x128xf32>
    %262 = arith.mulf %261, %260 : vector<8x128xf32>
    %263 = math.tanh %262 : vector<8x128xf32>
    %cst_121 = arith.constant 1.000000e+00 : f32
    %264 = vector.broadcast %cst_121 : f32 to vector<8x128xf32>
    %265 = arith.addf %263, %264 : vector<8x128xf32>
    %cst_122 = arith.constant 5.000000e-01 : f32
    %266 = vector.broadcast %cst_122 : f32 to vector<8x128xf32>
    %267 = arith.mulf %266, %265 : vector<8x128xf32>
    %268 = vector.extract_strided_slice %243 {offsets = [0, 384], sizes = [8, 128], strides = [1, 1]} : vector<8x512xf32> to vector<8x128xf32>
    %269 = math.tanh %268 : vector<8x128xf32>
    %270 = arith.mulf %259, %200 : vector<8x128xf32>
    %271 = arith.mulf %251, %269 : vector<8x128xf32>
    %272 = arith.addf %270, %271 : vector<8x128xf32>
    %273 = math.tanh %272 : vector<8x128xf32>
    %274 = arith.mulf %267, %273 : vector<8x128xf32>
    %275 = vector.extract_strided_slice %239 {offsets = [0, 0], sizes = [8, 128], strides = [1, 1]} : vector<8x512xf32> to vector<8x128xf32>
    %cst_123 = arith.constant 5.000000e-01 : f32
    %276 = vector.broadcast %cst_123 : f32 to vector<8x128xf32>
    %277 = arith.mulf %276, %275 : vector<8x128xf32>
    %278 = math.tanh %277 : vector<8x128xf32>
    %cst_124 = arith.constant 1.000000e+00 : f32
    %279 = vector.broadcast %cst_124 : f32 to vector<8x128xf32>
    %280 = arith.addf %278, %279 : vector<8x128xf32>
    %cst_125 = arith.constant 5.000000e-01 : f32
    %281 = vector.broadcast %cst_125 : f32 to vector<8x128xf32>
    %282 = arith.mulf %281, %280 : vector<8x128xf32>
    %283 = vector.extract_strided_slice %239 {offsets = [0, 128], sizes = [8, 128], strides = [1, 1]} : vector<8x512xf32> to vector<8x128xf32>
    %cst_126 = arith.constant 5.000000e-01 : f32
    %284 = vector.broadcast %cst_126 : f32 to vector<8x128xf32>
    %285 = arith.mulf %284, %283 : vector<8x128xf32>
    %286 = math.tanh %285 : vector<8x128xf32>
    %cst_127 = arith.constant 1.000000e+00 : f32
    %287 = vector.broadcast %cst_127 : f32 to vector<8x128xf32>
    %288 = arith.addf %286, %287 : vector<8x128xf32>
    %cst_128 = arith.constant 5.000000e-01 : f32
    %289 = vector.broadcast %cst_128 : f32 to vector<8x128xf32>
    %290 = arith.mulf %289, %288 : vector<8x128xf32>
    %291 = vector.extract_strided_slice %239 {offsets = [0, 256], sizes = [8, 128], strides = [1, 1]} : vector<8x512xf32> to vector<8x128xf32>
    %cst_129 = arith.constant 5.000000e-01 : f32
    %292 = vector.broadcast %cst_129 : f32 to vector<8x128xf32>
    %293 = arith.mulf %292, %291 : vector<8x128xf32>
    %294 = math.tanh %293 : vector<8x128xf32>
    %cst_130 = arith.constant 1.000000e+00 : f32
    %295 = vector.broadcast %cst_130 : f32 to vector<8x128xf32>
    %296 = arith.addf %294, %295 : vector<8x128xf32>
    %cst_131 = arith.constant 5.000000e-01 : f32
    %297 = vector.broadcast %cst_131 : f32 to vector<8x128xf32>
    %298 = arith.mulf %297, %296 : vector<8x128xf32>
    %299 = vector.extract_strided_slice %239 {offsets = [0, 384], sizes = [8, 128], strides = [1, 1]} : vector<8x512xf32> to vector<8x128xf32>
    %300 = math.tanh %299 : vector<8x128xf32>
    %301 = arith.mulf %290, %231 : vector<8x128xf32>
    %302 = arith.mulf %282, %300 : vector<8x128xf32>
    %303 = arith.addf %301, %302 : vector<8x128xf32>
    %304 = math.tanh %303 : vector<8x128xf32>
    %305 = arith.mulf %298, %304 : vector<8x128xf32>
    %306 = tpu.concatenate %274, %305 in 1 : vector<8x128xf32>, vector<8x128xf32> -> vector<8x256xf32>
    %c0_132 = arith.constant 0 : index
    %c0_133 = arith.constant 0 : index
    %307 = vector.load %arg3[%c0_132, %c0_133] : memref<256x512xf32, #tpu.memory_space<vmem>>, vector<256x512xf32>
    %cst_134 = arith.constant dense<0.000000e+00> : vector<8x512xf32>
    %308 = tpu.matmul %306, %307, %cst_134 {dimension_numbers = #tpu.dot_dimension_numbers<[1], [0], [0], [1], [0, 0, 1, 1], [], []>} : vector<8x256xf32>, vector<256x512xf32>, vector<8x512xf32> -> vector<8x512xf32>
    %c0_135 = arith.constant 0 : index
    %c0_136 = arith.constant 0 : index
    %309 = vector.load %arg4[%c0_135, %c0_136] : memref<1x512xf32, #tpu.memory_space<vmem>>, vector<1x512xf32>
    %310 = vector.broadcast %309 : vector<1x512xf32> to vector<8x512xf32>
    %311 = arith.addf %308, %310 : vector<8x512xf32>
    %c32_137 = arith.constant 32 : index
    %c0_138 = arith.constant 0 : index
    %312 = vector.load %arg8[%c32_137, %c0_138] : memref<64x512xf32, #tpu.memory_space<vmem>>, vector<8x512xf32>
    %c0_139 = arith.constant 0 : index
    %c0_140 = arith.constant 0 : index
    %313 = vector.load %arg2[%c0_139, %c0_140] : memref<128x512xf32, #tpu.memory_space<vmem>>, vector<128x512xf32>
    %cst_141 = arith.constant dense<0.000000e+00> : vector<8x512xf32>
    %314 = tpu.matmul %274, %313, %cst_141 {dimension_numbers = #tpu.dot_dimension_numbers<[1], [0], [0], [1], [0, 0, 1, 1], [], []>} : vector<8x128xf32>, vector<128x512xf32>, vector<8x512xf32> -> vector<8x512xf32>
    %315 = arith.addf %312, %314 : vector<8x512xf32>
    %316 = vector.extract_strided_slice %315 {offsets = [0, 0], sizes = [8, 128], strides = [1, 1]} : vector<8x512xf32> to vector<8x128xf32>
    %cst_142 = arith.constant 5.000000e-01 : f32
    %317 = vector.broadcast %cst_142 : f32 to vector<8x128xf32>
    %318 = arith.mulf %317, %316 : vector<8x128xf32>
    %319 = math.tanh %318 : vector<8x128xf32>
    %cst_143 = arith.constant 1.000000e+00 : f32
    %320 = vector.broadcast %cst_143 : f32 to vector<8x128xf32>
    %321 = arith.addf %319, %320 : vector<8x128xf32>
    %cst_144 = arith.constant 5.000000e-01 : f32
    %322 = vector.broadcast %cst_144 : f32 to vector<8x128xf32>
    %323 = arith.mulf %322, %321 : vector<8x128xf32>
    %324 = vector.extract_strided_slice %315 {offsets = [0, 128], sizes = [8, 128], strides = [1, 1]} : vector<8x512xf32> to vector<8x128xf32>
    %cst_145 = arith.constant 5.000000e-01 : f32
    %325 = vector.broadcast %cst_145 : f32 to vector<8x128xf32>
    %326 = arith.mulf %325, %324 : vector<8x128xf32>
    %327 = math.tanh %326 : vector<8x128xf32>
    %cst_146 = arith.constant 1.000000e+00 : f32
    %328 = vector.broadcast %cst_146 : f32 to vector<8x128xf32>
    %329 = arith.addf %327, %328 : vector<8x128xf32>
    %cst_147 = arith.constant 5.000000e-01 : f32
    %330 = vector.broadcast %cst_147 : f32 to vector<8x128xf32>
    %331 = arith.mulf %330, %329 : vector<8x128xf32>
    %332 = vector.extract_strided_slice %315 {offsets = [0, 256], sizes = [8, 128], strides = [1, 1]} : vector<8x512xf32> to vector<8x128xf32>
    %cst_148 = arith.constant 5.000000e-01 : f32
    %333 = vector.broadcast %cst_148 : f32 to vector<8x128xf32>
    %334 = arith.mulf %333, %332 : vector<8x128xf32>
    %335 = math.tanh %334 : vector<8x128xf32>
    %cst_149 = arith.constant 1.000000e+00 : f32
    %336 = vector.broadcast %cst_149 : f32 to vector<8x128xf32>
    %337 = arith.addf %335, %336 : vector<8x128xf32>
    %cst_150 = arith.constant 5.000000e-01 : f32
    %338 = vector.broadcast %cst_150 : f32 to vector<8x128xf32>
    %339 = arith.mulf %338, %337 : vector<8x128xf32>
    %340 = vector.extract_strided_slice %315 {offsets = [0, 384], sizes = [8, 128], strides = [1, 1]} : vector<8x512xf32> to vector<8x128xf32>
    %341 = math.tanh %340 : vector<8x128xf32>
    %342 = arith.mulf %331, %272 : vector<8x128xf32>
    %343 = arith.mulf %323, %341 : vector<8x128xf32>
    %344 = arith.addf %342, %343 : vector<8x128xf32>
    %345 = math.tanh %344 : vector<8x128xf32>
    %346 = arith.mulf %339, %345 : vector<8x128xf32>
    %347 = vector.extract_strided_slice %311 {offsets = [0, 0], sizes = [8, 128], strides = [1, 1]} : vector<8x512xf32> to vector<8x128xf32>
    %cst_151 = arith.constant 5.000000e-01 : f32
    %348 = vector.broadcast %cst_151 : f32 to vector<8x128xf32>
    %349 = arith.mulf %348, %347 : vector<8x128xf32>
    %350 = math.tanh %349 : vector<8x128xf32>
    %cst_152 = arith.constant 1.000000e+00 : f32
    %351 = vector.broadcast %cst_152 : f32 to vector<8x128xf32>
    %352 = arith.addf %350, %351 : vector<8x128xf32>
    %cst_153 = arith.constant 5.000000e-01 : f32
    %353 = vector.broadcast %cst_153 : f32 to vector<8x128xf32>
    %354 = arith.mulf %353, %352 : vector<8x128xf32>
    %355 = vector.extract_strided_slice %311 {offsets = [0, 128], sizes = [8, 128], strides = [1, 1]} : vector<8x512xf32> to vector<8x128xf32>
    %cst_154 = arith.constant 5.000000e-01 : f32
    %356 = vector.broadcast %cst_154 : f32 to vector<8x128xf32>
    %357 = arith.mulf %356, %355 : vector<8x128xf32>
    %358 = math.tanh %357 : vector<8x128xf32>
    %cst_155 = arith.constant 1.000000e+00 : f32
    %359 = vector.broadcast %cst_155 : f32 to vector<8x128xf32>
    %360 = arith.addf %358, %359 : vector<8x128xf32>
    %cst_156 = arith.constant 5.000000e-01 : f32
    %361 = vector.broadcast %cst_156 : f32 to vector<8x128xf32>
    %362 = arith.mulf %361, %360 : vector<8x128xf32>
    %363 = vector.extract_strided_slice %311 {offsets = [0, 256], sizes = [8, 128], strides = [1, 1]} : vector<8x512xf32> to vector<8x128xf32>
    %cst_157 = arith.constant 5.000000e-01 : f32
    %364 = vector.broadcast %cst_157 : f32 to vector<8x128xf32>
    %365 = arith.mulf %364, %363 : vector<8x128xf32>
    %366 = math.tanh %365 : vector<8x128xf32>
    %cst_158 = arith.constant 1.000000e+00 : f32
    %367 = vector.broadcast %cst_158 : f32 to vector<8x128xf32>
    %368 = arith.addf %366, %367 : vector<8x128xf32>
    %cst_159 = arith.constant 5.000000e-01 : f32
    %369 = vector.broadcast %cst_159 : f32 to vector<8x128xf32>
    %370 = arith.mulf %369, %368 : vector<8x128xf32>
    %371 = vector.extract_strided_slice %311 {offsets = [0, 384], sizes = [8, 128], strides = [1, 1]} : vector<8x512xf32> to vector<8x128xf32>
    %372 = math.tanh %371 : vector<8x128xf32>
    %373 = arith.mulf %362, %303 : vector<8x128xf32>
    %374 = arith.mulf %354, %372 : vector<8x128xf32>
    %375 = arith.addf %373, %374 : vector<8x128xf32>
    %376 = math.tanh %375 : vector<8x128xf32>
    %377 = arith.mulf %370, %376 : vector<8x128xf32>
    %378 = tpu.concatenate %346, %377 in 1 : vector<8x128xf32>, vector<8x128xf32> -> vector<8x256xf32>
    %c0_160 = arith.constant 0 : index
    %c0_161 = arith.constant 0 : index
    %379 = vector.load %arg3[%c0_160, %c0_161] : memref<256x512xf32, #tpu.memory_space<vmem>>, vector<256x512xf32>
    %cst_162 = arith.constant dense<0.000000e+00> : vector<8x512xf32>
    %380 = tpu.matmul %378, %379, %cst_162 {dimension_numbers = #tpu.dot_dimension_numbers<[1], [0], [0], [1], [0, 0, 1, 1], [], []>} : vector<8x256xf32>, vector<256x512xf32>, vector<8x512xf32> -> vector<8x512xf32>
    %c0_163 = arith.constant 0 : index
    %c0_164 = arith.constant 0 : index
    %381 = vector.load %arg4[%c0_163, %c0_164] : memref<1x512xf32, #tpu.memory_space<vmem>>, vector<1x512xf32>
    %382 = vector.broadcast %381 : vector<1x512xf32> to vector<8x512xf32>
    %383 = arith.addf %380, %382 : vector<8x512xf32>
    %c40_165 = arith.constant 40 : index
    %c0_166 = arith.constant 0 : index
    %384 = vector.load %arg8[%c40_165, %c0_166] : memref<64x512xf32, #tpu.memory_space<vmem>>, vector<8x512xf32>
    %c0_167 = arith.constant 0 : index
    %c0_168 = arith.constant 0 : index
    %385 = vector.load %arg2[%c0_167, %c0_168] : memref<128x512xf32, #tpu.memory_space<vmem>>, vector<128x512xf32>
    %cst_169 = arith.constant dense<0.000000e+00> : vector<8x512xf32>
    %386 = tpu.matmul %346, %385, %cst_169 {dimension_numbers = #tpu.dot_dimension_numbers<[1], [0], [0], [1], [0, 0, 1, 1], [], []>} : vector<8x128xf32>, vector<128x512xf32>, vector<8x512xf32> -> vector<8x512xf32>
    %387 = arith.addf %384, %386 : vector<8x512xf32>
    %388 = vector.extract_strided_slice %387 {offsets = [0, 0], sizes = [8, 128], strides = [1, 1]} : vector<8x512xf32> to vector<8x128xf32>
    %cst_170 = arith.constant 5.000000e-01 : f32
    %389 = vector.broadcast %cst_170 : f32 to vector<8x128xf32>
    %390 = arith.mulf %389, %388 : vector<8x128xf32>
    %391 = math.tanh %390 : vector<8x128xf32>
    %cst_171 = arith.constant 1.000000e+00 : f32
    %392 = vector.broadcast %cst_171 : f32 to vector<8x128xf32>
    %393 = arith.addf %391, %392 : vector<8x128xf32>
    %cst_172 = arith.constant 5.000000e-01 : f32
    %394 = vector.broadcast %cst_172 : f32 to vector<8x128xf32>
    %395 = arith.mulf %394, %393 : vector<8x128xf32>
    %396 = vector.extract_strided_slice %387 {offsets = [0, 128], sizes = [8, 128], strides = [1, 1]} : vector<8x512xf32> to vector<8x128xf32>
    %cst_173 = arith.constant 5.000000e-01 : f32
    %397 = vector.broadcast %cst_173 : f32 to vector<8x128xf32>
    %398 = arith.mulf %397, %396 : vector<8x128xf32>
    %399 = math.tanh %398 : vector<8x128xf32>
    %cst_174 = arith.constant 1.000000e+00 : f32
    %400 = vector.broadcast %cst_174 : f32 to vector<8x128xf32>
    %401 = arith.addf %399, %400 : vector<8x128xf32>
    %cst_175 = arith.constant 5.000000e-01 : f32
    %402 = vector.broadcast %cst_175 : f32 to vector<8x128xf32>
    %403 = arith.mulf %402, %401 : vector<8x128xf32>
    %404 = vector.extract_strided_slice %387 {offsets = [0, 256], sizes = [8, 128], strides = [1, 1]} : vector<8x512xf32> to vector<8x128xf32>
    %cst_176 = arith.constant 5.000000e-01 : f32
    %405 = vector.broadcast %cst_176 : f32 to vector<8x128xf32>
    %406 = arith.mulf %405, %404 : vector<8x128xf32>
    %407 = math.tanh %406 : vector<8x128xf32>
    %cst_177 = arith.constant 1.000000e+00 : f32
    %408 = vector.broadcast %cst_177 : f32 to vector<8x128xf32>
    %409 = arith.addf %407, %408 : vector<8x128xf32>
    %cst_178 = arith.constant 5.000000e-01 : f32
    %410 = vector.broadcast %cst_178 : f32 to vector<8x128xf32>
    %411 = arith.mulf %410, %409 : vector<8x128xf32>
    %412 = vector.extract_strided_slice %387 {offsets = [0, 384], sizes = [8, 128], strides = [1, 1]} : vector<8x512xf32> to vector<8x128xf32>
    %413 = math.tanh %412 : vector<8x128xf32>
    %414 = arith.mulf %403, %344 : vector<8x128xf32>
    %415 = arith.mulf %395, %413 : vector<8x128xf32>
    %416 = arith.addf %414, %415 : vector<8x128xf32>
    %417 = math.tanh %416 : vector<8x128xf32>
    %418 = arith.mulf %411, %417 : vector<8x128xf32>
    %419 = vector.extract_strided_slice %383 {offsets = [0, 0], sizes = [8, 128], strides = [1, 1]} : vector<8x512xf32> to vector<8x128xf32>
    %cst_179 = arith.constant 5.000000e-01 : f32
    %420 = vector.broadcast %cst_179 : f32 to vector<8x128xf32>
    %421 = arith.mulf %420, %419 : vector<8x128xf32>
    %422 = math.tanh %421 : vector<8x128xf32>
    %cst_180 = arith.constant 1.000000e+00 : f32
    %423 = vector.broadcast %cst_180 : f32 to vector<8x128xf32>
    %424 = arith.addf %422, %423 : vector<8x128xf32>
    %cst_181 = arith.constant 5.000000e-01 : f32
    %425 = vector.broadcast %cst_181 : f32 to vector<8x128xf32>
    %426 = arith.mulf %425, %424 : vector<8x128xf32>
    %427 = vector.extract_strided_slice %383 {offsets = [0, 128], sizes = [8, 128], strides = [1, 1]} : vector<8x512xf32> to vector<8x128xf32>
    %cst_182 = arith.constant 5.000000e-01 : f32
    %428 = vector.broadcast %cst_182 : f32 to vector<8x128xf32>
    %429 = arith.mulf %428, %427 : vector<8x128xf32>
    %430 = math.tanh %429 : vector<8x128xf32>
    %cst_183 = arith.constant 1.000000e+00 : f32
    %431 = vector.broadcast %cst_183 : f32 to vector<8x128xf32>
    %432 = arith.addf %430, %431 : vector<8x128xf32>
    %cst_184 = arith.constant 5.000000e-01 : f32
    %433 = vector.broadcast %cst_184 : f32 to vector<8x128xf32>
    %434 = arith.mulf %433, %432 : vector<8x128xf32>
    %435 = vector.extract_strided_slice %383 {offsets = [0, 256], sizes = [8, 128], strides = [1, 1]} : vector<8x512xf32> to vector<8x128xf32>
    %cst_185 = arith.constant 5.000000e-01 : f32
    %436 = vector.broadcast %cst_185 : f32 to vector<8x128xf32>
    %437 = arith.mulf %436, %435 : vector<8x128xf32>
    %438 = math.tanh %437 : vector<8x128xf32>
    %cst_186 = arith.constant 1.000000e+00 : f32
    %439 = vector.broadcast %cst_186 : f32 to vector<8x128xf32>
    %440 = arith.addf %438, %439 : vector<8x128xf32>
    %cst_187 = arith.constant 5.000000e-01 : f32
    %441 = vector.broadcast %cst_187 : f32 to vector<8x128xf32>
    %442 = arith.mulf %441, %440 : vector<8x128xf32>
    %443 = vector.extract_strided_slice %383 {offsets = [0, 384], sizes = [8, 128], strides = [1, 1]} : vector<8x512xf32> to vector<8x128xf32>
    %444 = math.tanh %443 : vector<8x128xf32>
    %445 = arith.mulf %434, %375 : vector<8x128xf32>
    %446 = arith.mulf %426, %444 : vector<8x128xf32>
    %447 = arith.addf %445, %446 : vector<8x128xf32>
    %448 = math.tanh %447 : vector<8x128xf32>
    %449 = arith.mulf %442, %448 : vector<8x128xf32>
    %450 = tpu.concatenate %418, %449 in 1 : vector<8x128xf32>, vector<8x128xf32> -> vector<8x256xf32>
    %c0_188 = arith.constant 0 : index
    %c0_189 = arith.constant 0 : index
    %451 = vector.load %arg3[%c0_188, %c0_189] : memref<256x512xf32, #tpu.memory_space<vmem>>, vector<256x512xf32>
    %cst_190 = arith.constant dense<0.000000e+00> : vector<8x512xf32>
    %452 = tpu.matmul %450, %451, %cst_190 {dimension_numbers = #tpu.dot_dimension_numbers<[1], [0], [0], [1], [0, 0, 1, 1], [], []>} : vector<8x256xf32>, vector<256x512xf32>, vector<8x512xf32> -> vector<8x512xf32>
    %c0_191 = arith.constant 0 : index
    %c0_192 = arith.constant 0 : index
    %453 = vector.load %arg4[%c0_191, %c0_192] : memref<1x512xf32, #tpu.memory_space<vmem>>, vector<1x512xf32>
    %454 = vector.broadcast %453 : vector<1x512xf32> to vector<8x512xf32>
    %455 = arith.addf %452, %454 : vector<8x512xf32>
    %c48_193 = arith.constant 48 : index
    %c0_194 = arith.constant 0 : index
    %456 = vector.load %arg8[%c48_193, %c0_194] : memref<64x512xf32, #tpu.memory_space<vmem>>, vector<8x512xf32>
    %c0_195 = arith.constant 0 : index
    %c0_196 = arith.constant 0 : index
    %457 = vector.load %arg2[%c0_195, %c0_196] : memref<128x512xf32, #tpu.memory_space<vmem>>, vector<128x512xf32>
    %cst_197 = arith.constant dense<0.000000e+00> : vector<8x512xf32>
    %458 = tpu.matmul %418, %457, %cst_197 {dimension_numbers = #tpu.dot_dimension_numbers<[1], [0], [0], [1], [0, 0, 1, 1], [], []>} : vector<8x128xf32>, vector<128x512xf32>, vector<8x512xf32> -> vector<8x512xf32>
    %459 = arith.addf %456, %458 : vector<8x512xf32>
    %460 = vector.extract_strided_slice %459 {offsets = [0, 0], sizes = [8, 128], strides = [1, 1]} : vector<8x512xf32> to vector<8x128xf32>
    %cst_198 = arith.constant 5.000000e-01 : f32
    %461 = vector.broadcast %cst_198 : f32 to vector<8x128xf32>
    %462 = arith.mulf %461, %460 : vector<8x128xf32>
    %463 = math.tanh %462 : vector<8x128xf32>
    %cst_199 = arith.constant 1.000000e+00 : f32
    %464 = vector.broadcast %cst_199 : f32 to vector<8x128xf32>
    %465 = arith.addf %463, %464 : vector<8x128xf32>
    %cst_200 = arith.constant 5.000000e-01 : f32
    %466 = vector.broadcast %cst_200 : f32 to vector<8x128xf32>
    %467 = arith.mulf %466, %465 : vector<8x128xf32>
    %468 = vector.extract_strided_slice %459 {offsets = [0, 128], sizes = [8, 128], strides = [1, 1]} : vector<8x512xf32> to vector<8x128xf32>
    %cst_201 = arith.constant 5.000000e-01 : f32
    %469 = vector.broadcast %cst_201 : f32 to vector<8x128xf32>
    %470 = arith.mulf %469, %468 : vector<8x128xf32>
    %471 = math.tanh %470 : vector<8x128xf32>
    %cst_202 = arith.constant 1.000000e+00 : f32
    %472 = vector.broadcast %cst_202 : f32 to vector<8x128xf32>
    %473 = arith.addf %471, %472 : vector<8x128xf32>
    %cst_203 = arith.constant 5.000000e-01 : f32
    %474 = vector.broadcast %cst_203 : f32 to vector<8x128xf32>
    %475 = arith.mulf %474, %473 : vector<8x128xf32>
    %476 = vector.extract_strided_slice %459 {offsets = [0, 256], sizes = [8, 128], strides = [1, 1]} : vector<8x512xf32> to vector<8x128xf32>
    %cst_204 = arith.constant 5.000000e-01 : f32
    %477 = vector.broadcast %cst_204 : f32 to vector<8x128xf32>
    %478 = arith.mulf %477, %476 : vector<8x128xf32>
    %479 = math.tanh %478 : vector<8x128xf32>
    %cst_205 = arith.constant 1.000000e+00 : f32
    %480 = vector.broadcast %cst_205 : f32 to vector<8x128xf32>
    %481 = arith.addf %479, %480 : vector<8x128xf32>
    %cst_206 = arith.constant 5.000000e-01 : f32
    %482 = vector.broadcast %cst_206 : f32 to vector<8x128xf32>
    %483 = arith.mulf %482, %481 : vector<8x128xf32>
    %484 = vector.extract_strided_slice %459 {offsets = [0, 384], sizes = [8, 128], strides = [1, 1]} : vector<8x512xf32> to vector<8x128xf32>
    %485 = math.tanh %484 : vector<8x128xf32>
    %486 = arith.mulf %475, %416 : vector<8x128xf32>
    %487 = arith.mulf %467, %485 : vector<8x128xf32>
    %488 = arith.addf %486, %487 : vector<8x128xf32>
    %489 = math.tanh %488 : vector<8x128xf32>
    %490 = arith.mulf %483, %489 : vector<8x128xf32>
    %491 = vector.extract_strided_slice %455 {offsets = [0, 0], sizes = [8, 128], strides = [1, 1]} : vector<8x512xf32> to vector<8x128xf32>
    %cst_207 = arith.constant 5.000000e-01 : f32
    %492 = vector.broadcast %cst_207 : f32 to vector<8x128xf32>
    %493 = arith.mulf %492, %491 : vector<8x128xf32>
    %494 = math.tanh %493 : vector<8x128xf32>
    %cst_208 = arith.constant 1.000000e+00 : f32
    %495 = vector.broadcast %cst_208 : f32 to vector<8x128xf32>
    %496 = arith.addf %494, %495 : vector<8x128xf32>
    %cst_209 = arith.constant 5.000000e-01 : f32
    %497 = vector.broadcast %cst_209 : f32 to vector<8x128xf32>
    %498 = arith.mulf %497, %496 : vector<8x128xf32>
    %499 = vector.extract_strided_slice %455 {offsets = [0, 128], sizes = [8, 128], strides = [1, 1]} : vector<8x512xf32> to vector<8x128xf32>
    %cst_210 = arith.constant 5.000000e-01 : f32
    %500 = vector.broadcast %cst_210 : f32 to vector<8x128xf32>
    %501 = arith.mulf %500, %499 : vector<8x128xf32>
    %502 = math.tanh %501 : vector<8x128xf32>
    %cst_211 = arith.constant 1.000000e+00 : f32
    %503 = vector.broadcast %cst_211 : f32 to vector<8x128xf32>
    %504 = arith.addf %502, %503 : vector<8x128xf32>
    %cst_212 = arith.constant 5.000000e-01 : f32
    %505 = vector.broadcast %cst_212 : f32 to vector<8x128xf32>
    %506 = arith.mulf %505, %504 : vector<8x128xf32>
    %507 = vector.extract_strided_slice %455 {offsets = [0, 256], sizes = [8, 128], strides = [1, 1]} : vector<8x512xf32> to vector<8x128xf32>
    %cst_213 = arith.constant 5.000000e-01 : f32
    %508 = vector.broadcast %cst_213 : f32 to vector<8x128xf32>
    %509 = arith.mulf %508, %507 : vector<8x128xf32>
    %510 = math.tanh %509 : vector<8x128xf32>
    %cst_214 = arith.constant 1.000000e+00 : f32
    %511 = vector.broadcast %cst_214 : f32 to vector<8x128xf32>
    %512 = arith.addf %510, %511 : vector<8x128xf32>
    %cst_215 = arith.constant 5.000000e-01 : f32
    %513 = vector.broadcast %cst_215 : f32 to vector<8x128xf32>
    %514 = arith.mulf %513, %512 : vector<8x128xf32>
    %515 = vector.extract_strided_slice %455 {offsets = [0, 384], sizes = [8, 128], strides = [1, 1]} : vector<8x512xf32> to vector<8x128xf32>
    %516 = math.tanh %515 : vector<8x128xf32>
    %517 = arith.mulf %506, %447 : vector<8x128xf32>
    %518 = arith.mulf %498, %516 : vector<8x128xf32>
    %519 = arith.addf %517, %518 : vector<8x128xf32>
    %520 = math.tanh %519 : vector<8x128xf32>
    %521 = arith.mulf %514, %520 : vector<8x128xf32>
    %522 = tpu.concatenate %490, %521 in 1 : vector<8x128xf32>, vector<8x128xf32> -> vector<8x256xf32>
    %c0_216 = arith.constant 0 : index
    %c0_217 = arith.constant 0 : index
    %523 = vector.load %arg3[%c0_216, %c0_217] : memref<256x512xf32, #tpu.memory_space<vmem>>, vector<256x512xf32>
    %cst_218 = arith.constant dense<0.000000e+00> : vector<8x512xf32>
    %524 = tpu.matmul %522, %523, %cst_218 {dimension_numbers = #tpu.dot_dimension_numbers<[1], [0], [0], [1], [0, 0, 1, 1], [], []>} : vector<8x256xf32>, vector<256x512xf32>, vector<8x512xf32> -> vector<8x512xf32>
    %c0_219 = arith.constant 0 : index
    %c0_220 = arith.constant 0 : index
    %525 = vector.load %arg4[%c0_219, %c0_220] : memref<1x512xf32, #tpu.memory_space<vmem>>, vector<1x512xf32>
    %526 = vector.broadcast %525 : vector<1x512xf32> to vector<8x512xf32>
    %527 = arith.addf %524, %526 : vector<8x512xf32>
    %c56_221 = arith.constant 56 : index
    %c0_222 = arith.constant 0 : index
    %528 = vector.load %arg8[%c56_221, %c0_222] : memref<64x512xf32, #tpu.memory_space<vmem>>, vector<8x512xf32>
    %c0_223 = arith.constant 0 : index
    %c0_224 = arith.constant 0 : index
    %529 = vector.load %arg2[%c0_223, %c0_224] : memref<128x512xf32, #tpu.memory_space<vmem>>, vector<128x512xf32>
    %cst_225 = arith.constant dense<0.000000e+00> : vector<8x512xf32>
    %530 = tpu.matmul %490, %529, %cst_225 {dimension_numbers = #tpu.dot_dimension_numbers<[1], [0], [0], [1], [0, 0, 1, 1], [], []>} : vector<8x128xf32>, vector<128x512xf32>, vector<8x512xf32> -> vector<8x512xf32>
    %531 = arith.addf %528, %530 : vector<8x512xf32>
    %532 = vector.extract_strided_slice %531 {offsets = [0, 0], sizes = [8, 128], strides = [1, 1]} : vector<8x512xf32> to vector<8x128xf32>
    %cst_226 = arith.constant 5.000000e-01 : f32
    %533 = vector.broadcast %cst_226 : f32 to vector<8x128xf32>
    %534 = arith.mulf %533, %532 : vector<8x128xf32>
    %535 = math.tanh %534 : vector<8x128xf32>
    %cst_227 = arith.constant 1.000000e+00 : f32
    %536 = vector.broadcast %cst_227 : f32 to vector<8x128xf32>
    %537 = arith.addf %535, %536 : vector<8x128xf32>
    %cst_228 = arith.constant 5.000000e-01 : f32
    %538 = vector.broadcast %cst_228 : f32 to vector<8x128xf32>
    %539 = arith.mulf %538, %537 : vector<8x128xf32>
    %540 = vector.extract_strided_slice %531 {offsets = [0, 128], sizes = [8, 128], strides = [1, 1]} : vector<8x512xf32> to vector<8x128xf32>
    %cst_229 = arith.constant 5.000000e-01 : f32
    %541 = vector.broadcast %cst_229 : f32 to vector<8x128xf32>
    %542 = arith.mulf %541, %540 : vector<8x128xf32>
    %543 = math.tanh %542 : vector<8x128xf32>
    %cst_230 = arith.constant 1.000000e+00 : f32
    %544 = vector.broadcast %cst_230 : f32 to vector<8x128xf32>
    %545 = arith.addf %543, %544 : vector<8x128xf32>
    %cst_231 = arith.constant 5.000000e-01 : f32
    %546 = vector.broadcast %cst_231 : f32 to vector<8x128xf32>
    %547 = arith.mulf %546, %545 : vector<8x128xf32>
    %548 = vector.extract_strided_slice %531 {offsets = [0, 256], sizes = [8, 128], strides = [1, 1]} : vector<8x512xf32> to vector<8x128xf32>
    %cst_232 = arith.constant 5.000000e-01 : f32
    %549 = vector.broadcast %cst_232 : f32 to vector<8x128xf32>
    %550 = arith.mulf %549, %548 : vector<8x128xf32>
    %551 = math.tanh %550 : vector<8x128xf32>
    %cst_233 = arith.constant 1.000000e+00 : f32
    %552 = vector.broadcast %cst_233 : f32 to vector<8x128xf32>
    %553 = arith.addf %551, %552 : vector<8x128xf32>
    %cst_234 = arith.constant 5.000000e-01 : f32
    %554 = vector.broadcast %cst_234 : f32 to vector<8x128xf32>
    %555 = arith.mulf %554, %553 : vector<8x128xf32>
    %556 = vector.extract_strided_slice %531 {offsets = [0, 384], sizes = [8, 128], strides = [1, 1]} : vector<8x512xf32> to vector<8x128xf32>
    %557 = math.tanh %556 : vector<8x128xf32>
    %558 = arith.mulf %547, %488 : vector<8x128xf32>
    %559 = arith.mulf %539, %557 : vector<8x128xf32>
    %560 = arith.addf %558, %559 : vector<8x128xf32>
    %561 = math.tanh %560 : vector<8x128xf32>
    %562 = arith.mulf %555, %561 : vector<8x128xf32>
    %563 = vector.extract_strided_slice %527 {offsets = [0, 0], sizes = [8, 128], strides = [1, 1]} : vector<8x512xf32> to vector<8x128xf32>
    %cst_235 = arith.constant 5.000000e-01 : f32
    %564 = vector.broadcast %cst_235 : f32 to vector<8x128xf32>
    %565 = arith.mulf %564, %563 : vector<8x128xf32>
    %566 = math.tanh %565 : vector<8x128xf32>
    %cst_236 = arith.constant 1.000000e+00 : f32
    %567 = vector.broadcast %cst_236 : f32 to vector<8x128xf32>
    %568 = arith.addf %566, %567 : vector<8x128xf32>
    %cst_237 = arith.constant 5.000000e-01 : f32
    %569 = vector.broadcast %cst_237 : f32 to vector<8x128xf32>
    %570 = arith.mulf %569, %568 : vector<8x128xf32>
    %571 = vector.extract_strided_slice %527 {offsets = [0, 128], sizes = [8, 128], strides = [1, 1]} : vector<8x512xf32> to vector<8x128xf32>
    %cst_238 = arith.constant 5.000000e-01 : f32
    %572 = vector.broadcast %cst_238 : f32 to vector<8x128xf32>
    %573 = arith.mulf %572, %571 : vector<8x128xf32>
    %574 = math.tanh %573 : vector<8x128xf32>
    %cst_239 = arith.constant 1.000000e+00 : f32
    %575 = vector.broadcast %cst_239 : f32 to vector<8x128xf32>
    %576 = arith.addf %574, %575 : vector<8x128xf32>
    %cst_240 = arith.constant 5.000000e-01 : f32
    %577 = vector.broadcast %cst_240 : f32 to vector<8x128xf32>
    %578 = arith.mulf %577, %576 : vector<8x128xf32>
    %579 = vector.extract_strided_slice %527 {offsets = [0, 256], sizes = [8, 128], strides = [1, 1]} : vector<8x512xf32> to vector<8x128xf32>
    %cst_241 = arith.constant 5.000000e-01 : f32
    %580 = vector.broadcast %cst_241 : f32 to vector<8x128xf32>
    %581 = arith.mulf %580, %579 : vector<8x128xf32>
    %582 = math.tanh %581 : vector<8x128xf32>
    %cst_242 = arith.constant 1.000000e+00 : f32
    %583 = vector.broadcast %cst_242 : f32 to vector<8x128xf32>
    %584 = arith.addf %582, %583 : vector<8x128xf32>
    %cst_243 = arith.constant 5.000000e-01 : f32
    %585 = vector.broadcast %cst_243 : f32 to vector<8x128xf32>
    %586 = arith.mulf %585, %584 : vector<8x128xf32>
    %587 = vector.extract_strided_slice %527 {offsets = [0, 384], sizes = [8, 128], strides = [1, 1]} : vector<8x512xf32> to vector<8x128xf32>
    %588 = math.tanh %587 : vector<8x128xf32>
    %589 = arith.mulf %578, %519 : vector<8x128xf32>
    %590 = arith.mulf %570, %588 : vector<8x128xf32>
    %591 = arith.addf %589, %590 : vector<8x128xf32>
    %592 = math.tanh %591 : vector<8x128xf32>
    %593 = arith.mulf %586, %592 : vector<8x128xf32>
    %594 = tpu.concatenate %562, %593 in 1 : vector<8x128xf32>, vector<8x128xf32> -> vector<8x256xf32>
    %c0_244 = arith.constant 0 : index
    %c0_245 = arith.constant 0 : index
    %595 = vector.load %arg3[%c0_244, %c0_245] : memref<256x512xf32, #tpu.memory_space<vmem>>, vector<256x512xf32>
    %cst_246 = arith.constant dense<0.000000e+00> : vector<8x512xf32>
    %596 = tpu.matmul %594, %595, %cst_246 {dimension_numbers = #tpu.dot_dimension_numbers<[1], [0], [0], [1], [0, 0, 1, 1], [], []>} : vector<8x256xf32>, vector<256x512xf32>, vector<8x512xf32> -> vector<8x512xf32>
    %c0_247 = arith.constant 0 : index
    %c0_248 = arith.constant 0 : index
    %597 = vector.load %arg4[%c0_247, %c0_248] : memref<1x512xf32, #tpu.memory_space<vmem>>, vector<1x512xf32>
    %598 = vector.broadcast %597 : vector<1x512xf32> to vector<8x512xf32>
    %599 = arith.addf %596, %598 : vector<8x512xf32>
    %600 = vector.extract_strided_slice %599 {offsets = [0, 0], sizes = [8, 128], strides = [1, 1]} : vector<8x512xf32> to vector<8x128xf32>
    %cst_249 = arith.constant 5.000000e-01 : f32
    %601 = vector.broadcast %cst_249 : f32 to vector<8x128xf32>
    %602 = arith.mulf %601, %600 : vector<8x128xf32>
    %603 = math.tanh %602 : vector<8x128xf32>
    %cst_250 = arith.constant 1.000000e+00 : f32
    %604 = vector.broadcast %cst_250 : f32 to vector<8x128xf32>
    %605 = arith.addf %603, %604 : vector<8x128xf32>
    %cst_251 = arith.constant 5.000000e-01 : f32
    %606 = vector.broadcast %cst_251 : f32 to vector<8x128xf32>
    %607 = arith.mulf %606, %605 : vector<8x128xf32>
    %608 = vector.extract_strided_slice %599 {offsets = [0, 128], sizes = [8, 128], strides = [1, 1]} : vector<8x512xf32> to vector<8x128xf32>
    %cst_252 = arith.constant 5.000000e-01 : f32
    %609 = vector.broadcast %cst_252 : f32 to vector<8x128xf32>
    %610 = arith.mulf %609, %608 : vector<8x128xf32>
    %611 = math.tanh %610 : vector<8x128xf32>
    %cst_253 = arith.constant 1.000000e+00 : f32
    %612 = vector.broadcast %cst_253 : f32 to vector<8x128xf32>
    %613 = arith.addf %611, %612 : vector<8x128xf32>
    %cst_254 = arith.constant 5.000000e-01 : f32
    %614 = vector.broadcast %cst_254 : f32 to vector<8x128xf32>
    %615 = arith.mulf %614, %613 : vector<8x128xf32>
    %616 = vector.extract_strided_slice %599 {offsets = [0, 256], sizes = [8, 128], strides = [1, 1]} : vector<8x512xf32> to vector<8x128xf32>
    %cst_255 = arith.constant 5.000000e-01 : f32
    %617 = vector.broadcast %cst_255 : f32 to vector<8x128xf32>
    %618 = arith.mulf %617, %616 : vector<8x128xf32>
    %619 = math.tanh %618 : vector<8x128xf32>
    %cst_256 = arith.constant 1.000000e+00 : f32
    %620 = vector.broadcast %cst_256 : f32 to vector<8x128xf32>
    %621 = arith.addf %619, %620 : vector<8x128xf32>
    %cst_257 = arith.constant 5.000000e-01 : f32
    %622 = vector.broadcast %cst_257 : f32 to vector<8x128xf32>
    %623 = arith.mulf %622, %621 : vector<8x128xf32>
    %624 = vector.extract_strided_slice %599 {offsets = [0, 384], sizes = [8, 128], strides = [1, 1]} : vector<8x512xf32> to vector<8x128xf32>
    %625 = math.tanh %624 : vector<8x128xf32>
    %626 = arith.mulf %615, %591 : vector<8x128xf32>
    %627 = arith.mulf %607, %625 : vector<8x128xf32>
    %628 = arith.addf %626, %627 : vector<8x128xf32>
    %629 = math.tanh %628 : vector<8x128xf32>
    %630 = arith.mulf %623, %629 : vector<8x128xf32>
    %c0_258 = arith.constant 0 : index
    %c0_259 = arith.constant 0 : index
    %631 = vector.load %arg5[%c0_258, %c0_259] : memref<128x128xf32, #tpu.memory_space<vmem>>, vector<128x128xf32>
    %cst_260 = arith.constant dense<0.000000e+00> : vector<8x128xf32>
    %632 = tpu.matmul %630, %631, %cst_260 {dimension_numbers = #tpu.dot_dimension_numbers<[1], [0], [0], [1], [0, 0, 1, 1], [], []>} : vector<8x128xf32>, vector<128x128xf32>, vector<8x128xf32> -> vector<8x128xf32>
    %c0_261 = arith.constant 0 : index
    %c0_262 = arith.constant 0 : index
    %633 = vector.load %arg6[%c0_261, %c0_262] : memref<1x128xf32, #tpu.memory_space<vmem>>, vector<1x128xf32>
    %634 = vector.broadcast %633 : vector<1x128xf32> to vector<8x128xf32>
    %635 = arith.addf %632, %634 : vector<8x128xf32>
    %c0_263 = arith.constant 0 : index
    %c0_264 = arith.constant 0 : index
    %636 = vector.load %arg7[%c0_263, %c0_264] : memref<8x128xf32, #tpu.memory_space<vmem>>, vector<8x128xf32>
    tpu.vector_store %arg7[%c0_263, %c0_264], %635 {strides = array<i32>} : memref<8x128xf32, #tpu.memory_space<vmem>>, vector<8x128xf32>,
    return
  }
}

</mosaic_0001>

<llo_original>
// kernel: text_lstm_forward.1
$region0: #{text_lstm_forward.1}
  #allocation0 [shape = 'u32[]', space=smem, size = 0x4, offset = 0x4, fixed_abs, tag = 'smem constant byte address 0x4 - core index']
  #allocation1 [shape = 'u32[144,128]{1,0:T(1,128)}', space=vmem, size = 0x12000, scoped, tag = 'internal scratch']
  #allocation2 [shape = 'f32[64,512]{1,0:T(8,128)}', space=vmem, size = 0x20000, scoped, tag = 'scratch operand']
  %s0 = inlined_call_operand.vmem [shape: s32[16], index: 0, kind: input, shape index: {}]
  %s1 = inlined_call_operand.hbm [shape: f32[16,512], index: 1, kind: input, shape index: {}]
  %s2 = inlined_call_operand.hbm [shape: f32[128,512], index: 2, kind: input, shape index: {}]
  %s3 = inlined_call_operand.hbm [shape: f32[256,512], index: 3, kind: input, shape index: {}]
  %s4 = inlined_call_operand.hbm [shape: f32[1,512], index: 4, kind: input, shape index: {}]
  %s5 = inlined_call_operand.hbm [shape: f32[128,128], index: 5, kind: input, shape index: {}]
  %s6 = inlined_call_operand.vmem [shape: f32[1,128], index: 6, kind: input, shape index: {}]
  %s7 = inlined_call_operand.vmem [shape: f32[8,128], index: 7, kind: output, shape index: {}]
  %s8 = sld [smem:[#allocation0]]
  $region62: #{text_lstm_forward.1} parent=0
    _
  %s10 = ssub.s32 1, %s8
  %s11 = scalar_select 0, %s10, %s8
  $region1: #{text_lstm_forward.1} parent=0
    #allocation3 [shape = 'u8[512]{0}', space=smem, size = 0x200, scoped, tag = 'input window, operand 0, single buffered']
    #allocation4 [shape = 's32[1]{0}', space=sflag, size = 0x4, scoped, tag = 'scoped memory for text_lstm_forward.1']
    #allocation5 [shape = 's32[1]{0}', space=sflag, size = 0x4, scoped, tag = 'scoped memory for text_lstm_forward.1']
    #allocation6 [shape = 'u8[32768]{0}', space=vmem, size = 0x8000, scoped, tag = 'input window, operand 1, single buffered']
    #allocation7 [shape = 'u8[262144]{0}', space=vmem, size = 0x40000, scoped, tag = 'input window, operand 2, single buffered']
    #allocation8 [shape = 's32[1]{0}', space=sflag, size = 0x4, scoped, tag = 'scoped memory for text_lstm_forward.1']
    #allocation9 [shape = 'u8[524288]{0}', space=vmem, size = 0x80000, scoped, tag = 'input window, operand 3, single buffered']
    #allocation10 [shape = 'u8[2048]{0}', space=vmem, size = 0x800, scoped, tag = 'input window, operand 4, single buffered']
    #allocation11 [shape = 's32[1]{0}', space=sflag, size = 0x4, scoped, tag = 'scoped memory for text_lstm_forward.1']
    #allocation12 [shape = 'u8[65536]{0}', space=vmem, size = 0x10000, scoped, tag = 'input window, operand 5, single buffered']
    %12 = vsyncpa [#allocation5], 0
    %13 = vsyncpa [#allocation4], 0
    %14 = vsyncpa [#allocation8], 0
    %15 = vsyncpa [#allocation11], 0
    // Predicated region
    $region2: #{text_lstm_forward.1} parent=1 // pred_check
      _
    $region3: #{text_lstm_forward.1} parent=1 // pred_check_branch
      %17 = sbr.rel (0) target = $region5
    $region4: #{text_lstm_forward.1} parent=1 // pred_region
      %s19 = ssub.s32 16, 16
      %20 = vsyncadd [#allocation5], %s19
      %s22 = sshll.u32 %s0, 4
      %s23 = int_to_ptr.vmem [resolvable:$true] %s22
      %25 = dma.vmem_to_smem %s23, 16, [#allocation3], [#allocation5]
    $region5: #{text_lstm_forward.1} parent=1 // pred_fallthru
      _
    // Predicated region
    $region6: #{text_lstm_forward.1} parent=1 // pred_check
      _
    $region7: #{text_lstm_forward.1} parent=1 // pred_check_branch
      %27 = sbr.rel (0) target = $region9
    $region8: #{text_lstm_forward.1} parent=1 // pred_region
      %s29 = ssub.s32 1024, 1024
      %30 = vsyncadd [#allocation4], %s29
      %s31 = sshll.u32 [#allocation6], 4
      %s32 = int_to_ptr.vmem [resolvable:$true] %s31
      %37 = dma.hbm_to_vmem [thread:$0]  %s1, 1024, %s32, [#allocation4], 512, 512, 32
    $region9: #{text_lstm_forward.1} parent=1 // pred_fallthru
      _
    // Predicated region
    $region10: #{text_lstm_forward.1} parent=1 // pred_check
      _
    $region11: #{text_lstm_forward.1} parent=1 // pred_check_branch
      %39 = sbr.rel (0) target = $region13
    $region12: #{text_lstm_forward.1} parent=1 // pred_region
      %s41 = ssub.s32 8192, 8192
      %42 = vsyncadd [#allocation8], %s41
      %s43 = sshll.u32 [#allocation7], 4
      %s44 = int_to_ptr.vmem [resolvable:$true] %s43
      %49 = dma.hbm_to_vmem [thread:$0]  %s2, 8192, %s44, [#allocation8], 512, 512, 32
    $region13: #{text_lstm_forward.1} parent=1 // pred_fallthru
      _
    // Predicated region
    $region14: #{text_lstm_forward.1} parent=1 // pred_check
      _
    $region15: #{text_lstm_forward.1} parent=1 // pred_check_branch
      %51 = sbr.rel (0) target = $region17
    $region16: #{text_lstm_forward.1} parent=1 // pred_region
      %s53 = ssub.s32 16384, 16384
      %54 = vsyncadd [#allocation8], %s53
      %s55 = sshll.u32 [#allocation9], 4
      %s56 = int_to_ptr.vmem [resolvable:$true] %s55
      %61 = dma.hbm_to_vmem [thread:$0]  %s3, 16384, %s56, [#allocation8], 512, 512, 32
    $region17: #{text_lstm_forward.1} parent=1 // pred_fallthru
      _
    // Predicated region
    $region18: #{text_lstm_forward.1} parent=1 // pred_check
      _
    $region19: #{text_lstm_forward.1} parent=1 // pred_check_branch
      %63 = sbr.rel (0) target = $region21
    $region20: #{text_lstm_forward.1} parent=1 // pred_region
      %s65 = ssub.s32 64, 64
      %66 = vsyncadd [#allocation11], %s65
      %s68 = sshll.u32 [#allocation10], 4
      %s69 = int_to_ptr.vmem [resolvable:$true] %s68
      %71 = dma.hbm_to_vmem [thread:$0]  %s4, 64, %s69, [#allocation11]
    $region21: #{text_lstm_forward.1} parent=1 // pred_fallthru
      _
    // Predicated region
    $region22: #{text_lstm_forward.1} parent=1 // pred_check
      _
    $region23: #{text_lstm_forward.1} parent=1 // pred_check_branch
      %73 = sbr.rel (0) target = $region25
    $region24: #{text_lstm_forward.1} parent=1 // pred_region
      %s75 = ssub.s32 2048, 2048
      %76 = vsyncadd [#allocation11], %s75
      %s77 = sshll.u32 [#allocation12], 4
      %s78 = int_to_ptr.vmem [resolvable:$true] %s77
      %83 = dma.hbm_to_vmem [thread:$0]  %s5, 2048, %s78, [#allocation11], 128, 128, 8
    $region25: #{text_lstm_forward.1} parent=1 // pred_fallthru
      _
    // Predicated region
    $region26: #{text_lstm_forward.1} parent=1 // pred_check
      _
    $region27: #{text_lstm_forward.1} parent=1 // pred_check_branch
      %85 = sbr.rel (0) target = $region29
    $region28: #{text_lstm_forward.1} parent=1 // pred_region
      _
    $region29: #{text_lstm_forward.1} parent=1 // pred_fallthru
      _
    // Predicated region
    $region30: #{text_lstm_forward.1} parent=1 // pred_check
      _
    $region31: #{text_lstm_forward.1} parent=1 // pred_check_branch
      %87 = sbr.rel (0) target = $region33
    $region32: #{text_lstm_forward.1} parent=1 // pred_region
      %88 = dma.done [#allocation5], 16
    $region33: #{text_lstm_forward.1} parent=1 // pred_fallthru
      _
    // Predicated region
    $region34: #{text_lstm_forward.1} parent=1 // pred_check
      _
    $region35: #{text_lstm_forward.1} parent=1 // pred_check_branch
      %90 = sbr.rel (0) target = $region37
    $region36: #{text_lstm_forward.1} parent=1 // pred_region
      %91 = dma.done [#allocation4], 1024
    $region37: #{text_lstm_forward.1} parent=1 // pred_fallthru
      _
    // Predicated region
    $region38: #{text_lstm_forward.1} parent=1 // pred_check
      _
    $region39: #{text_lstm_forward.1} parent=1 // pred_check_branch
      %93 = sbr.rel (0) target = $region41
    $region40: #{text_lstm_forward.1} parent=1 // pred_region
      %94 = dma.done [#allocation8], 8192
    $region41: #{text_lstm_forward.1} parent=1 // pred_fallthru
      _
    // Predicated region
    $region42: #{text_lstm_forward.1} parent=1 // pred_check
      _
    $region43: #{text_lstm_forward.1} parent=1 // pred_check_branch
      %96 = sbr.rel (0) target = $region45
    $region44: #{text_lstm_forward.1} parent=1 // pred_region
      %97 = dma.done [#allocation8], 16384
    $region45: #{text_lstm_forward.1} parent=1 // pred_fallthru
      _
    // Predicated region
    $region46: #{text_lstm_forward.1} parent=1 // pred_check
      _
    $region47: #{text_lstm_forward.1} parent=1 // pred_check_branch
      %99 = sbr.rel (0) target = $region49
    $region48: #{text_lstm_forward.1} parent=1 // pred_region
      %100 = dma.done [#allocation11], 64
    $region49: #{text_lstm_forward.1} parent=1 // pred_fallthru
      _
    // Predicated region
    $region50: #{text_lstm_forward.1} parent=1 // pred_check
      _
    $region51: #{text_lstm_forward.1} parent=1 // pred_check_branch
      %102 = sbr.rel (0) target = $region53
    $region52: #{text_lstm_forward.1} parent=1 // pred_region
      %103 = dma.done [#allocation11], 2048
    $region53: #{text_lstm_forward.1} parent=1 // pred_fallthru
      _
    %104 = sfence
    %105 = vst [vmem:[#allocation2] sm:$0xff] 0.0
    %106 = vst [vmem:[#allocation2 + $0x8] sm:$0xff] 0.0
    %107 = vst [vmem:[#allocation2 + $0x10] sm:$0xff] 0.0
    %108 = vst [vmem:[#allocation2 + $0x18] sm:$0xff] 0.0
    %109 = vst [vmem:[#allocation2 + $0x20] sm:$0xff] 0.0
    %110 = vst [vmem:[#allocation2 + $0x28] sm:$0xff] 0.0
    %111 = vst [vmem:[#allocation2 + $0x30] sm:$0xff] 0.0
    %112 = vst [vmem:[#allocation2 + $0x38] sm:$0xff] 0.0
    %113 = vst [vmem:[#allocation2 + $0x40] sm:$0xff] 0.0
    %114 = vst [vmem:[#allocation2 + $0x48] sm:$0xff] 0.0
    %115 = vst [vmem:[#allocation2 + $0x50] sm:$0xff] 0.0
    %116 = vst [vmem:[#allocation2 + $0x58] sm:$0xff] 0.0
    %117 = vst [vmem:[#allocation2 + $0x60] sm:$0xff] 0.0
    %118 = vst [vmem:[#allocation2 + $0x68] sm:$0xff] 0.0
    %119 = vst [vmem:[#allocation2 + $0x70] sm:$0xff] 0.0
    %120 = vst [vmem:[#allocation2 + $0x78] sm:$0xff] 0.0
    %121 = vst [vmem:[#allocation2 + $0x80] sm:$0xff] 0.0
    %122 = vst [vmem:[#allocation2 + $0x88] sm:$0xff] 0.0
    %123 = vst [vmem:[#allocation2 + $0x90] sm:$0xff] 0.0
    %124 = vst [vmem:[#allocation2 + $0x98] sm:$0xff] 0.0
    %125 = vst [vmem:[#allocation2 + $0xa0] sm:$0xff] 0.0
    %126 = vst [vmem:[#allocation2 + $0xa8] sm:$0xff] 0.0
    %127 = vst [vmem:[#allocation2 + $0xb0] sm:$0xff] 0.0
    %128 = vst [vmem:[#allocation2 + $0xb8] sm:$0xff] 0.0
    %129 = vst [vmem:[#allocation2 + $0xc0] sm:$0xff] 0.0
    %130 = vst [vmem:[#allocation2 + $0xc8] sm:$0xff] 0.0
    %131 = vst [vmem:[#allocation2 + $0xd0] sm:$0xff] 0.0
    %132 = vst [vmem:[#allocation2 + $0xd8] sm:$0xff] 0.0
    %133 = vst [vmem:[#allocation2 + $0xe0] sm:$0xff] 0.0
    %134 = vst [vmem:[#allocation2 + $0xe8] sm:$0xff] 0.0
    %135 = vst [vmem:[#allocation2 + $0xf0] sm:$0xff] 0.0
    %136 = vst [vmem:[#allocation2 + $0xf8] sm:$0xff] 0.0
    %s137 = sld [smem:[#allocation3]]
    %s138 = sshra.s32 %s137, 3
    %s139 = sand.u32 %s137, 7
    %s140 = sshra.s32 %s137, 3
    %s141 = sand.u32 %s137, 7
    %s142 = smul.u32 %s138, 4
    %s143 = smul.u32 %s142, 8
    %s144 = sadd.s32 %s143, %s141
    %s145 = scalar_lea.vmem [#allocation6], %s144
    %v146 = vld [vmem:[%s145] ss:$8 sm:$0xf]
    %v147 = vlaneseq
    %vm148 = vcmp.ge.s32.totalorder %v147, 0
    %vm149 = vcmp.lt.s32.totalorder %v147, 512
    %vm150 = vmand %vm148, %vm149
    %151 = vst.msk [vmem:[#allocation2] ss:$8 sm:$0xf] %vm150, %v146
    %152 = vst.msk [vmem:[#allocation2] ss:$8 sm:$0x0] %vm150, %v146
    %s153 = sld [smem:[#allocation3 + $0x8]]
    %s154 = sshra.s32 %s153, 3
    %s155 = sand.u32 %s153, 7
    %s156 = sshra.s32 %s153, 3
    %s157 = sand.u32 %s153, 7
    %s158 = smul.u32 %s154, 4
    %s159 = smul.u32 %s158, 8
    %s160 = sadd.s32 %s159, %s157
    %s161 = scalar_lea.vmem [#allocation6], %s160
    %v162 = vld [vmem:[%s161] ss:$8 sm:$0xf]
    %s163 = scalar_lea.vmem [#allocation2], 1
    %164 = vst.msk [vmem:[%s163] ss:$8 sm:$0xf] %vm150, %v162
    %165 = vst.msk [vmem:[%s163] ss:$8 sm:$0x0] %vm150, %v162
    %s166 = sld [smem:[#allocation3 + $0x1]]
    %s167 = sshra.s32 %s166, 3
    %s168 = sand.u32 %s166, 7
    %s169 = sshra.s32 %s166, 3
    %s170 = sand.u32 %s166, 7
    %s171 = smul.u32 %s167, 4
    %s172 = smul.u32 %s171, 8
    %s173 = sadd.s32 %s172, %s170
    %s174 = scalar_lea.vmem [#allocation6], %s173
    %v175 = vld [vmem:[%s174] ss:$8 sm:$0xf]
    %s176 = scalar_lea.vmem [#allocation2], 32
    %177 = vst.msk [vmem:[%s176] ss:$8 sm:$0xf] %vm150, %v175
    %178 = vst.msk [vmem:[%s176] ss:$8 sm:$0x0] %vm150, %v175
    %s179 = sld [smem:[#allocation3 + $0x9]]
    %s180 = sshra.s32 %s179, 3
    %s181 = sand.u32 %s179, 7
    %s182 = sshra.s32 %s179, 3
    %s183 = sand.u32 %s179, 7
    %s184 = smul.u32 %s180, 4
    %s185 = smul.u32 %s184, 8
    %s186 = sadd.s32 %s185, %s183
    %s187 = scalar_lea.vmem [#allocation6], %s186
    %v188 = vld [vmem:[%s187] ss:$8 sm:$0xf]
    %s189 = scalar_lea.vmem [#allocation2], 33
    %190 = vst.msk [vmem:[%s189] ss:$8 sm:$0xf] %vm150, %v188
    %191 = vst.msk [vmem:[%s189] ss:$8 sm:$0x0] %vm150, %v188
    %s192 = sld [smem:[#allocation3 + $0x2]]
    %s193 = sshra.s32 %s192, 3
    %s194 = sand.u32 %s192, 7
    %s195 = sshra.s32 %s192, 3
    %s196 = sand.u32 %s192, 7
    %s197 = smul.u32 %s193, 4
    %s198 = smul.u32 %s197, 8
    %s199 = sadd.s32 %s198, %s196
    %s200 = scalar_lea.vmem [#allocation6], %s199
    %v201 = vld [vmem:[%s200] ss:$8 sm:$0xf]
    %s202 = scalar_lea.vmem [#allocation2], 64
    %203 = vst.msk [vmem:[%s202] ss:$8 sm:$0xf] %vm150, %v201
    %204 = vst.msk [vmem:[%s202] ss:$8 sm:$0x0] %vm150, %v201
    %s205 = sld [smem:[#allocation3 + $0xa]]
    %s206 = sshra.s32 %s205, 3
    %s207 = sand.u32 %s205, 7
    %s208 = sshra.s32 %s205, 3
    %s209 = sand.u32 %s205, 7
    %s210 = smul.u32 %s206, 4
    %s211 = smul.u32 %s210, 8
    %s212 = sadd.s32 %s211, %s209
    %s213 = scalar_lea.vmem [#allocation6], %s212
    %v214 = vld [vmem:[%s213] ss:$8 sm:$0xf]
    %s215 = scalar_lea.vmem [#allocation2], 65
    %216 = vst.msk [vmem:[%s215] ss:$8 sm:$0xf] %vm150, %v214
    %217 = vst.msk [vmem:[%s215] ss:$8 sm:$0x0] %vm150, %v214
    %s218 = sld [smem:[#allocation3 + $0x3]]
    %s219 = sshra.s32 %s218, 3
    %s220 = sand.u32 %s218, 7
    %s221 = sshra.s32 %s218, 3
    %s222 = sand.u32 %s218, 7
    %s223 = smul.u32 %s219, 4
    %s224 = smul.u32 %s223, 8
    %s225 = sadd.s32 %s224, %s222
    %s226 = scalar_lea.vmem [#allocation6], %s225
    %v227 = vld [vmem:[%s226] ss:$8 sm:$0xf]
    %s228 = scalar_lea.vmem [#allocation2], 96
    %229 = vst.msk [vmem:[%s228] ss:$8 sm:$0xf] %vm150, %v227
    %230 = vst.msk [vmem:[%s228] ss:$8 sm:$0x0] %vm150, %v227
    %s231 = sld [smem:[#allocation3 + $0xb]]
    %s232 = sshra.s32 %s231, 3
    %s233 = sand.u32 %s231, 7
    %s234 = sshra.s32 %s231, 3
    %s235 = sand.u32 %s231, 7
    %s236 = smul.u32 %s232, 4
    %s237 = smul.u32 %s236, 8
    %s238 = sadd.s32 %s237, %s235
    %s239 = scalar_lea.vmem [#allocation6], %s238
    %v240 = vld [vmem:[%s239] ss:$8 sm:$0xf]
    %s241 = scalar_lea.vmem [#allocation2], 97
    %242 = vst.msk [vmem:[%s241] ss:$8 sm:$0xf] %vm150, %v240
    %243 = vst.msk [vmem:[%s241] ss:$8 sm:$0x0] %vm150, %v240
    %s244 = sld [smem:[#allocation3 + $0x4]]
    %s245 = sshra.s32 %s244, 3
    %s246 = sand.u32 %s244, 7
    %s247 = sshra.s32 %s244, 3
    %s248 = sand.u32 %s244, 7
    %s249 = smul.u32 %s245, 4
    %s250 = smul.u32 %s249, 8
    %s251 = sadd.s32 %s250, %s248
    %s252 = scalar_lea.vmem [#allocation6], %s251
    %v253 = vld [vmem:[%s252] ss:$8 sm:$0xf]
    %s254 = scalar_lea.vmem [#allocation2], 128
    %255 = vst.msk [vmem:[%s254] ss:$8 sm:$0xf] %vm150, %v253
    %256 = vst.msk [vmem:[%s254] ss:$8 sm:$0x0] %vm150, %v253
    %s257 = sld [smem:[#allocation3 + $0xc]]
    %s258 = sshra.s32 %s257, 3
    %s259 = sand.u32 %s257, 7
    %s260 = sshra.s32 %s257, 3
    %s261 = sand.u32 %s257, 7
    %s262 = smul.u32 %s258, 4
    %s263 = smul.u32 %s262, 8
    %s264 = sadd.s32 %s263, %s261
    %s265 = scalar_lea.vmem [#allocation6], %s264
    %v266 = vld [vmem:[%s265] ss:$8 sm:$0xf]
    %s267 = scalar_lea.vmem [#allocation2], 129
    %268 = vst.msk [vmem:[%s267] ss:$8 sm:$0xf] %vm150, %v266
    %269 = vst.msk [vmem:[%s267] ss:$8 sm:$0x0] %vm150, %v266
    %s270 = sld [smem:[#allocation3 + $0x5]]
    %s271 = sshra.s32 %s270, 3
    %s272 = sand.u32 %s270, 7
    %s273 = sshra.s32 %s270, 3
    %s274 = sand.u32 %s270, 7
    %s275 = smul.u32 %s271, 4
    %s276 = smul.u32 %s275, 8
    %s277 = sadd.s32 %s276, %s274
    %s278 = scalar_lea.vmem [#allocation6], %s277
    %v279 = vld [vmem:[%s278] ss:$8 sm:$0xf]
    %s280 = scalar_lea.vmem [#allocation2], 160
    %281 = vst.msk [vmem:[%s280] ss:$8 sm:$0xf] %vm150, %v279
    %282 = vst.msk [vmem:[%s280] ss:$8 sm:$0x0] %vm150, %v279
    %s283 = sld [smem:[#allocation3 + $0xd]]
    %s284 = sshra.s32 %s283, 3
    %s285 = sand.u32 %s283, 7
    %s286 = sshra.s32 %s283, 3
    %s287 = sand.u32 %s283, 7
    %s288 = smul.u32 %s284, 4
    %s289 = smul.u32 %s288, 8
    %s290 = sadd.s32 %s289, %s287
    %s291 = scalar_lea.vmem [#allocation6], %s290
    %v292 = vld [vmem:[%s291] ss:$8 sm:$0xf]
    %s293 = scalar_lea.vmem [#allocation2], 161
    %294 = vst.msk [vmem:[%s293] ss:$8 sm:$0xf] %vm150, %v292
    %295 = vst.msk [vmem:[%s293] ss:$8 sm:$0x0] %vm150, %v292
    %s296 = sld [smem:[#allocation3 + $0x6]]
    %s297 = sshra.s32 %s296, 3
    %s298 = sand.u32 %s296, 7
    %s299 = sshra.s32 %s296, 3
    %s300 = sand.u32 %s296, 7
    %s301 = smul.u32 %s297, 4
    %s302 = smul.u32 %s301, 8
    %s303 = sadd.s32 %s302, %s300
    %s304 = scalar_lea.vmem [#allocation6], %s303
    %v305 = vld [vmem:[%s304] ss:$8 sm:$0xf]
    %s306 = scalar_lea.vmem [#allocation2], 192
    %307 = vst.msk [vmem:[%s306] ss:$8 sm:$0xf] %vm150, %v305
    %308 = vst.msk [vmem:[%s306] ss:$8 sm:$0x0] %vm150, %v305
    %s309 = sld [smem:[#allocation3 + $0xe]]
    %s310 = sshra.s32 %s309, 3
    %s311 = sand.u32 %s309, 7
    %s312 = sshra.s32 %s309, 3
    %s313 = sand.u32 %s309, 7
    %s314 = smul.u32 %s310, 4
    %s315 = smul.u32 %s314, 8
    %s316 = sadd.s32 %s315, %s313
    %s317 = scalar_lea.vmem [#allocation6], %s316
    %v318 = vld [vmem:[%s317] ss:$8 sm:$0xf]
    %s319 = scalar_lea.vmem [#allocation2], 193
    %320 = vst.msk [vmem:[%s319] ss:$8 sm:$0xf] %vm150, %v318
    %321 = vst.msk [vmem:[%s319] ss:$8 sm:$0x0] %vm150, %v318
    %s322 = sld [smem:[#allocation3 + $0x7]]
    %s323 = sshra.s32 %s322, 3
    %s324 = sand.u32 %s322, 7
    %s325 = sshra.s32 %s322, 3
    %s326 = sand.u32 %s322, 7
    %s327 = smul.u32 %s323, 4
    %s328 = smul.u32 %s327, 8
    %s329 = sadd.s32 %s328, %s326
    %s330 = scalar_lea.vmem [#allocation6], %s329
    %v331 = vld [vmem:[%s330] ss:$8 sm:$0xf]
    %s332 = scalar_lea.vmem [#allocation2], 224
    %333 = vst.msk [vmem:[%s332] ss:$8 sm:$0xf] %vm150, %v331
    %334 = vst.msk [vmem:[%s332] ss:$8 sm:$0x0] %vm150, %v331
    %s335 = sld [smem:[#allocation3 + $0xf]]
    %s336 = sshra.s32 %s335, 3
    %s337 = sand.u32 %s335, 7
    %s338 = sshra.s32 %s335, 3
    %s339 = sand.u32 %s335, 7
    %s340 = smul.u32 %s336, 4
    %s341 = smul.u32 %s340, 8
    %s342 = sadd.s32 %s341, %s339
    %s343 = scalar_lea.vmem [#allocation6], %s342
    %v344 = vld [vmem:[%s343] ss:$8 sm:$0xf]
    %s345 = scalar_lea.vmem [#allocation2], 225
    %346 = vst.msk [vmem:[%s345] ss:$8 sm:$0xf] %vm150, %v344
    %347 = vst.msk [vmem:[%s345] ss:$8 sm:$0x0] %vm150, %v344
    %v348 = vld [vmem:[#allocation2] sm:$0xff]
    %v349 = vld [vmem:[#allocation2 + $0x10] sm:$0xff]
    %v350 = vld [vmem:[#allocation2 + $0x18] sm:$0xff]
    %v351 = vmul.f32 %v348, 0.5
    %v352 = vtanh.pop %v351
    %v353 = vadd.f32 %v352, 1.0
    %v354 = vmul.f32 %v353, 0.5
    %v355 = vmul.f32 %v349, 0.5
    %v356 = vtanh.pop %v355
    %v357 = vadd.f32 %v356, 1.0
    %v358 = vmul.f32 %v357, 0.5
    %v359 = vtanh.pop %v350
    %v360 = vmul.f32 %v354, %v359
    %v361 = vtanh.pop %v360
    %v362 = vmul.f32 %v358, %v361
    %v363 = vld [vmem:[#allocation9] sm:$0xff]
    %v364 = vld [vmem:[#allocation9 + $0x8] sm:$0xff]
    %v365 = vld [vmem:[#allocation9 + $0x10] sm:$0xff]
    %v366 = vld [vmem:[#allocation9 + $0x18] sm:$0xff]
    %v367 = vld [vmem:[#allocation9 + $0x20] sm:$0xff]
    %v368 = vld [vmem:[#allocation9 + $0x28] sm:$0xff]
    %v369 = vld [vmem:[#allocation9 + $0x30] sm:$0xff]
    %v370 = vld [vmem:[#allocation9 + $0x38] sm:$0xff]
    %v371 = vld [vmem:[#allocation9 + $0x40] sm:$0xff]
    %v372 = vld [vmem:[#allocation9 + $0x48] sm:$0xff]
    %v373 = vld [vmem:[#allocation9 + $0x50] sm:$0xff]
    %v374 = vld [vmem:[#allocation9 + $0x58] sm:$0xff]
    %v375 = vld [vmem:[#allocation9 + $0x60] sm:$0xff]
    %v376 = vld [vmem:[#allocation9 + $0x68] sm:$0xff]
    %v377 = vld [vmem:[#allocation9 + $0x70] sm:$0xff]
    %v378 = vld [vmem:[#allocation9 + $0x78] sm:$0xff]
    %v379 = vld [vmem:[#allocation9 + $0x80] sm:$0xff]
    %v380 = vld [vmem:[#allocation9 + $0x88] sm:$0xff]
    %v381 = vld [vmem:[#allocation9 + $0x90] sm:$0xff]
    %v382 = vld [vmem:[#allocation9 + $0x98] sm:$0xff]
    %v383 = vld [vmem:[#allocation9 + $0xa0] sm:$0xff]
    %v384 = vld [vmem:[#allocation9 + $0xa8] sm:$0xff]
    %v385 = vld [vmem:[#allocation9 + $0xb0] sm:$0xff]
    %v386 = vld [vmem:[#allocation9 + $0xb8] sm:$0xff]
    %v387 = vld [vmem:[#allocation9 + $0xc0] sm:$0xff]
    %v388 = vld [vmem:[#allocation9 + $0xc8] sm:$0xff]
    %v389 = vld [vmem:[#allocation9 + $0xd0] sm:$0xff]
    %v390 = vld [vmem:[#allocation9 + $0xd8] sm:$0xff]
    %v391 = vld [vmem:[#allocation9 + $0xe0] sm:$0xff]
    %v392 = vld [vmem:[#allocation9 + $0xe8] sm:$0xff]
    %v393 = vld [vmem:[#allocation9 + $0xf0] sm:$0xff]
    %v394 = vld [vmem:[#allocation9 + $0xf8] sm:$0xff]
    %v395 = vld [vmem:[#allocation9 + $0x100] sm:$0xff]
    %v396 = vld [vmem:[#allocation9 + $0x108] sm:$0xff]
    %v397 = vld [vmem:[#allocation9 + $0x110] sm:$0xff]
    %v398 = vld [vmem:[#allocation9 + $0x118] sm:$0xff]
    %v399 = vld [vmem:[#allocation9 + $0x120] sm:$0xff]
    %v400 = vld [vmem:[#allocation9 + $0x128] sm:$0xff]
    %v401 = vld [vmem:[#allocation9 + $0x130] sm:$0xff]
    %v402 = vld [vmem:[#allocation9 + $0x138] sm:$0xff]
    %v403 = vld [vmem:[#allocation9 + $0x140] sm:$0xff]
    %v404 = vld [vmem:[#allocation9 + $0x148] sm:$0xff]
    %v405 = vld [vmem:[#allocation9 + $0x150] sm:$0xff]
    %v406 = vld [vmem:[#allocation9 + $0x158] sm:$0xff]
    %v407 = vld [vmem:[#allocation9 + $0x160] sm:$0xff]
    %v408 = vld [vmem:[#allocation9 + $0x168] sm:$0xff]
    %v409 = vld [vmem:[#allocation9 + $0x170] sm:$0xff]
    %v410 = vld [vmem:[#allocation9 + $0x178] sm:$0xff]
    %v411 = vld [vmem:[#allocation9 + $0x180] sm:$0xff]
    %v412 = vld [vmem:[#allocation9 + $0x188] sm:$0xff]
    %v413 = vld [vmem:[#allocation9 + $0x190] sm:$0xff]
    %v414 = vld [vmem:[#allocation9 + $0x198] sm:$0xff]
    %v415 = vld [vmem:[#allocation9 + $0x1a0] sm:$0xff]
    %v416 = vld [vmem:[#allocation9 + $0x1a8] sm:$0xff]
    %v417 = vld [vmem:[#allocation9 + $0x1b0] sm:$0xff]
    %v418 = vld [vmem:[#allocation9 + $0x1b8] sm:$0xff]
    %v419 = vld [vmem:[#allocation9 + $0x1c0] sm:$0xff]
    %v420 = vld [vmem:[#allocation9 + $0x1c8] sm:$0xff]
    %v421 = vld [vmem:[#allocation9 + $0x1d0] sm:$0xff]
    %v422 = vld [vmem:[#allocation9 + $0x1d8] sm:$0xff]
    %v423 = vld [vmem:[#allocation9 + $0x1e0] sm:$0xff]
    %v424 = vld [vmem:[#allocation9 + $0x1e8] sm:$0xff]
    %v425 = vld [vmem:[#allocation9 + $0x1f0] sm:$0xff]
    %v426 = vld [vmem:[#allocation9 + $0x1f8] sm:$0xff]
    %v427 = vld [vmem:[#allocation9 + $0x200] sm:$0xff]
    %v428 = vld [vmem:[#allocation9 + $0x208] sm:$0xff]
    %v429 = vld [vmem:[#allocation9 + $0x210] sm:$0xff]
    %v430 = vld [vmem:[#allocation9 + $0x218] sm:$0xff]
    %v431 = vld [vmem:[#allocation9 + $0x220] sm:$0xff]
    %v432 = vld [vmem:[#allocation9 + $0x228] sm:$0xff]
    %v433 = vld [vmem:[#allocation9 + $0x230] sm:$0xff]
    %v434 = vld [vmem:[#allocation9 + $0x238] sm:$0xff]
    %v435 = vld [vmem:[#allocation9 + $0x240] sm:$0xff]
    %v436 = vld [vmem:[#allocation9 + $0x248] sm:$0xff]
    %v437 = vld [vmem:[#allocation9 + $0x250] sm:$0xff]
    %v438 = vld [vmem:[#allocation9 + $0x258] sm:$0xff]
    %v439 = vld [vmem:[#allocation9 + $0x260] sm:$0xff]
    %v440 = vld [vmem:[#allocation9 + $0x268] sm:$0xff]
    %v441 = vld [vmem:[#allocation9 + $0x270] sm:$0xff]
    %v442 = vld [vmem:[#allocation9 + $0x278] sm:$0xff]
    %v443 = vld [vmem:[#allocation9 + $0x280] sm:$0xff]
    %v444 = vld [vmem:[#allocation9 + $0x288] sm:$0xff]
    %v445 = vld [vmem:[#allocation9 + $0x290] sm:$0xff]
    %v446 = vld [vmem:[#allocation9 + $0x298] sm:$0xff]
    %v447 = vld [vmem:[#allocation9 + $0x2a0] sm:$0xff]
    %v448 = vld [vmem:[#allocation9 + $0x2a8] sm:$0xff]
    %v449 = vld [vmem:[#allocation9 + $0x2b0] sm:$0xff]
    %v450 = vld [vmem:[#allocation9 + $0x2b8] sm:$0xff]
    %v451 = vld [vmem:[#allocation9 + $0x2c0] sm:$0xff]
    %v452 = vld [vmem:[#allocation9 + $0x2c8] sm:$0xff]
    %v453 = vld [vmem:[#allocation9 + $0x2d0] sm:$0xff]
    %v454 = vld [vmem:[#allocation9 + $0x2d8] sm:$0xff]
    %v455 = vld [vmem:[#allocation9 + $0x2e0] sm:$0xff]
    %v456 = vld [vmem:[#allocation9 + $0x2e8] sm:$0xff]
    %v457 = vld [vmem:[#allocation9 + $0x2f0] sm:$0xff]
    %v458 = vld [vmem:[#allocation9 + $0x2f8] sm:$0xff]
    %v459 = vld [vmem:[#allocation9 + $0x300] sm:$0xff]
    %v460 = vld [vmem:[#allocation9 + $0x308] sm:$0xff]
    %v461 = vld [vmem:[#allocation9 + $0x310] sm:$0xff]
    %v462 = vld [vmem:[#allocation9 + $0x318] sm:$0xff]
    %v463 = vld [vmem:[#allocation9 + $0x320] sm:$0xff]
    %v464 = vld [vmem:[#allocation9 + $0x328] sm:$0xff]
    %v465 = vld [vmem:[#allocation9 + $0x330] sm:$0xff]
    %v466 = vld [vmem:[#allocation9 + $0x338] sm:$0xff]
    %v467 = vld [vmem:[#allocation9 + $0x340] sm:$0xff]
    %v468 = vld [vmem:[#allocation9 + $0x348] sm:$0xff]
    %v469 = vld [vmem:[#allocation9 + $0x350] sm:$0xff]
    %v470 = vld [vmem:[#allocation9 + $0x358] sm:$0xff]
    %v471 = vld [vmem:[#allocation9 + $0x360] sm:$0xff]
    %v472 = vld [vmem:[#allocation9 + $0x368] sm:$0xff]
    %v473 = vld [vmem:[#allocation9 + $0x370] sm:$0xff]
    %v474 = vld [vmem:[#allocation9 + $0x378] sm:$0xff]
    %v475 = vld [vmem:[#allocation9 + $0x380] sm:$0xff]
    %v476 = vld [vmem:[#allocation9 + $0x388] sm:$0xff]
    %v477 = vld [vmem:[#allocation9 + $0x390] sm:$0xff]
    %v478 = vld [vmem:[#allocation9 + $0x398] sm:$0xff]
    %v479 = vld [vmem:[#allocation9 + $0x3a0] sm:$0xff]
    %v480 = vld [vmem:[#allocation9 + $0x3a8] sm:$0xff]
    %v481 = vld [vmem:[#allocation9 + $0x3b0] sm:$0xff]
    %v482 = vld [vmem:[#allocation9 + $0x3b8] sm:$0xff]
    %v483 = vld [vmem:[#allocation9 + $0x3c0] sm:$0xff]
    %v484 = vld [vmem:[#allocation9 + $0x3c8] sm:$0xff]
    %v485 = vld [vmem:[#allocation9 + $0x3d0] sm:$0xff]
    %v486 = vld [vmem:[#allocation9 + $0x3d8] sm:$0xff]
    %v487 = vld [vmem:[#allocation9 + $0x3e0] sm:$0xff]
    %v488 = vld [vmem:[#allocation9 + $0x3e8] sm:$0xff]
    %v489 = vld [vmem:[#allocation9 + $0x3f0] sm:$0xff]
    %v490 = vld [vmem:[#allocation9 + $0x3f8] sm:$0xff]
    %v491 = vld [vmem:[#allocation10] sm:$0xf]
    %v493 = vlaneseq
    %v494 = vshrl.u32 %v493, 7
    %v495 = vsub.s32 0, %v494
    %v496 = vrot.slane %v491, %v495
    %v497 = vlaneseq
    %v498 = vshrl.u32 %v497, 7
    %v499 = vsub.s32 1, %v498
    %v500 = vrot.slane %v491, %v499
    %v501 = vlaneseq
    %v502 = vshrl.u32 %v501, 7
    %v503 = vsub.s32 2, %v502
    %v504 = vrot.slane %v491, %v503
    %v505 = vlaneseq
    %v506 = vshrl.u32 %v505, 7
    %v507 = vsub.s32 3, %v506
    %v508 = vrot.slane %v491, %v507
    %513 = vmatprep.subr.mxu0 %v364
    %514 = vmatpush1.msra.mxu0 %v363
    %515 = vmatprep.subr.mxu0 %v368
    %516 = vmatpush1.msra.mxu0 %v367
    %517 = vmatprep.subr.mxu0 %v372
    %518 = vmatpush1.msra.mxu0 %v371
    %519 = vmatprep.subr.mxu0 %v376
    %520 = vmatpush1.msra.mxu0 %v375
    %521 = vmatprep.subr.mxu0 %v380
    %522 = vmatpush1.msra.mxu0 %v379
    %523 = vmatprep.subr.mxu0 %v384
    %524 = vmatpush1.msra.mxu0 %v383
    %525 = vmatprep.subr.mxu0 %v388
    %526 = vmatpush1.msra.mxu0 %v387
    %527 = vmatprep.subr.mxu0 %v392
    %528 = vmatpush1.msra.mxu0 %v391
    %529 = vmatprep.subr.mxu0 %v396
    %530 = vmatpush1.msra.mxu0 %v395
    %531 = vmatprep.subr.mxu0 %v400
    %532 = vmatpush1.msra.mxu0 %v399
    %533 = vmatprep.subr.mxu0 %v404
    %534 = vmatpush1.msra.mxu0 %v403
    %535 = vmatprep.subr.mxu0 %v408
    %536 = vmatpush1.msra.mxu0 %v407
    %537 = vmatprep.subr.mxu0 %v412
    %538 = vmatpush1.msra.mxu0 %v411
    %539 = vmatprep.subr.mxu0 %v416
    %540 = vmatpush1.msra.mxu0 %v415
    %541 = vmatprep.subr.mxu0 %v420
    %542 = vmatpush1.msra.mxu0 %v419
    %543 = vmatprep.subr.mxu0 %v424
    %544 = vmatpush1.msra.mxu0 %v423
    %545 = vmatprep.subr.mxu0 %v428
    %546 = vmatpush1.msra.mxu0 %v427
    %547 = vmatprep.subr.mxu0 %v432
    %548 = vmatpush1.msra.mxu0 %v431
    %549 = vmatprep.subr.mxu0 %v436
    %550 = vmatpush1.msra.mxu0 %v435
    %551 = vmatprep.subr.mxu0 %v440
    %552 = vmatpush1.msra.mxu0 %v439
    %553 = vmatprep.subr.mxu0 %v444
    %554 = vmatpush1.msra.mxu0 %v443
    %555 = vmatprep.subr.mxu0 %v448
    %556 = vmatpush1.msra.mxu0 %v447
    %557 = vmatprep.subr.mxu0 %v452
    %558 = vmatpush1.msra.mxu0 %v451
    %559 = vmatprep.subr.mxu0 %v456
    %560 = vmatpush1.msra.mxu0 %v455
    %561 = vmatprep.subr.mxu0 %v460
    %562 = vmatpush1.msra.mxu0 %v459
    %563 = vmatprep.subr.mxu0 %v464
    %564 = vmatpush1.msra.mxu0 %v463
    %565 = vmatprep.subr.mxu0 %v468
    %566 = vmatpush1.msra.mxu0 %v467
    %567 = vmatprep.subr.mxu0 %v472
    %568 = vmatpush1.msra.mxu0 %v471
    %569 = vmatprep.subr.mxu0 %v476
    %570 = vmatpush1.msra.mxu0 %v475
    %571 = vmatprep.subr.mxu0 %v480
    %572 = vmatpush1.msra.mxu0 %v479
    %573 = vmatprep.subr.mxu0 %v484
    %574 = vmatpush1.msra.mxu0 %v483
    %575 = vmatprep.subr.mxu0 %v488
    %576 = vmatpush1.msra.mxu0 %v487
    %577 = vmatprep.mubr.f32.mxu0 0.0
    %578 = vmatmul.mubr.f32.gmra.mrb[0].mxu0 %v362
    %v579 = vpop.f32.mrb[0].mxu0
    %v580 = vadd.f32 %v496, %v579
    %v581 = vpop.f32.mrb[0].mxu0
    %v582 = vadd.f32 %v500, %v581
    %583 = vdwg.mxu0
    %584 = vmatprep.subr.mxu0 %v366
    %585 = vmatpush1.msra.mxu0 %v365
    %586 = vmatprep.subr.mxu0 %v370
    %587 = vmatpush1.msra.mxu0 %v369
    %588 = vmatprep.subr.mxu0 %v374
    %589 = vmatpush1.msra.mxu0 %v373
    %590 = vmatprep.subr.mxu0 %v378
    %591 = vmatpush1.msra.mxu0 %v377
    %592 = vmatprep.subr.mxu0 %v382
    %593 = vmatpush1.msra.mxu0 %v381
    %594 = vmatprep.subr.mxu0 %v386
    %595 = vmatpush1.msra.mxu0 %v385
    %596 = vmatprep.subr.mxu0 %v390
    %597 = vmatpush1.msra.mxu0 %v389
    %598 = vmatprep.subr.mxu0 %v394
    %599 = vmatpush1.msra.mxu0 %v393
    %600 = vmatprep.subr.mxu0 %v398
    %601 = vmatpush1.msra.mxu0 %v397
    %602 = vmatprep.subr.mxu0 %v402
    %603 = vmatpush1.msra.mxu0 %v401
    %604 = vmatprep.subr.mxu0 %v406
    %605 = vmatpush1.msra.mxu0 %v405
    %606 = vmatprep.subr.mxu0 %v410
    %607 = vmatpush1.msra.mxu0 %v409
    %608 = vmatprep.subr.mxu0 %v414
    %609 = vmatpush1.msra.mxu0 %v413
    %610 = vmatprep.subr.mxu0 %v418
    %611 = vmatpush1.msra.mxu0 %v417
    %612 = vmatprep.subr.mxu0 %v422
    %613 = vmatpush1.msra.mxu0 %v421
    %614 = vmatprep.subr.mxu0 %v426
    %615 = vmatpush1.msra.mxu0 %v425
    %616 = vmatprep.subr.mxu0 %v430
    %617 = vmatpush1.msra.mxu0 %v429
    %618 = vmatprep.subr.mxu0 %v434
    %619 = vmatpush1.msra.mxu0 %v433
    %620 = vmatprep.subr.mxu0 %v438
    %621 = vmatpush1.msra.mxu0 %v437
    %622 = vmatprep.subr.mxu0 %v442
    %623 = vmatpush1.msra.mxu0 %v441
    %624 = vmatprep.subr.mxu0 %v446
    %625 = vmatpush1.msra.mxu0 %v445
    %626 = vmatprep.subr.mxu0 %v450
    %627 = vmatpush1.msra.mxu0 %v449
    %628 = vmatprep.subr.mxu0 %v454
    %629 = vmatpush1.msra.mxu0 %v453
    %630 = vmatprep.subr.mxu0 %v458
    %631 = vmatpush1.msra.mxu0 %v457
    %632 = vmatprep.subr.mxu0 %v462
    %633 = vmatpush1.msra.mxu0 %v461
    %634 = vmatprep.subr.mxu0 %v466
    %635 = vmatpush1.msra.mxu0 %v465
    %636 = vmatprep.subr.mxu0 %v470
    %637 = vmatpush1.msra.mxu0 %v469
    %638 = vmatprep.subr.mxu0 %v474
    %639 = vmatpush1.msra.mxu0 %v473
    %640 = vmatprep.subr.mxu0 %v478
    %641 = vmatpush1.msra.mxu0 %v477
    %642 = vmatprep.subr.mxu0 %v482
    %643 = vmatpush1.msra.mxu0 %v481
    %644 = vmatprep.subr.mxu0 %v486
    %645 = vmatpush1.msra.mxu0 %v485
    %646 = vmatprep.subr.mxu0 %v490
    %647 = vmatpush1.msra.mxu0 %v489
    %648 = vmatprep.mubr.f32.mxu0 0.0
    %649 = vmatmul.mubr.f32.gmra.mrb[0].mxu0 %v362
    %v650 = vpop.f32.mrb[0].mxu0
    %v651 = vadd.f32 %v504, %v650
    %v652 = vpop.f32.mrb[0].mxu0
    %v653 = vadd.f32 %v508, %v652
    %654 = vdwg.mxu0
    %v655 = vld [vmem:[#allocation2 + $0x20] sm:$0xff]
    %v656 = vld [vmem:[#allocation2 + $0x28] sm:$0xff]
    %v657 = vld [vmem:[#allocation2 + $0x30] sm:$0xff]
    %v658 = vld [vmem:[#allocation2 + $0x38] sm:$0xff]
    %v659 = vld [vmem:[#allocation7] sm:$0xff]
    %v660 = vld [vmem:[#allocation7 + $0x8] sm:$0xff]
    %v661 = vld [vmem:[#allocation7 + $0x10] sm:$0xff]
    %v662 = vld [vmem:[#allocation7 + $0x18] sm:$0xff]
    %v663 = vld [vmem:[#allocation7 + $0x20] sm:$0xff]
    %v664 = vld [vmem:[#allocation7 + $0x28] sm:$0xff]
    %v665 = vld [vmem:[#allocation7 + $0x30] sm:$0xff]
    %v666 = vld [vmem:[#allocation7 + $0x38] sm:$0xff]
    %v667 = vld [vmem:[#allocation7 + $0x40] sm:$0xff]
    %v668 = vld [vmem:[#allocation7 + $0x48] sm:$0xff]
    %v669 = vld [vmem:[#allocation7 + $0x50] sm:$0xff]
    %v670 = vld [vmem:[#allocation7 + $0x58] sm:$0xff]
    %v671 = vld [vmem:[#allocation7 + $0x60] sm:$0xff]
    %v672 = vld [vmem:[#allocation7 + $0x68] sm:$0xff]
    %v673 = vld [vmem:[#allocation7 + $0x70] sm:$0xff]
    %v674 = vld [vmem:[#allocation7 + $0x78] sm:$0xff]
    %v675 = vld [vmem:[#allocation7 + $0x80] sm:$0xff]
    %v676 = vld [vmem:[#allocation7 + $0x88] sm:$0xff]
    %v677 = vld [vmem:[#allocation7 + $0x90] sm:$0xff]
    %v678 = vld [vmem:[#allocation7 + $0x98] sm:$0xff]
    %v679 = vld [vmem:[#allocation7 + $0xa0] sm:$0xff]
    %v680 = vld [vmem:[#allocation7 + $0xa8] sm:$0xff]
    %v681 = vld [vmem:[#allocation7 + $0xb0] sm:$0xff]
    %v682 = vld [vmem:[#allocation7 + $0xb8] sm:$0xff]
    %v683 = vld [vmem:[#allocation7 + $0xc0] sm:$0xff]
    %v684 = vld [vmem:[#allocation7 + $0xc8] sm:$0xff]
    %v685 = vld [vmem:[#allocation7 + $0xd0] sm:$0xff]
    %v686 = vld [vmem:[#allocation7 + $0xd8] sm:$0xff]
    %v687 = vld [vmem:[#allocation7 + $0xe0] sm:$0xff]
    %v688 = vld [vmem:[#allocation7 + $0xe8] sm:$0xff]
    %v689 = vld [vmem:[#allocation7 + $0xf0] sm:$0xff]
    %v690 = vld [vmem:[#allocation7 + $0xf8] sm:$0xff]
    %v691 = vld [vmem:[#allocation7 + $0x100] sm:$0xff]
    %v692 = vld [vmem:[#allocation7 + $0x108] sm:$0xff]
    %v693 = vld [vmem:[#allocation7 + $0x110] sm:$0xff]
    %v694 = vld [vmem:[#allocation7 + $0x118] sm:$0xff]
    %v695 = vld [vmem:[#allocation7 + $0x120] sm:$0xff]
    %v696 = vld [vmem:[#allocation7 + $0x128] sm:$0xff]
    %v697 = vld [vmem:[#allocation7 + $0x130] sm:$0xff]
    %v698 = vld [vmem:[#allocation7 + $0x138] sm:$0xff]
    %v699 = vld [vmem:[#allocation7 + $0x140] sm:$0xff]
    %v700 = vld [vmem:[#allocation7 + $0x148] sm:$0xff]
    %v701 = vld [vmem:[#allocation7 + $0x150] sm:$0xff]
    %v702 = vld [vmem:[#allocation7 + $0x158] sm:$0xff]
    %v703 = vld [vmem:[#allocation7 + $0x160] sm:$0xff]
    %v704 = vld [vmem:[#allocation7 + $0x168] sm:$0xff]
    %v705 = vld [vmem:[#allocation7 + $0x170] sm:$0xff]
    %v706 = vld [vmem:[#allocation7 + $0x178] sm:$0xff]
    %v707 = vld [vmem:[#allocation7 + $0x180] sm:$0xff]
    %v708 = vld [vmem:[#allocation7 + $0x188] sm:$0xff]
    %v709 = vld [vmem:[#allocation7 + $0x190] sm:$0xff]
    %v710 = vld [vmem:[#allocation7 + $0x198] sm:$0xff]
    %v711 = vld [vmem:[#allocation7 + $0x1a0] sm:$0xff]
    %v712 = vld [vmem:[#allocation7 + $0x1a8] sm:$0xff]
    %v713 = vld [vmem:[#allocation7 + $0x1b0] sm:$0xff]
    %v714 = vld [vmem:[#allocation7 + $0x1b8] sm:$0xff]
    %v715 = vld [vmem:[#allocation7 + $0x1c0] sm:$0xff]
    %v716 = vld [vmem:[#allocation7 + $0x1c8] sm:$0xff]
    %v717 = vld [vmem:[#allocation7 + $0x1d0] sm:$0xff]
    %v718 = vld [vmem:[#allocation7 + $0x1d8] sm:$0xff]
    %v719 = vld [vmem:[#allocation7 + $0x1e0] sm:$0xff]
    %v720 = vld [vmem:[#allocation7 + $0x1e8] sm:$0xff]
    %v721 = vld [vmem:[#allocation7 + $0x1f0] sm:$0xff]
    %v722 = vld [vmem:[#allocation7 + $0x1f8] sm:$0xff]
    %723 = vmatprep.subr.mxu0 %v660
    %724 = vmatpush1.msra.mxu0 %v659
    %725 = vmatprep.subr.mxu0 %v664
    %726 = vmatpush1.msra.mxu0 %v663
    %727 = vmatprep.subr.mxu0 %v668
    %728 = vmatpush1.msra.mxu0 %v667
    %729 = vmatprep.subr.mxu0 %v672
    %730 = vmatpush1.msra.mxu0 %v671
    %731 = vmatprep.subr.mxu0 %v676
    %732 = vmatpush1.msra.mxu0 %v675
    %733 = vmatprep.subr.mxu0 %v680
    %734 = vmatpush1.msra.mxu0 %v679
    %735 = vmatprep.subr.mxu0 %v684
    %736 = vmatpush1.msra.mxu0 %v683
    %737 = vmatprep.subr.mxu0 %v688
    %738 = vmatpush1.msra.mxu0 %v687
    %739 = vmatprep.subr.mxu0 %v692
    %740 = vmatpush1.msra.mxu0 %v691
    %741 = vmatprep.subr.mxu0 %v696
    %742 = vmatpush1.msra.mxu0 %v695
    %743 = vmatprep.subr.mxu0 %v700
    %744 = vmatpush1.msra.mxu0 %v699
    %745 = vmatprep.subr.mxu0 %v704
    %746 = vmatpush1.msra.mxu0 %v703
    %747 = vmatprep.subr.mxu0 %v708
    %748 = vmatpush1.msra.mxu0 %v707
    %749 = vmatprep.subr.mxu0 %v712
    %750 = vmatpush1.msra.mxu0 %v711
    %751 = vmatprep.subr.mxu0 %v716
    %752 = vmatpush1.msra.mxu0 %v715
    %753 = vmatprep.subr.mxu0 %v720
    %754 = vmatpush1.msra.mxu0 %v719
    %755 = vmatprep.subr.mxu0 0.0
    %756 = vmatpush1.msra.mxu0 0.0
    %757 = vmatprep.subr.mxu0 0.0
    %758 = vmatpush1.msra.mxu0 0.0
    %759 = vmatprep.subr.mxu0 0.0
    %760 = vmatpush1.msra.mxu0 0.0
    %761 = vmatprep.subr.mxu0 0.0
    %762 = vmatpush1.msra.mxu0 0.0
    %763 = vmatprep.subr.mxu0 0.0
    %764 = vmatpush1.msra.mxu0 0.0
    %765 = vmatprep.subr.mxu0 0.0
    %766 = vmatpush1.msra.mxu0 0.0
    %767 = vmatprep.subr.mxu0 0.0
    %768 = vmatpush1.msra.mxu0 0.0
    %769 = vmatprep.subr.mxu0 0.0
    %770 = vmatpush1.msra.mxu0 0.0
    %771 = vmatprep.subr.mxu0 0.0
    %772 = vmatpush1.msra.mxu0 0.0
    %773 = vmatprep.subr.mxu0 0.0
    %774 = vmatpush1.msra.mxu0 0.0
    %775 = vmatprep.subr.mxu0 0.0
    %776 = vmatpush1.msra.mxu0 0.0
    %777 = vmatprep.subr.mxu0 0.0
    %778 = vmatpush1.msra.mxu0 0.0
    %779 = vmatprep.subr.mxu0 0.0
    %780 = vmatpush1.msra.mxu0 0.0
    %781 = vmatprep.subr.mxu0 0.0
    %782 = vmatpush1.msra.mxu0 0.0
    %783 = vmatprep.subr.mxu0 0.0
    %784 = vmatpush1.msra.mxu0 0.0
    %785 = vmatprep.subr.mxu0 0.0
    %786 = vmatpush1.msra.mxu0 0.0
    %787 = vmatprep.mubr.f32.mxu0 0.0
    %788 = vmatmul.mubr.f32.gmra.mrb[0].mxu0 %v362
    %v789 = vpop.f32.mrb[0].mxu0
    %v790 = vadd.f32 0.0, %v789
    %v791 = vpop.f32.mrb[0].mxu0
    %v792 = vadd.f32 0.0, %v791
    %793 = vdwg.mxu0
    %794 = vmatprep.subr.mxu0 %v662
    %795 = vmatpush1.msra.mxu0 %v661
    %796 = vmatprep.subr.mxu0 %v666
    %797 = vmatpush1.msra.mxu0 %v665
    %798 = vmatprep.subr.mxu0 %v670
    %799 = vmatpush1.msra.mxu0 %v669
    %800 = vmatprep.subr.mxu0 %v674
    %801 = vmatpush1.msra.mxu0 %v673
    %802 = vmatprep.subr.mxu0 %v678
    %803 = vmatpush1.msra.mxu0 %v677
    %804 = vmatprep.subr.mxu0 %v682
    %805 = vmatpush1.msra.mxu0 %v681
    %806 = vmatprep.subr.mxu0 %v686
    %807 = vmatpush1.msra.mxu0 %v685
    %808 = vmatprep.subr.mxu0 %v690
    %809 = vmatpush1.msra.mxu0 %v689
    %810 = vmatprep.subr.mxu0 %v694
    %811 = vmatpush1.msra.mxu0 %v693
    %812 = vmatprep.subr.mxu0 %v698
    %813 = vmatpush1.msra.mxu0 %v697
    %814 = vmatprep.subr.mxu0 %v702
    %815 = vmatpush1.msra.mxu0 %v701
    %816 = vmatprep.subr.mxu0 %v706
    %817 = vmatpush1.msra.mxu0 %v705
    %818 = vmatprep.subr.mxu0 %v710
    %819 = vmatpush1.msra.mxu0 %v709
    %820 = vmatprep.subr.mxu0 %v714
    %821 = vmatpush1.msra.mxu0 %v713
    %822 = vmatprep.subr.mxu0 %v718
    %823 = vmatpush1.msra.mxu0 %v717
    %824 = vmatprep.subr.mxu0 %v722
    %825 = vmatpush1.msra.mxu0 %v721
    %826 = vmatprep.subr.mxu0 0.0
    %827 = vmatpush1.msra.mxu0 0.0
    %828 = vmatprep.subr.mxu0 0.0
    %829 = vmatpush1.msra.mxu0 0.0
    %830 = vmatprep.subr.mxu0 0.0
    %831 = vmatpush1.msra.mxu0 0.0
    %832 = vmatprep.subr.mxu0 0.0
    %833 = vmatpush1.msra.mxu0 0.0
    %834 = vmatprep.subr.mxu0 0.0
    %835 = vmatpush1.msra.mxu0 0.0
    %836 = vmatprep.subr.mxu0 0.0
    %837 = vmatpush1.msra.mxu0 0.0
    %838 = vmatprep.subr.mxu0 0.0
    %839 = vmatpush1.msra.mxu0 0.0
    %840 = vmatprep.subr.mxu0 0.0
    %841 = vmatpush1.msra.mxu0 0.0
    %842 = vmatprep.subr.mxu0 0.0
    %843 = vmatpush1.msra.mxu0 0.0
    %844 = vmatprep.subr.mxu0 0.0
    %845 = vmatpush1.msra.mxu0 0.0
    %846 = vmatprep.subr.mxu0 0.0
    %847 = vmatpush1.msra.mxu0 0.0
    %848 = vmatprep.subr.mxu0 0.0
    %849 = vmatpush1.msra.mxu0 0.0
    %850 = vmatprep.subr.mxu0 0.0
    %851 = vmatpush1.msra.mxu0 0.0
    %852 = vmatprep.subr.mxu0 0.0
    %853 = vmatpush1.msra.mxu0 0.0
    %854 = vmatprep.subr.mxu0 0.0
    %855 = vmatpush1.msra.mxu0 0.0
    %856 = vmatprep.subr.mxu0 0.0
    %857 = vmatpush1.msra.mxu0 0.0
    %858 = vmatprep.mubr.f32.mxu0 0.0
    %859 = vmatmul.mubr.f32.gmra.mrb[0].mxu0 %v362
    %v860 = vpop.f32.mrb[0].mxu0
    %v861 = vadd.f32 0.0, %v860
    %v862 = vpop.f32.mrb[0].mxu0
    %v863 = vadd.f32 0.0, %v862
    %864 = vdwg.mxu0
    %v865 = vadd.f32 %v655, %v790
    %v866 = vadd.f32 %v656, %v792
    %v867 = vadd.f32 %v657, %v861
    %v868 = vadd.f32 %v658, %v863
    %v869 = vmul.f32 %v865, 0.5
    %v870 = vtanh.pop %v869
    %v871 = vadd.f32 %v870, 1.0
    %v872 = vmul.f32 %v871, 0.5
    %v873 = vmul.f32 %v866, 0.5
    %v874 = vtanh.pop %v873
    %v875 = vadd.f32 %v874, 1.0
    %v876 = vmul.f32 %v875, 0.5
    %v877 = vmul.f32 %v867, 0.5
    %v878 = vtanh.pop %v877
    %v879 = vadd.f32 %v878, 1.0
    %v880 = vmul.f32 %v879, 0.5
    %v881 = vtanh.pop %v868
    %v882 = vmul.f32 %v876, %v360
    %v883 = vmul.f32 %v872, %v881
    %v884 = vadd.f32 %v882, %v883
    %v885 = vtanh.pop %v884
    %v886 = vmul.f32 %v880, %v885
    %v887 = vmul.f32 %v580, 0.5
    %v888 = vtanh.pop %v887
    %v889 = vadd.f32 %v888, 1.0
    %v890 = vmul.f32 %v889, 0.5
    %v891 = vmul.f32 %v582, 0.5
    %v892 = vtanh.pop %v891
    %v893 = vadd.f32 %v892, 1.0
    %v894 = vmul.f32 %v893, 0.5
    %v895 = vmul.f32 %v651, 0.5
    %v896 = vtanh.pop %v895
    %v897 = vadd.f32 %v896, 1.0
    %v898 = vmul.f32 %v897, 0.5
    %v899 = vtanh.pop %v653
    %v900 = vmul.f32 %v894, 0.0
    %v901 = vmul.f32 %v890, %v899
    %v902 = vadd.f32 %v900, %v901
    %v903 = vtanh.pop %v902
    %v904 = vmul.f32 %v898, %v903
    %905 = vmatprep.subr.mxu0 %v364
    %906 = vmatpush1.msra.mxu0 %v363
    %907 = vmatprep.subr.mxu0 %v368
    %908 = vmatpush1.msra.mxu0 %v367
    %909 = vmatprep.subr.mxu0 %v372
    %910 = vmatpush1.msra.mxu0 %v371
    %911 = vmatprep.subr.mxu0 %v376
    %912 = vmatpush1.msra.mxu0 %v375
    %913 = vmatprep.subr.mxu0 %v380
    %914 = vmatpush1.msra.mxu0 %v379
    %915 = vmatprep.subr.mxu0 %v384
    %916 = vmatpush1.msra.mxu0 %v383
    %917 = vmatprep.subr.mxu0 %v388
    %918 = vmatpush1.msra.mxu0 %v387
    %919 = vmatprep.subr.mxu0 %v392
    %920 = vmatpush1.msra.mxu0 %v391
    %921 = vmatprep.subr.mxu0 %v396
    %922 = vmatpush1.msra.mxu0 %v395
    %923 = vmatprep.subr.mxu0 %v400
    %924 = vmatpush1.msra.mxu0 %v399
    %925 = vmatprep.subr.mxu0 %v404
    %926 = vmatpush1.msra.mxu0 %v403
    %927 = vmatprep.subr.mxu0 %v408
    %928 = vmatpush1.msra.mxu0 %v407
    %929 = vmatprep.subr.mxu0 %v412
    %930 = vmatpush1.msra.mxu0 %v411
    %931 = vmatprep.subr.mxu0 %v416
    %932 = vmatpush1.msra.mxu0 %v415
    %933 = vmatprep.subr.mxu0 %v420
    %934 = vmatpush1.msra.mxu0 %v419
    %935 = vmatprep.subr.mxu0 %v424
    %936 = vmatpush1.msra.mxu0 %v423
    %937 = vmatprep.subr.mxu0 %v428
    %938 = vmatpush1.msra.mxu0 %v427
    %939 = vmatprep.subr.mxu0 %v432
    %940 = vmatpush1.msra.mxu0 %v431
    %941 = vmatprep.subr.mxu0 %v436
    %942 = vmatpush1.msra.mxu0 %v435
    %943 = vmatprep.subr.mxu0 %v440
    %944 = vmatpush1.msra.mxu0 %v439
    %945 = vmatprep.subr.mxu0 %v444
    %946 = vmatpush1.msra.mxu0 %v443
    %947 = vmatprep.subr.mxu0 %v448
    %948 = vmatpush1.msra.mxu0 %v447
    %949 = vmatprep.subr.mxu0 %v452
    %950 = vmatpush1.msra.mxu0 %v451
    %951 = vmatprep.subr.mxu0 %v456
    %952 = vmatpush1.msra.mxu0 %v455
    %953 = vmatprep.subr.mxu0 %v460
    %954 = vmatpush1.msra.mxu0 %v459
    %955 = vmatprep.subr.mxu0 %v464
    %956 = vmatpush1.msra.mxu0 %v463
    %957 = vmatprep.subr.mxu0 %v468
    %958 = vmatpush1.msra.mxu0 %v467
    %959 = vmatprep.subr.mxu0 %v472
    %960 = vmatpush1.msra.mxu0 %v471
    %961 = vmatprep.subr.mxu0 %v476
    %962 = vmatpush1.msra.mxu0 %v475
    %963 = vmatprep.subr.mxu0 %v480
    %964 = vmatpush1.msra.mxu0 %v479
    %965 = vmatprep.subr.mxu0 %v484
    %966 = vmatpush1.msra.mxu0 %v483
    %967 = vmatprep.subr.mxu0 %v488
    %968 = vmatpush1.msra.mxu0 %v487
    %969 = vmatprep.mubr.f32.mxu0 %v904
    %970 = vmatmul.mubr.f32.gmra.mrb[0].mxu0 %v886
    %v971 = vpop.f32.mrb[0].mxu0
    %v972 = vadd.f32 %v496, %v971
    %v973 = vpop.f32.mrb[0].mxu0
    %v974 = vadd.f32 %v500, %v973
    %975 = vdwg.mxu0
    %976 = vmatprep.subr.mxu0 %v366
    %977 = vmatpush1.msra.mxu0 %v365
    %978 = vmatprep.subr.mxu0 %v370
    %979 = vmatpush1.msra.mxu0 %v369
    %980 = vmatprep.subr.mxu0 %v374
    %981 = vmatpush1.msra.mxu0 %v373
    %982 = vmatprep.subr.mxu0 %v378
    %983 = vmatpush1.msra.mxu0 %v377
    %984 = vmatprep.subr.mxu0 %v382
    %985 = vmatpush1.msra.mxu0 %v381
    %986 = vmatprep.subr.mxu0 %v386
    %987 = vmatpush1.msra.mxu0 %v385
    %988 = vmatprep.subr.mxu0 %v390
    %989 = vmatpush1.msra.mxu0 %v389
    %990 = vmatprep.subr.mxu0 %v394
    %991 = vmatpush1.msra.mxu0 %v393
    %992 = vmatprep.subr.mxu0 %v398
    %993 = vmatpush1.msra.mxu0 %v397
    %994 = vmatprep.subr.mxu0 %v402
    %995 = vmatpush1.msra.mxu0 %v401
    %996 = vmatprep.subr.mxu0 %v406
    %997 = vmatpush1.msra.mxu0 %v405
    %998 = vmatprep.subr.mxu0 %v410
    %999 = vmatpush1.msra.mxu0 %v409
    %1000 = vmatprep.subr.mxu0 %v414
    %1001 = vmatpush1.msra.mxu0 %v413
    %1002 = vmatprep.subr.mxu0 %v418
    %1003 = vmatpush1.msra.mxu0 %v417
    %1004 = vmatprep.subr.mxu0 %v422
    %1005 = vmatpush1.msra.mxu0 %v421
    %1006 = vmatprep.subr.mxu0 %v426
    %1007 = vmatpush1.msra.mxu0 %v425
    %1008 = vmatprep.subr.mxu0 %v430
    %1009 = vmatpush1.msra.mxu0 %v429
    %1010 = vmatprep.subr.mxu0 %v434
    %1011 = vmatpush1.msra.mxu0 %v433
    %1012 = vmatprep.subr.mxu0 %v438
    %1013 = vmatpush1.msra.mxu0 %v437
    %1014 = vmatprep.subr.mxu0 %v442
    %1015 = vmatpush1.msra.mxu0 %v441
    %1016 = vmatprep.subr.mxu0 %v446
    %1017 = vmatpush1.msra.mxu0 %v445
    %1018 = vmatprep.subr.mxu0 %v450
    %1019 = vmatpush1.msra.mxu0 %v449
    %1020 = vmatprep.subr.mxu0 %v454
    %1021 = vmatpush1.msra.mxu0 %v453
    %1022 = vmatprep.subr.mxu0 %v458
    %1023 = vmatpush1.msra.mxu0 %v457
    %1024 = vmatprep.subr.mxu0 %v462
    %1025 = vmatpush1.msra.mxu0 %v461
    %1026 = vmatprep.subr.mxu0 %v466
    %1027 = vmatpush1.msra.mxu0 %v465
    %1028 = vmatprep.subr.mxu0 %v470
    %1029 = vmatpush1.msra.mxu0 %v469
    %1030 = vmatprep.subr.mxu0 %v474
    %1031 = vmatpush1.msra.mxu0 %v473
    %1032 = vmatprep.subr.mxu0 %v478
    %1033 = vmatpush1.msra.mxu0 %v477
    %1034 = vmatprep.subr.mxu0 %v482
    %1035 = vmatpush1.msra.mxu0 %v481
    %1036 = vmatprep.subr.mxu0 %v486
    %1037 = vmatpush1.msra.mxu0 %v485
    %1038 = vmatprep.subr.mxu0 %v490
    %1039 = vmatpush1.msra.mxu0 %v489
    %1040 = vmatprep.mubr.f32.mxu0 %v904
    %1041 = vmatmul.mubr.f32.gmra.mrb[0].mxu0 %v886
    %v1042 = vpop.f32.mrb[0].mxu0
    %v1043 = vadd.f32 %v504, %v1042
    %v1044 = vpop.f32.mrb[0].mxu0
    %v1045 = vadd.f32 %v508, %v1044
    %1046 = vdwg.mxu0
    %v1047 = vld [vmem:[#allocation2 + $0x40] sm:$0xff]
    %v1048 = vld [vmem:[#allocation2 + $0x48] sm:$0xff]
    %v1049 = vld [vmem:[#allocation2 + $0x50] sm:$0xff]
    %v1050 = vld [vmem:[#allocation2 + $0x58] sm:$0xff]
    %1051 = vmatprep.subr.mxu0 %v660
    %1052 = vmatpush1.msra.mxu0 %v659
    %1053 = vmatprep.subr.mxu0 %v664
    %1054 = vmatpush1.msra.mxu0 %v663
    %1055 = vmatprep.subr.mxu0 %v668
    %1056 = vmatpush1.msra.mxu0 %v667
    %1057 = vmatprep.subr.mxu0 %v672
    %1058 = vmatpush1.msra.mxu0 %v671
    %1059 = vmatprep.subr.mxu0 %v676
    %1060 = vmatpush1.msra.mxu0 %v675
    %1061 = vmatprep.subr.mxu0 %v680
    %1062 = vmatpush1.msra.mxu0 %v679
    %1063 = vmatprep.subr.mxu0 %v684
    %1064 = vmatpush1.msra.mxu0 %v683
    %1065 = vmatprep.subr.mxu0 %v688
    %1066 = vmatpush1.msra.mxu0 %v687
    %1067 = vmatprep.subr.mxu0 %v692
    %1068 = vmatpush1.msra.mxu0 %v691
    %1069 = vmatprep.subr.mxu0 %v696
    %1070 = vmatpush1.msra.mxu0 %v695
    %1071 = vmatprep.subr.mxu0 %v700
    %1072 = vmatpush1.msra.mxu0 %v699
    %1073 = vmatprep.subr.mxu0 %v704
    %1074 = vmatpush1.msra.mxu0 %v703
    %1075 = vmatprep.subr.mxu0 %v708
    %1076 = vmatpush1.msra.mxu0 %v707
    %1077 = vmatprep.subr.mxu0 %v712
    %1078 = vmatpush1.msra.mxu0 %v711
    %1079 = vmatprep.subr.mxu0 %v716
    %1080 = vmatpush1.msra.mxu0 %v715
    %1081 = vmatprep.subr.mxu0 %v720
    %1082 = vmatpush1.msra.mxu0 %v719
    %1083 = vmatprep.subr.mxu0 0.0
    %1084 = vmatpush1.msra.mxu0 0.0
    %1085 = vmatprep.subr.mxu0 0.0
    %1086 = vmatpush1.msra.mxu0 0.0
    %1087 = vmatprep.subr.mxu0 0.0
    %1088 = vmatpush1.msra.mxu0 0.0
    %1089 = vmatprep.subr.mxu0 0.0
    %1090 = vmatpush1.msra.mxu0 0.0
    %1091 = vmatprep.subr.mxu0 0.0
    %1092 = vmatpush1.msra.mxu0 0.0
    %1093 = vmatprep.subr.mxu0 0.0
    %1094 = vmatpush1.msra.mxu0 0.0
    %1095 = vmatprep.subr.mxu0 0.0
    %1096 = vmatpush1.msra.mxu0 0.0
    %1097 = vmatprep.subr.mxu0 0.0
    %1098 = vmatpush1.msra.mxu0 0.0
    %1099 = vmatprep.subr.mxu0 0.0
    %1100 = vmatpush1.msra.mxu0 0.0
    %1101 = vmatprep.subr.mxu0 0.0
    %1102 = vmatpush1.msra.mxu0 0.0
    %1103 = vmatprep.subr.mxu0 0.0
    %1104 = vmatpush1.msra.mxu0 0.0
    %1105 = vmatprep.subr.mxu0 0.0
    %1106 = vmatpush1.msra.mxu0 0.0
    %1107 = vmatprep.subr.mxu0 0.0
    %1108 = vmatpush1.msra.mxu0 0.0
    %1109 = vmatprep.subr.mxu0 0.0
    %1110 = vmatpush1.msra.mxu0 0.0
    %1111 = vmatprep.subr.mxu0 0.0
    %1112 = vmatpush1.msra.mxu0 0.0
    %1113 = vmatprep.subr.mxu0 0.0
    %1114 = vmatpush1.msra.mxu0 0.0
    %1115 = vmatprep.mubr.f32.mxu0 0.0
    %1116 = vmatmul.mubr.f32.gmra.mrb[0].mxu0 %v886
    %v1117 = vpop.f32.mrb[0].mxu0
    %v1118 = vadd.f32 0.0, %v1117
    %v1119 = vpop.f32.mrb[0].mxu0
    %v1120 = vadd.f32 0.0, %v1119
    %1121 = vdwg.mxu0
    %1122 = vmatprep.subr.mxu0 %v662
    %1123 = vmatpush1.msra.mxu0 %v661
    %1124 = vmatprep.subr.mxu0 %v666
    %1125 = vmatpush1.msra.mxu0 %v665
    %1126 = vmatprep.subr.mxu0 %v670
    %1127 = vmatpush1.msra.mxu0 %v669
    %1128 = vmatprep.subr.mxu0 %v674
    %1129 = vmatpush1.msra.mxu0 %v673
    %1130 = vmatprep.subr.mxu0 %v678
    %1131 = vmatpush1.msra.mxu0 %v677
    %1132 = vmatprep.subr.mxu0 %v682
    %1133 = vmatpush1.msra.mxu0 %v681
    %1134 = vmatprep.subr.mxu0 %v686
    %1135 = vmatpush1.msra.mxu0 %v685
    %1136 = vmatprep.subr.mxu0 %v690
    %1137 = vmatpush1.msra.mxu0 %v689
    %1138 = vmatprep.subr.mxu0 %v694
    %1139 = vmatpush1.msra.mxu0 %v693
    %1140 = vmatprep.subr.mxu0 %v698
    %1141 = vmatpush1.msra.mxu0 %v697
    %1142 = vmatprep.subr.mxu0 %v702
    %1143 = vmatpush1.msra.mxu0 %v701
    %1144 = vmatprep.subr.mxu0 %v706
    %1145 = vmatpush1.msra.mxu0 %v705
    %1146 = vmatprep.subr.mxu0 %v710
    %1147 = vmatpush1.msra.mxu0 %v709
    %1148 = vmatprep.subr.mxu0 %v714
    %1149 = vmatpush1.msra.mxu0 %v713
    %1150 = vmatprep.subr.mxu0 %v718
    %1151 = vmatpush1.msra.mxu0 %v717
    %1152 = vmatprep.subr.mxu0 %v722
    %1153 = vmatpush1.msra.mxu0 %v721
    %1154 = vmatprep.subr.mxu0 0.0
    %1155 = vmatpush1.msra.mxu0 0.0
    %1156 = vmatprep.subr.mxu0 0.0
    %1157 = vmatpush1.msra.mxu0 0.0
    %1158 = vmatprep.subr.mxu0 0.0
    %1159 = vmatpush1.msra.mxu0 0.0
    %1160 = vmatprep.subr.mxu0 0.0
    %1161 = vmatpush1.msra.mxu0 0.0
    %1162 = vmatprep.subr.mxu0 0.0
    %1163 = vmatpush1.msra.mxu0 0.0
    %1164 = vmatprep.subr.mxu0 0.0
    %1165 = vmatpush1.msra.mxu0 0.0
    %1166 = vmatprep.subr.mxu0 0.0
    %1167 = vmatpush1.msra.mxu0 0.0
    %1168 = vmatprep.subr.mxu0 0.0
    %1169 = vmatpush1.msra.mxu0 0.0
    %1170 = vmatprep.subr.mxu0 0.0
    %1171 = vmatpush1.msra.mxu0 0.0
    %1172 = vmatprep.subr.mxu0 0.0
    %1173 = vmatpush1.msra.mxu0 0.0
    %1174 = vmatprep.subr.mxu0 0.0
    %1175 = vmatpush1.msra.mxu0 0.0
    %1176 = vmatprep.subr.mxu0 0.0
    %1177 = vmatpush1.msra.mxu0 0.0
    %1178 = vmatprep.subr.mxu0 0.0
    %1179 = vmatpush1.msra.mxu0 0.0
    %1180 = vmatprep.subr.mxu0 0.0
    %1181 = vmatpush1.msra.mxu0 0.0
    %1182 = vmatprep.subr.mxu0 0.0
    %1183 = vmatpush1.msra.mxu0 0.0
    %1184 = vmatprep.subr.mxu0 0.0
    %1185 = vmatpush1.msra.mxu0 0.0
    %1186 = vmatprep.mubr.f32.mxu0 0.0
    %1187 = vmatmul.mubr.f32.gmra.mrb[0].mxu0 %v886
    %v1188 = vpop.f32.mrb[0].mxu0
    %v1189 = vadd.f32 0.0, %v1188
    %v1190 = vpop.f32.mrb[0].mxu0
    %v1191 = vadd.f32 0.0, %v1190
    %1192 = vdwg.mxu0
    %v1193 = vadd.f32 %v1047, %v1118
    %v1194 = vadd.f32 %v1048, %v1120
    %v1195 = vadd.f32 %v1049, %v1189
    %v1196 = vadd.f32 %v1050, %v1191
    %v1197 = vmul.f32 %v1193, 0.5
    %v1198 = vtanh.pop %v1197
    %v1199 = vadd.f32 %v1198, 1.0
    %v1200 = vmul.f32 %v1199, 0.5
    %v1201 = vmul.f32 %v1194, 0.5
    %v1202 = vtanh.pop %v1201
    %v1203 = vadd.f32 %v1202, 1.0
    %v1204 = vmul.f32 %v1203, 0.5
    %v1205 = vmul.f32 %v1195, 0.5
    %v1206 = vtanh.pop %v1205
    %v1207 = vadd.f32 %v1206, 1.0
    %v1208 = vmul.f32 %v1207, 0.5
    %v1209 = vtanh.pop %v1196
    %v1210 = vmul.f32 %v1204, %v884
    %v1211 = vmul.f32 %v1200, %v1209
    %v1212 = vadd.f32 %v1210, %v1211
    %v1213 = vtanh.pop %v1212
    %v1214 = vmul.f32 %v1208, %v1213
    %v1215 = vmul.f32 %v972, 0.5
    %v1216 = vtanh.pop %v1215
    %v1217 = vadd.f32 %v1216, 1.0
    %v1218 = vmul.f32 %v1217, 0.5
    %v1219 = vmul.f32 %v974, 0.5
    %v1220 = vtanh.pop %v1219
    %v1221 = vadd.f32 %v1220, 1.0
    %v1222 = vmul.f32 %v1221, 0.5
    %v1223 = vmul.f32 %v1043, 0.5
    %v1224 = vtanh.pop %v1223
    %v1225 = vadd.f32 %v1224, 1.0
    %v1226 = vmul.f32 %v1225, 0.5
    %v1227 = vtanh.pop %v1045
    %v1228 = vmul.f32 %v1222, %v902
    %v1229 = vmul.f32 %v1218, %v1227
    %v1230 = vadd.f32 %v1228, %v1229
    %v1231 = vtanh.pop %v1230
    %v1232 = vmul.f32 %v1226, %v1231
    %1233 = vmatprep.subr.mxu0 %v364
    %1234 = vmatpush1.msra.mxu0 %v363
    %1235 = vmatprep.subr.mxu0 %v368
    %1236 = vmatpush1.msra.mxu0 %v367
    %1237 = vmatprep.subr.mxu0 %v372
    %1238 = vmatpush1.msra.mxu0 %v371
    %1239 = vmatprep.subr.mxu0 %v376
    %1240 = vmatpush1.msra.mxu0 %v375
    %1241 = vmatprep.subr.mxu0 %v380
    %1242 = vmatpush1.msra.mxu0 %v379
    %1243 = vmatprep.subr.mxu0 %v384
    %1244 = vmatpush1.msra.mxu0 %v383
    %1245 = vmatprep.subr.mxu0 %v388
    %1246 = vmatpush1.msra.mxu0 %v387
    %1247 = vmatprep.subr.mxu0 %v392
    %1248 = vmatpush1.msra.mxu0 %v391
    %1249 = vmatprep.subr.mxu0 %v396
    %1250 = vmatpush1.msra.mxu0 %v395
    %1251 = vmatprep.subr.mxu0 %v400
    %1252 = vmatpush1.msra.mxu0 %v399
    %1253 = vmatprep.subr.mxu0 %v404
    %1254 = vmatpush1.msra.mxu0 %v403
    %1255 = vmatprep.subr.mxu0 %v408
    %1256 = vmatpush1.msra.mxu0 %v407
    %1257 = vmatprep.subr.mxu0 %v412
    %1258 = vmatpush1.msra.mxu0 %v411
    %1259 = vmatprep.subr.mxu0 %v416
    %1260 = vmatpush1.msra.mxu0 %v415
    %1261 = vmatprep.subr.mxu0 %v420
    %1262 = vmatpush1.msra.mxu0 %v419
    %1263 = vmatprep.subr.mxu0 %v424
    %1264 = vmatpush1.msra.mxu0 %v423
    %1265 = vmatprep.subr.mxu0 %v428
    %1266 = vmatpush1.msra.mxu0 %v427
    %1267 = vmatprep.subr.mxu0 %v432
    %1268 = vmatpush1.msra.mxu0 %v431
    %1269 = vmatprep.subr.mxu0 %v436
    %1270 = vmatpush1.msra.mxu0 %v435
    %1271 = vmatprep.subr.mxu0 %v440
    %1272 = vmatpush1.msra.mxu0 %v439
    %1273 = vmatprep.subr.mxu0 %v444
    %1274 = vmatpush1.msra.mxu0 %v443
    %1275 = vmatprep.subr.mxu0 %v448
    %1276 = vmatpush1.msra.mxu0 %v447
    %1277 = vmatprep.subr.mxu0 %v452
    %1278 = vmatpush1.msra.mxu0 %v451
    %1279 = vmatprep.subr.mxu0 %v456
    %1280 = vmatpush1.msra.mxu0 %v455
    %1281 = vmatprep.subr.mxu0 %v460
    %1282 = vmatpush1.msra.mxu0 %v459
    %1283 = vmatprep.subr.mxu0 %v464
    %1284 = vmatpush1.msra.mxu0 %v463
    %1285 = vmatprep.subr.mxu0 %v468
    %1286 = vmatpush1.msra.mxu0 %v467
    %1287 = vmatprep.subr.mxu0 %v472
    %1288 = vmatpush1.msra.mxu0 %v471
    %1289 = vmatprep.subr.mxu0 %v476
    %1290 = vmatpush1.msra.mxu0 %v475
    %1291 = vmatprep.subr.mxu0 %v480
    %1292 = vmatpush1.msra.mxu0 %v479
    %1293 = vmatprep.subr.mxu0 %v484
    %1294 = vmatpush1.msra.mxu0 %v483
    %1295 = vmatprep.subr.mxu0 %v488
    %1296 = vmatpush1.msra.mxu0 %v487
    %1297 = vmatprep.mubr.f32.mxu0 %v1232
    %1298 = vmatmul.mubr.f32.gmra.mrb[0].mxu0 %v1214
    %v1299 = vpop.f32.mrb[0].mxu0
    %v1300 = vadd.f32 %v496, %v1299
    %v1301 = vpop.f32.mrb[0].mxu0
    %v1302 = vadd.f32 %v500, %v1301
    %1303 = vdwg.mxu0
    %1304 = vmatprep.subr.mxu0 %v366
    %1305 = vmatpush1.msra.mxu0 %v365
    %1306 = vmatprep.subr.mxu0 %v370
    %1307 = vmatpush1.msra.mxu0 %v369
    %1308 = vmatprep.subr.mxu0 %v374
    %1309 = vmatpush1.msra.mxu0 %v373
    %1310 = vmatprep.subr.mxu0 %v378
    %1311 = vmatpush1.msra.mxu0 %v377
    %1312 = vmatprep.subr.mxu0 %v382
    %1313 = vmatpush1.msra.mxu0 %v381
    %1314 = vmatprep.subr.mxu0 %v386
    %1315 = vmatpush1.msra.mxu0 %v385
    %1316 = vmatprep.subr.mxu0 %v390
    %1317 = vmatpush1.msra.mxu0 %v389
    %1318 = vmatprep.subr.mxu0 %v394
    %1319 = vmatpush1.msra.mxu0 %v393
    %1320 = vmatprep.subr.mxu0 %v398
    %1321 = vmatpush1.msra.mxu0 %v397
    %1322 = vmatprep.subr.mxu0 %v402
    %1323 = vmatpush1.msra.mxu0 %v401
    %1324 = vmatprep.subr.mxu0 %v406
    %1325 = vmatpush1.msra.mxu0 %v405
    %1326 = vmatprep.subr.mxu0 %v410
    %1327 = vmatpush1.msra.mxu0 %v409
    %1328 = vmatprep.subr.mxu0 %v414
    %1329 = vmatpush1.msra.mxu0 %v413
    %1330 = vmatprep.subr.mxu0 %v418
    %1331 = vmatpush1.msra.mxu0 %v417
    %1332 = vmatprep.subr.mxu0 %v422
    %1333 = vmatpush1.msra.mxu0 %v421
    %1334 = vmatprep.subr.mxu0 %v426
    %1335 = vmatpush1.msra.mxu0 %v425
    %1336 = vmatprep.subr.mxu0 %v430
    %1337 = vmatpush1.msra.mxu0 %v429
    %1338 = vmatprep.subr.mxu0 %v434
    %1339 = vmatpush1.msra.mxu0 %v433
    %1340 = vmatprep.subr.mxu0 %v438
    %1341 = vmatpush1.msra.mxu0 %v437
    %1342 = vmatprep.subr.mxu0 %v442
    %1343 = vmatpush1.msra.mxu0 %v441
    %1344 = vmatprep.subr.mxu0 %v446
    %1345 = vmatpush1.msra.mxu0 %v445
    %1346 = vmatprep.subr.mxu0 %v450
    %1347 = vmatpush1.msra.mxu0 %v449
    %1348 = vmatprep.subr.mxu0 %v454
    %1349 = vmatpush1.msra.mxu0 %v453
    %1350 = vmatprep.subr.mxu0 %v458
    %1351 = vmatpush1.msra.mxu0 %v457
    %1352 = vmatprep.subr.mxu0 %v462
    %1353 = vmatpush1.msra.mxu0 %v461
    %1354 = vmatprep.subr.mxu0 %v466
    %1355 = vmatpush1.msra.mxu0 %v465
    %1356 = vmatprep.subr.mxu0 %v470
    %1357 = vmatpush1.msra.mxu0 %v469
    %1358 = vmatprep.subr.mxu0 %v474
    %1359 = vmatpush1.msra.mxu0 %v473
    %1360 = vmatprep.subr.mxu0 %v478
    %1361 = vmatpush1.msra.mxu0 %v477
    %1362 = vmatprep.subr.mxu0 %v482
    %1363 = vmatpush1.msra.mxu0 %v481
    %1364 = vmatprep.subr.mxu0 %v486
    %1365 = vmatpush1.msra.mxu0 %v485
    %1366 = vmatprep.subr.mxu0 %v490
    %1367 = vmatpush1.msra.mxu0 %v489
    %1368 = vmatprep.mubr.f32.mxu0 %v1232
    %1369 = vmatmul.mubr.f32.gmra.mrb[0].mxu0 %v1214
    %v1370 = vpop.f32.mrb[0].mxu0
    %v1371 = vadd.f32 %v504, %v1370
    %v1372 = vpop.f32.mrb[0].mxu0
    %v1373 = vadd.f32 %v508, %v1372
    %1374 = vdwg.mxu0
    %v1375 = vld [vmem:[#allocation2 + $0x60] sm:$0xff]
    %v1376 = vld [vmem:[#allocation2 + $0x68] sm:$0xff]
    %v1377 = vld [vmem:[#allocation2 + $0x70] sm:$0xff]
    %v1378 = vld [vmem:[#allocation2 + $0x78] sm:$0xff]
    %1379 = vmatprep.subr.mxu0 %v660
    %1380 = vmatpush1.msra.mxu0 %v659
    %1381 = vmatprep.subr.mxu0 %v664
    %1382 = vmatpush1.msra.mxu0 %v663
    %1383 = vmatprep.subr.mxu0 %v668
    %1384 = vmatpush1.msra.mxu0 %v667
    %1385 = vmatprep.subr.mxu0 %v672
    %1386 = vmatpush1.msra.mxu0 %v671
    %1387 = vmatprep.subr.mxu0 %v676
    %1388 = vmatpush1.msra.mxu0 %v675
    %1389 = vmatprep.subr.mxu0 %v680
    %1390 = vmatpush1.msra.mxu0 %v679
    %1391 = vmatprep.subr.mxu0 %v684
    %1392 = vmatpush1.msra.mxu0 %v683
    %1393 = vmatprep.subr.mxu0 %v688
    %1394 = vmatpush1.msra.mxu0 %v687
    %1395 = vmatprep.subr.mxu0 %v692
    %1396 = vmatpush1.msra.mxu0 %v691
    %1397 = vmatprep.subr.mxu0 %v696
    %1398 = vmatpush1.msra.mxu0 %v695
    %1399 = vmatprep.subr.mxu0 %v700
    %1400 = vmatpush1.msra.mxu0 %v699
    %1401 = vmatprep.subr.mxu0 %v704
    %1402 = vmatpush1.msra.mxu0 %v703
    %1403 = vmatprep.subr.mxu0 %v708
    %1404 = vmatpush1.msra.mxu0 %v707
    %1405 = vmatprep.subr.mxu0 %v712
    %1406 = vmatpush1.msra.mxu0 %v711
    %1407 = vmatprep.subr.mxu0 %v716
    %1408 = vmatpush1.msra.mxu0 %v715
    %1409 = vmatprep.subr.mxu0 %v720
    %1410 = vmatpush1.msra.mxu0 %v719
    %1411 = vmatprep.subr.mxu0 0.0
    %1412 = vmatpush1.msra.mxu0 0.0
    %1413 = vmatprep.subr.mxu0 0.0
    %1414 = vmatpush1.msra.mxu0 0.0
    %1415 = vmatprep.subr.mxu0 0.0
    %1416 = vmatpush1.msra.mxu0 0.0
    %1417 = vmatprep.subr.mxu0 0.0
    %1418 = vmatpush1.msra.mxu0 0.0
    %1419 = vmatprep.subr.mxu0 0.0
    %1420 = vmatpush1.msra.mxu0 0.0
    %1421 = vmatprep.subr.mxu0 0.0
    %1422 = vmatpush1.msra.mxu0 0.0
    %1423 = vmatprep.subr.mxu0 0.0
    %1424 = vmatpush1.msra.mxu0 0.0
    %1425 = vmatprep.subr.mxu0 0.0
    %1426 = vmatpush1.msra.mxu0 0.0
    %1427 = vmatprep.subr.mxu0 0.0
    %1428 = vmatpush1.msra.mxu0 0.0
    %1429 = vmatprep.subr.mxu0 0.0
    %1430 = vmatpush1.msra.mxu0 0.0
    %1431 = vmatprep.subr.mxu0 0.0
    %1432 = vmatpush1.msra.mxu0 0.0
    %1433 = vmatprep.subr.mxu0 0.0
    %1434 = vmatpush1.msra.mxu0 0.0
    %1435 = vmatprep.subr.mxu0 0.0
    %1436 = vmatpush1.msra.mxu0 0.0
    %1437 = vmatprep.subr.mxu0 0.0
    %1438 = vmatpush1.msra.mxu0 0.0
    %1439 = vmatprep.subr.mxu0 0.0
    %1440 = vmatpush1.msra.mxu0 0.0
    %1441 = vmatprep.subr.mxu0 0.0
    %1442 = vmatpush1.msra.mxu0 0.0
    %1443 = vmatprep.mubr.f32.mxu0 0.0
    %1444 = vmatmul.mubr.f32.gmra.mrb[0].mxu0 %v1214
    %v1445 = vpop.f32.mrb[0].mxu0
    %v1446 = vadd.f32 0.0, %v1445
    %v1447 = vpop.f32.mrb[0].mxu0
    %v1448 = vadd.f32 0.0, %v1447
    %1449 = vdwg.mxu0
    %1450 = vmatprep.subr.mxu0 %v662
    %1451 = vmatpush1.msra.mxu0 %v661
    %1452 = vmatprep.subr.mxu0 %v666
    %1453 = vmatpush1.msra.mxu0 %v665
    %1454 = vmatprep.subr.mxu0 %v670
    %1455 = vmatpush1.msra.mxu0 %v669
    %1456 = vmatprep.subr.mxu0 %v674
    %1457 = vmatpush1.msra.mxu0 %v673
    %1458 = vmatprep.subr.mxu0 %v678
    %1459 = vmatpush1.msra.mxu0 %v677
    %1460 = vmatprep.subr.mxu0 %v682
    %1461 = vmatpush1.msra.mxu0 %v681
    %1462 = vmatprep.subr.mxu0 %v686
    %1463 = vmatpush1.msra.mxu0 %v685
    %1464 = vmatprep.subr.mxu0 %v690
    %1465 = vmatpush1.msra.mxu0 %v689
    %1466 = vmatprep.subr.mxu0 %v694
    %1467 = vmatpush1.msra.mxu0 %v693
    %1468 = vmatprep.subr.mxu0 %v698
    %1469 = vmatpush1.msra.mxu0 %v697
    %1470 = vmatprep.subr.mxu0 %v702
    %1471 = vmatpush1.msra.mxu0 %v701
    %1472 = vmatprep.subr.mxu0 %v706
    %1473 = vmatpush1.msra.mxu0 %v705
    %1474 = vmatprep.subr.mxu0 %v710
    %1475 = vmatpush1.msra.mxu0 %v709
    %1476 = vmatprep.subr.mxu0 %v714
    %1477 = vmatpush1.msra.mxu0 %v713
    %1478 = vmatprep.subr.mxu0 %v718
    %1479 = vmatpush1.msra.mxu0 %v717
    %1480 = vmatprep.subr.mxu0 %v722
    %1481 = vmatpush1.msra.mxu0 %v721
    %1482 = vmatprep.subr.mxu0 0.0
    %1483 = vmatpush1.msra.mxu0 0.0
    %1484 = vmatprep.subr.mxu0 0.0
    %1485 = vmatpush1.msra.mxu0 0.0
    %1486 = vmatprep.subr.mxu0 0.0
    %1487 = vmatpush1.msra.mxu0 0.0
    %1488 = vmatprep.subr.mxu0 0.0
    %1489 = vmatpush1.msra.mxu0 0.0
    %1490 = vmatprep.subr.mxu0 0.0
    %1491 = vmatpush1.msra.mxu0 0.0
    %1492 = vmatprep.subr.mxu0 0.0
    %1493 = vmatpush1.msra.mxu0 0.0
    %1494 = vmatprep.subr.mxu0 0.0
    %1495 = vmatpush1.msra.mxu0 0.0
    %1496 = vmatprep.subr.mxu0 0.0
    %1497 = vmatpush1.msra.mxu0 0.0
    %1498 = vmatprep.subr.mxu0 0.0
    %1499 = vmatpush1.msra.mxu0 0.0
    %1500 = vmatprep.subr.mxu0 0.0
    %1501 = vmatpush1.msra.mxu0 0.0
    %1502 = vmatprep.subr.mxu0 0.0
    %1503 = vmatpush1.msra.mxu0 0.0
    %1504 = vmatprep.subr.mxu0 0.0
    %1505 = vmatpush1.msra.mxu0 0.0
    %1506 = vmatprep.subr.mxu0 0.0
    %1507 = vmatpush1.msra.mxu0 0.0
    %1508 = vmatprep.subr.mxu0 0.0
    %1509 = vmatpush1.msra.mxu0 0.0
    %1510 = vmatprep.subr.mxu0 0.0
    %1511 = vmatpush1.msra.mxu0 0.0
    %1512 = vmatprep.subr.mxu0 0.0
    %1513 = vmatpush1.msra.mxu0 0.0
    %1514 = vmatprep.mubr.f32.mxu0 0.0
    %1515 = vmatmul.mubr.f32.gmra.mrb[0].mxu0 %v1214
    %v1516 = vpop.f32.mrb[0].mxu0
    %v1517 = vadd.f32 0.0, %v1516
    %v1518 = vpop.f32.mrb[0].mxu0
    %v1519 = vadd.f32 0.0, %v1518
    %1520 = vdwg.mxu0
    %v1521 = vadd.f32 %v1375, %v1446
    %v1522 = vadd.f32 %v1376, %v1448
    %v1523 = vadd.f32 %v1377, %v1517
    %v1524 = vadd.f32 %v1378, %v1519
    %v1525 = vmul.f32 %v1521, 0.5
    %v1526 = vtanh.pop %v1525
    %v1527 = vadd.f32 %v1526, 1.0
    %v1528 = vmul.f32 %v1527, 0.5
    %v1529 = vmul.f32 %v1522, 0.5
    %v1530 = vtanh.pop %v1529
    %v1531 = vadd.f32 %v1530, 1.0
    %v1532 = vmul.f32 %v1531, 0.5
    %v1533 = vmul.f32 %v1523, 0.5
    %v1534 = vtanh.pop %v1533
    %v1535 = vadd.f32 %v1534, 1.0
    %v1536 = vmul.f32 %v1535, 0.5
    %v1537 = vtanh.pop %v1524
    %v1538 = vmul.f32 %v1532, %v1212
    %v1539 = vmul.f32 %v1528, %v1537
    %v1540 = vadd.f32 %v1538, %v1539
    %v1541 = vtanh.pop %v1540
    %v1542 = vmul.f32 %v1536, %v1541
    %v1543 = vmul.f32 %v1300, 0.5
    %v1544 = vtanh.pop %v1543
    %v1545 = vadd.f32 %v1544, 1.0
    %v1546 = vmul.f32 %v1545, 0.5
    %v1547 = vmul.f32 %v1302, 0.5
    %v1548 = vtanh.pop %v1547
    %v1549 = vadd.f32 %v1548, 1.0
    %v1550 = vmul.f32 %v1549, 0.5
    %v1551 = vmul.f32 %v1371, 0.5
    %v1552 = vtanh.pop %v1551
    %v1553 = vadd.f32 %v1552, 1.0
    %v1554 = vmul.f32 %v1553, 0.5
    %v1555 = vtanh.pop %v1373
    %v1556 = vmul.f32 %v1550, %v1230
    %v1557 = vmul.f32 %v1546, %v1555
    %v1558 = vadd.f32 %v1556, %v1557
    %v1559 = vtanh.pop %v1558
    %v1560 = vmul.f32 %v1554, %v1559
    %1561 = vmatprep.subr.mxu0 %v364
    %1562 = vmatpush1.msra.mxu0 %v363
    %1563 = vmatprep.subr.mxu0 %v368
    %1564 = vmatpush1.msra.mxu0 %v367
    %1565 = vmatprep.subr.mxu0 %v372
    %1566 = vmatpush1.msra.mxu0 %v371
    %1567 = vmatprep.subr.mxu0 %v376
    %1568 = vmatpush1.msra.mxu0 %v375
    %1569 = vmatprep.subr.mxu0 %v380
    %1570 = vmatpush1.msra.mxu0 %v379
    %1571 = vmatprep.subr.mxu0 %v384
    %1572 = vmatpush1.msra.mxu0 %v383
    %1573 = vmatprep.subr.mxu0 %v388
    %1574 = vmatpush1.msra.mxu0 %v387
    %1575 = vmatprep.subr.mxu0 %v392
    %1576 = vmatpush1.msra.mxu0 %v391
    %1577 = vmatprep.subr.mxu0 %v396
    %1578 = vmatpush1.msra.mxu0 %v395
    %1579 = vmatprep.subr.mxu0 %v400
    %1580 = vmatpush1.msra.mxu0 %v399
    %1581 = vmatprep.subr.mxu0 %v404
    %1582 = vmatpush1.msra.mxu0 %v403
    %1583 = vmatprep.subr.mxu0 %v408
    %1584 = vmatpush1.msra.mxu0 %v407
    %1585 = vmatprep.subr.mxu0 %v412
    %1586 = vmatpush1.msra.mxu0 %v411
    %1587 = vmatprep.subr.mxu0 %v416
    %1588 = vmatpush1.msra.mxu0 %v415
    %1589 = vmatprep.subr.mxu0 %v420
    %1590 = vmatpush1.msra.mxu0 %v419
    %1591 = vmatprep.subr.mxu0 %v424
    %1592 = vmatpush1.msra.mxu0 %v423
    %1593 = vmatprep.subr.mxu0 %v428
    %1594 = vmatpush1.msra.mxu0 %v427
    %1595 = vmatprep.subr.mxu0 %v432
    %1596 = vmatpush1.msra.mxu0 %v431
    %1597 = vmatprep.subr.mxu0 %v436
    %1598 = vmatpush1.msra.mxu0 %v435
    %1599 = vmatprep.subr.mxu0 %v440
    %1600 = vmatpush1.msra.mxu0 %v439
    %1601 = vmatprep.subr.mxu0 %v444
    %1602 = vmatpush1.msra.mxu0 %v443
    %1603 = vmatprep.subr.mxu0 %v448
    %1604 = vmatpush1.msra.mxu0 %v447
    %1605 = vmatprep.subr.mxu0 %v452
    %1606 = vmatpush1.msra.mxu0 %v451
    %1607 = vmatprep.subr.mxu0 %v456
    %1608 = vmatpush1.msra.mxu0 %v455
    %1609 = vmatprep.subr.mxu0 %v460
    %1610 = vmatpush1.msra.mxu0 %v459
    %1611 = vmatprep.subr.mxu0 %v464
    %1612 = vmatpush1.msra.mxu0 %v463
    %1613 = vmatprep.subr.mxu0 %v468
    %1614 = vmatpush1.msra.mxu0 %v467
    %1615 = vmatprep.subr.mxu0 %v472
    %1616 = vmatpush1.msra.mxu0 %v471
    %1617 = vmatprep.subr.mxu0 %v476
    %1618 = vmatpush1.msra.mxu0 %v475
    %1619 = vmatprep.subr.mxu0 %v480
    %1620 = vmatpush1.msra.mxu0 %v479
    %1621 = vmatprep.subr.mxu0 %v484
    %1622 = vmatpush1.msra.mxu0 %v483
    %1623 = vmatprep.subr.mxu0 %v488
    %1624 = vmatpush1.msra.mxu0 %v487
    %1625 = vmatprep.mubr.f32.mxu0 %v1560
    %1626 = vmatmul.mubr.f32.gmra.mrb[0].mxu0 %v1542
    %v1627 = vpop.f32.mrb[0].mxu0
    %v1628 = vadd.f32 %v496, %v1627
    %v1629 = vpop.f32.mrb[0].mxu0
    %v1630 = vadd.f32 %v500, %v1629
    %1631 = vdwg.mxu0
    %1632 = vmatprep.subr.mxu0 %v366
    %1633 = vmatpush1.msra.mxu0 %v365
    %1634 = vmatprep.subr.mxu0 %v370
    %1635 = vmatpush1.msra.mxu0 %v369
    %1636 = vmatprep.subr.mxu0 %v374
    %1637 = vmatpush1.msra.mxu0 %v373
    %1638 = vmatprep.subr.mxu0 %v378
    %1639 = vmatpush1.msra.mxu0 %v377
    %1640 = vmatprep.subr.mxu0 %v382
    %1641 = vmatpush1.msra.mxu0 %v381
    %1642 = vmatprep.subr.mxu0 %v386
    %1643 = vmatpush1.msra.mxu0 %v385
    %1644 = vmatprep.subr.mxu0 %v390
    %1645 = vmatpush1.msra.mxu0 %v389
    %1646 = vmatprep.subr.mxu0 %v394
    %1647 = vmatpush1.msra.mxu0 %v393
    %1648 = vmatprep.subr.mxu0 %v398
    %1649 = vmatpush1.msra.mxu0 %v397
    %1650 = vmatprep.subr.mxu0 %v402
    %1651 = vmatpush1.msra.mxu0 %v401
    %1652 = vmatprep.subr.mxu0 %v406
    %1653 = vmatpush1.msra.mxu0 %v405
    %1654 = vmatprep.subr.mxu0 %v410
    %1655 = vmatpush1.msra.mxu0 %v409
    %1656 = vmatprep.subr.mxu0 %v414
    %1657 = vmatpush1.msra.mxu0 %v413
    %1658 = vmatprep.subr.mxu0 %v418
    %1659 = vmatpush1.msra.mxu0 %v417
    %1660 = vmatprep.subr.mxu0 %v422
    %1661 = vmatpush1.msra.mxu0 %v421
    %1662 = vmatprep.subr.mxu0 %v426
    %1663 = vmatpush1.msra.mxu0 %v425
    %1664 = vmatprep.subr.mxu0 %v430
    %1665 = vmatpush1.msra.mxu0 %v429
    %1666 = vmatprep.subr.mxu0 %v434
    %1667 = vmatpush1.msra.mxu0 %v433
    %1668 = vmatprep.subr.mxu0 %v438
    %1669 = vmatpush1.msra.mxu0 %v437
    %1670 = vmatprep.subr.mxu0 %v442
    %1671 = vmatpush1.msra.mxu0 %v441
    %1672 = vmatprep.subr.mxu0 %v446
    %1673 = vmatpush1.msra.mxu0 %v445
    %1674 = vmatprep.subr.mxu0 %v450
    %1675 = vmatpush1.msra.mxu0 %v449
    %1676 = vmatprep.subr.mxu0 %v454
    %1677 = vmatpush1.msra.mxu0 %v453
    %1678 = vmatprep.subr.mxu0 %v458
    %1679 = vmatpush1.msra.mxu0 %v457
    %1680 = vmatprep.subr.mxu0 %v462
    %1681 = vmatpush1.msra.mxu0 %v461
    %1682 = vmatprep.subr.mxu0 %v466
    %1683 = vmatpush1.msra.mxu0 %v465
    %1684 = vmatprep.subr.mxu0 %v470
    %1685 = vmatpush1.msra.mxu0 %v469
    %1686 = vmatprep.subr.mxu0 %v474
    %1687 = vmatpush1.msra.mxu0 %v473
    %1688 = vmatprep.subr.mxu0 %v478
    %1689 = vmatpush1.msra.mxu0 %v477
    %1690 = vmatprep.subr.mxu0 %v482
    %1691 = vmatpush1.msra.mxu0 %v481
    %1692 = vmatprep.subr.mxu0 %v486
    %1693 = vmatpush1.msra.mxu0 %v485
    %1694 = vmatprep.subr.mxu0 %v490
    %1695 = vmatpush1.msra.mxu0 %v489
    %1696 = vmatprep.mubr.f32.mxu0 %v1560
    %1697 = vmatmul.mubr.f32.gmra.mrb[0].mxu0 %v1542
    %v1698 = vpop.f32.mrb[0].mxu0
    %v1699 = vadd.f32 %v504, %v1698
    %v1700 = vpop.f32.mrb[0].mxu0
    %v1701 = vadd.f32 %v508, %v1700
    %1702 = vdwg.mxu0
    %v1703 = vld [vmem:[#allocation2 + $0x80] sm:$0xff]
    %v1704 = vld [vmem:[#allocation2 + $0x88] sm:$0xff]
    %v1705 = vld [vmem:[#allocation2 + $0x90] sm:$0xff]
    %v1706 = vld [vmem:[#allocation2 + $0x98] sm:$0xff]
    %1707 = vmatprep.subr.mxu0 %v660
    %1708 = vmatpush1.msra.mxu0 %v659
    %1709 = vmatprep.subr.mxu0 %v664
    %1710 = vmatpush1.msra.mxu0 %v663
    %1711 = vmatprep.subr.mxu0 %v668
    %1712 = vmatpush1.msra.mxu0 %v667
    %1713 = vmatprep.subr.mxu0 %v672
    %1714 = vmatpush1.msra.mxu0 %v671
    %1715 = vmatprep.subr.mxu0 %v676
    %1716 = vmatpush1.msra.mxu0 %v675
    %1717 = vmatprep.subr.mxu0 %v680
    %1718 = vmatpush1.msra.mxu0 %v679
    %1719 = vmatprep.subr.mxu0 %v684
    %1720 = vmatpush1.msra.mxu0 %v683
    %1721 = vmatprep.subr.mxu0 %v688
    %1722 = vmatpush1.msra.mxu0 %v687
    %1723 = vmatprep.subr.mxu0 %v692
    %1724 = vmatpush1.msra.mxu0 %v691
    %1725 = vmatprep.subr.mxu0 %v696
    %1726 = vmatpush1.msra.mxu0 %v695
    %1727 = vmatprep.subr.mxu0 %v700
    %1728 = vmatpush1.msra.mxu0 %v699
    %1729 = vmatprep.subr.mxu0 %v704
    %1730 = vmatpush1.msra.mxu0 %v703
    %1731 = vmatprep.subr.mxu0 %v708
    %1732 = vmatpush1.msra.mxu0 %v707
    %1733 = vmatprep.subr.mxu0 %v712
    %1734 = vmatpush1.msra.mxu0 %v711
    %1735 = vmatprep.subr.mxu0 %v716
    %1736 = vmatpush1.msra.mxu0 %v715
    %1737 = vmatprep.subr.mxu0 %v720
    %1738 = vmatpush1.msra.mxu0 %v719
    %1739 = vmatprep.subr.mxu0 0.0
    %1740 = vmatpush1.msra.mxu0 0.0
    %1741 = vmatprep.subr.mxu0 0.0
    %1742 = vmatpush1.msra.mxu0 0.0
    %1743 = vmatprep.subr.mxu0 0.0
    %1744 = vmatpush1.msra.mxu0 0.0
    %1745 = vmatprep.subr.mxu0 0.0
    %1746 = vmatpush1.msra.mxu0 0.0
    %1747 = vmatprep.subr.mxu0 0.0
    %1748 = vmatpush1.msra.mxu0 0.0
    %1749 = vmatprep.subr.mxu0 0.0
    %1750 = vmatpush1.msra.mxu0 0.0
    %1751 = vmatprep.subr.mxu0 0.0
    %1752 = vmatpush1.msra.mxu0 0.0
    %1753 = vmatprep.subr.mxu0 0.0
    %1754 = vmatpush1.msra.mxu0 0.0
    %1755 = vmatprep.subr.mxu0 0.0
    %1756 = vmatpush1.msra.mxu0 0.0
    %1757 = vmatprep.subr.mxu0 0.0
    %1758 = vmatpush1.msra.mxu0 0.0
    %1759 = vmatprep.subr.mxu0 0.0
    %1760 = vmatpush1.msra.mxu0 0.0
    %1761 = vmatprep.subr.mxu0 0.0
    %1762 = vmatpush1.msra.mxu0 0.0
    %1763 = vmatprep.subr.mxu0 0.0
    %1764 = vmatpush1.msra.mxu0 0.0
    %1765 = vmatprep.subr.mxu0 0.0
    %1766 = vmatpush1.msra.mxu0 0.0
    %1767 = vmatprep.subr.mxu0 0.0
    %1768 = vmatpush1.msra.mxu0 0.0
    %1769 = vmatprep.subr.mxu0 0.0
    %1770 = vmatpush1.msra.mxu0 0.0
    %1771 = vmatprep.mubr.f32.mxu0 0.0
    %1772 = vmatmul.mubr.f32.gmra.mrb[0].mxu0 %v1542
    %v1773 = vpop.f32.mrb[0].mxu0
    %v1774 = vadd.f32 0.0, %v1773
    %v1775 = vpop.f32.mrb[0].mxu0
    %v1776 = vadd.f32 0.0, %v1775
    %1777 = vdwg.mxu0
    %1778 = vmatprep.subr.mxu0 %v662
    %1779 = vmatpush1.msra.mxu0 %v661
    %1780 = vmatprep.subr.mxu0 %v666
    %1781 = vmatpush1.msra.mxu0 %v665
    %1782 = vmatprep.subr.mxu0 %v670
    %1783 = vmatpush1.msra.mxu0 %v669
    %1784 = vmatprep.subr.mxu0 %v674
    %1785 = vmatpush1.msra.mxu0 %v673
    %1786 = vmatprep.subr.mxu0 %v678
    %1787 = vmatpush1.msra.mxu0 %v677
    %1788 = vmatprep.subr.mxu0 %v682
    %1789 = vmatpush1.msra.mxu0 %v681
    %1790 = vmatprep.subr.mxu0 %v686
    %1791 = vmatpush1.msra.mxu0 %v685
    %1792 = vmatprep.subr.mxu0 %v690
    %1793 = vmatpush1.msra.mxu0 %v689
    %1794 = vmatprep.subr.mxu0 %v694
    %1795 = vmatpush1.msra.mxu0 %v693
    %1796 = vmatprep.subr.mxu0 %v698
    %1797 = vmatpush1.msra.mxu0 %v697
    %1798 = vmatprep.subr.mxu0 %v702
    %1799 = vmatpush1.msra.mxu0 %v701
    %1800 = vmatprep.subr.mxu0 %v706
    %1801 = vmatpush1.msra.mxu0 %v705
    %1802 = vmatprep.subr.mxu0 %v710
    %1803 = vmatpush1.msra.mxu0 %v709
    %1804 = vmatprep.subr.mxu0 %v714
    %1805 = vmatpush1.msra.mxu0 %v713
    %1806 = vmatprep.subr.mxu0 %v718
    %1807 = vmatpush1.msra.mxu0 %v717
    %1808 = vmatprep.subr.mxu0 %v722
    %1809 = vmatpush1.msra.mxu0 %v721
    %1810 = vmatprep.subr.mxu0 0.0
    %1811 = vmatpush1.msra.mxu0 0.0
    %1812 = vmatprep.subr.mxu0 0.0
    %1813 = vmatpush1.msra.mxu0 0.0
    %1814 = vmatprep.subr.mxu0 0.0
    %1815 = vmatpush1.msra.mxu0 0.0
    %1816 = vmatprep.subr.mxu0 0.0
    %1817 = vmatpush1.msra.mxu0 0.0
    %1818 = vmatprep.subr.mxu0 0.0
    %1819 = vmatpush1.msra.mxu0 0.0
    %1820 = vmatprep.subr.mxu0 0.0
    %1821 = vmatpush1.msra.mxu0 0.0
    %1822 = vmatprep.subr.mxu0 0.0
    %1823 = vmatpush1.msra.mxu0 0.0
    %1824 = vmatprep.subr.mxu0 0.0
    %1825 = vmatpush1.msra.mxu0 0.0
    %1826 = vmatprep.subr.mxu0 0.0
    %1827 = vmatpush1.msra.mxu0 0.0
    %1828 = vmatprep.subr.mxu0 0.0
    %1829 = vmatpush1.msra.mxu0 0.0
    %1830 = vmatprep.subr.mxu0 0.0
    %1831 = vmatpush1.msra.mxu0 0.0
    %1832 = vmatprep.subr.mxu0 0.0
    %1833 = vmatpush1.msra.mxu0 0.0
    %1834 = vmatprep.subr.mxu0 0.0
    %1835 = vmatpush1.msra.mxu0 0.0
    %1836 = vmatprep.subr.mxu0 0.0
    %1837 = vmatpush1.msra.mxu0 0.0
    %1838 = vmatprep.subr.mxu0 0.0
    %1839 = vmatpush1.msra.mxu0 0.0
    %1840 = vmatprep.subr.mxu0 0.0
    %1841 = vmatpush1.msra.mxu0 0.0
    %1842 = vmatprep.mubr.f32.mxu0 0.0
    %1843 = vmatmul.mubr.f32.gmra.mrb[0].mxu0 %v1542
    %v1844 = vpop.f32.mrb[0].mxu0
    %v1845 = vadd.f32 0.0, %v1844
    %v1846 = vpop.f32.mrb[0].mxu0
    %v1847 = vadd.f32 0.0, %v1846
    %1848 = vdwg.mxu0
    %v1849 = vadd.f32 %v1703, %v1774
    %v1850 = vadd.f32 %v1704, %v1776
    %v1851 = vadd.f32 %v1705, %v1845
    %v1852 = vadd.f32 %v1706, %v1847
    %v1853 = vmul.f32 %v1849, 0.5
    %v1854 = vtanh.pop %v1853
    %v1855 = vadd.f32 %v1854, 1.0
    %v1856 = vmul.f32 %v1855, 0.5
    %v1857 = vmul.f32 %v1850, 0.5
    %v1858 = vtanh.pop %v1857
    %v1859 = vadd.f32 %v1858, 1.0
    %v1860 = vmul.f32 %v1859, 0.5
    %v1861 = vmul.f32 %v1851, 0.5
    %v1862 = vtanh.pop %v1861
    %v1863 = vadd.f32 %v1862, 1.0
    %v1864 = vmul.f32 %v1863, 0.5
    %v1865 = vtanh.pop %v1852
    %v1866 = vmul.f32 %v1860, %v1540
    %v1867 = vmul.f32 %v1856, %v1865
    %v1868 = vadd.f32 %v1866, %v1867
    %v1869 = vtanh.pop %v1868
    %v1870 = vmul.f32 %v1864, %v1869
    %v1871 = vmul.f32 %v1628, 0.5
    %v1872 = vtanh.pop %v1871
    %v1873 = vadd.f32 %v1872, 1.0
    %v1874 = vmul.f32 %v1873, 0.5
    %v1875 = vmul.f32 %v1630, 0.5
    %v1876 = vtanh.pop %v1875
    %v1877 = vadd.f32 %v1876, 1.0
    %v1878 = vmul.f32 %v1877, 0.5
    %v1879 = vmul.f32 %v1699, 0.5
    %v1880 = vtanh.pop %v1879
    %v1881 = vadd.f32 %v1880, 1.0
    %v1882 = vmul.f32 %v1881, 0.5
    %v1883 = vtanh.pop %v1701
    %v1884 = vmul.f32 %v1878, %v1558
    %v1885 = vmul.f32 %v1874, %v1883
    %v1886 = vadd.f32 %v1884, %v1885
    %v1887 = vtanh.pop %v1886
    %v1888 = vmul.f32 %v1882, %v1887
    %1889 = vmatprep.subr.mxu0 %v364
    %1890 = vmatpush1.msra.mxu0 %v363
    %1891 = vmatprep.subr.mxu0 %v368
    %1892 = vmatpush1.msra.mxu0 %v367
    %1893 = vmatprep.subr.mxu0 %v372
    %1894 = vmatpush1.msra.mxu0 %v371
    %1895 = vmatprep.subr.mxu0 %v376
    %1896 = vmatpush1.msra.mxu0 %v375
    %1897 = vmatprep.subr.mxu0 %v380
    %1898 = vmatpush1.msra.mxu0 %v379
    %1899 = vmatprep.subr.mxu0 %v384
    %1900 = vmatpush1.msra.mxu0 %v383
    %1901 = vmatprep.subr.mxu0 %v388
    %1902 = vmatpush1.msra.mxu0 %v387
    %1903 = vmatprep.subr.mxu0 %v392
    %1904 = vmatpush1.msra.mxu0 %v391
    %1905 = vmatprep.subr.mxu0 %v396
    %1906 = vmatpush1.msra.mxu0 %v395
    %1907 = vmatprep.subr.mxu0 %v400
    %1908 = vmatpush1.msra.mxu0 %v399
    %1909 = vmatprep.subr.mxu0 %v404
    %1910 = vmatpush1.msra.mxu0 %v403
    %1911 = vmatprep.subr.mxu0 %v408
    %1912 = vmatpush1.msra.mxu0 %v407
    %1913 = vmatprep.subr.mxu0 %v412
    %1914 = vmatpush1.msra.mxu0 %v411
    %1915 = vmatprep.subr.mxu0 %v416
    %1916 = vmatpush1.msra.mxu0 %v415
    %1917 = vmatprep.subr.mxu0 %v420
    %1918 = vmatpush1.msra.mxu0 %v419
    %1919 = vmatprep.subr.mxu0 %v424
    %1920 = vmatpush1.msra.mxu0 %v423
    %1921 = vmatprep.subr.mxu0 %v428
    %1922 = vmatpush1.msra.mxu0 %v427
    %1923 = vmatprep.subr.mxu0 %v432
    %1924 = vmatpush1.msra.mxu0 %v431
    %1925 = vmatprep.subr.mxu0 %v436
    %1926 = vmatpush1.msra.mxu0 %v435
    %1927 = vmatprep.subr.mxu0 %v440
    %1928 = vmatpush1.msra.mxu0 %v439
    %1929 = vmatprep.subr.mxu0 %v444
    %1930 = vmatpush1.msra.mxu0 %v443
    %1931 = vmatprep.subr.mxu0 %v448
    %1932 = vmatpush1.msra.mxu0 %v447
    %1933 = vmatprep.subr.mxu0 %v452
    %1934 = vmatpush1.msra.mxu0 %v451
    %1935 = vmatprep.subr.mxu0 %v456
    %1936 = vmatpush1.msra.mxu0 %v455
    %1937 = vmatprep.subr.mxu0 %v460
    %1938 = vmatpush1.msra.mxu0 %v459
    %1939 = vmatprep.subr.mxu0 %v464
    %1940 = vmatpush1.msra.mxu0 %v463
    %1941 = vmatprep.subr.mxu0 %v468
    %1942 = vmatpush1.msra.mxu0 %v467
    %1943 = vmatprep.subr.mxu0 %v472
    %1944 = vmatpush1.msra.mxu0 %v471
    %1945 = vmatprep.subr.mxu0 %v476
    %1946 = vmatpush1.msra.mxu0 %v475
    %1947 = vmatprep.subr.mxu0 %v480
    %1948 = vmatpush1.msra.mxu0 %v479
    %1949 = vmatprep.subr.mxu0 %v484
    %1950 = vmatpush1.msra.mxu0 %v483
    %1951 = vmatprep.subr.mxu0 %v488
    %1952 = vmatpush1.msra.mxu0 %v487
    %1953 = vmatprep.mubr.f32.mxu0 %v1888
    %1954 = vmatmul.mubr.f32.gmra.mrb[0].mxu0 %v1870
    %v1955 = vpop.f32.mrb[0].mxu0
    %v1956 = vadd.f32 %v496, %v1955
    %v1957 = vpop.f32.mrb[0].mxu0
    %v1958 = vadd.f32 %v500, %v1957
    %1959 = vdwg.mxu0
    %1960 = vmatprep.subr.mxu0 %v366
    %1961 = vmatpush1.msra.mxu0 %v365
    %1962 = vmatprep.subr.mxu0 %v370
    %1963 = vmatpush1.msra.mxu0 %v369
    %1964 = vmatprep.subr.mxu0 %v374
    %1965 = vmatpush1.msra.mxu0 %v373
    %1966 = vmatprep.subr.mxu0 %v378
    %1967 = vmatpush1.msra.mxu0 %v377
    %1968 = vmatprep.subr.mxu0 %v382
    %1969 = vmatpush1.msra.mxu0 %v381
    %1970 = vmatprep.subr.mxu0 %v386
    %1971 = vmatpush1.msra.mxu0 %v385
    %1972 = vmatprep.subr.mxu0 %v390
    %1973 = vmatpush1.msra.mxu0 %v389
    %1974 = vmatprep.subr.mxu0 %v394
    %1975 = vmatpush1.msra.mxu0 %v393
    %1976 = vmatprep.subr.mxu0 %v398
    %1977 = vmatpush1.msra.mxu0 %v397
    %1978 = vmatprep.subr.mxu0 %v402
    %1979 = vmatpush1.msra.mxu0 %v401
    %1980 = vmatprep.subr.mxu0 %v406
    %1981 = vmatpush1.msra.mxu0 %v405
    %1982 = vmatprep.subr.mxu0 %v410
    %1983 = vmatpush1.msra.mxu0 %v409
    %1984 = vmatprep.subr.mxu0 %v414
    %1985 = vmatpush1.msra.mxu0 %v413
    %1986 = vmatprep.subr.mxu0 %v418
    %1987 = vmatpush1.msra.mxu0 %v417
    %1988 = vmatprep.subr.mxu0 %v422
    %1989 = vmatpush1.msra.mxu0 %v421
    %1990 = vmatprep.subr.mxu0 %v426
    %1991 = vmatpush1.msra.mxu0 %v425
    %1992 = vmatprep.subr.mxu0 %v430
    %1993 = vmatpush1.msra.mxu0 %v429
    %1994 = vmatprep.subr.mxu0 %v434
    %1995 = vmatpush1.msra.mxu0 %v433
    %1996 = vmatprep.subr.mxu0 %v438
    %1997 = vmatpush1.msra.mxu0 %v437
    %1998 = vmatprep.subr.mxu0 %v442
    %1999 = vmatpush1.msra.mxu0 %v441
    %2000 = vmatprep.subr.mxu0 %v446
    %2001 = vmatpush1.msra.mxu0 %v445
    %2002 = vmatprep.subr.mxu0 %v450
    %2003 = vmatpush1.msra.mxu0 %v449
    %2004 = vmatprep.subr.mxu0 %v454
    %2005 = vmatpush1.msra.mxu0 %v453
    %2006 = vmatprep.subr.mxu0 %v458
    %2007 = vmatpush1.msra.mxu0 %v457
    %2008 = vmatprep.subr.mxu0 %v462
    %2009 = vmatpush1.msra.mxu0 %v461
    %2010 = vmatprep.subr.mxu0 %v466
    %2011 = vmatpush1.msra.mxu0 %v465
    %2012 = vmatprep.subr.mxu0 %v470
    %2013 = vmatpush1.msra.mxu0 %v469
    %2014 = vmatprep.subr.mxu0 %v474
    %2015 = vmatpush1.msra.mxu0 %v473
    %2016 = vmatprep.subr.mxu0 %v478
    %2017 = vmatpush1.msra.mxu0 %v477
    %2018 = vmatprep.subr.mxu0 %v482
    %2019 = vmatpush1.msra.mxu0 %v481
    %2020 = vmatprep.subr.mxu0 %v486
    %2021 = vmatpush1.msra.mxu0 %v485
    %2022 = vmatprep.subr.mxu0 %v490
    %2023 = vmatpush1.msra.mxu0 %v489
    %2024 = vmatprep.mubr.f32.mxu0 %v1888
    %2025 = vmatmul.mubr.f32.gmra.mrb[0].mxu0 %v1870
    %v2026 = vpop.f32.mrb[0].mxu0
    %v2027 = vadd.f32 %v504, %v2026
    %v2028 = vpop.f32.mrb[0].mxu0
    %v2029 = vadd.f32 %v508, %v2028
    %2030 = vdwg.mxu0
    %v2031 = vld [vmem:[#allocation2 + $0xa0] sm:$0xff]
    %v2032 = vld [vmem:[#allocation2 + $0xa8] sm:$0xff]
    %v2033 = vld [vmem:[#allocation2 + $0xb0] sm:$0xff]
    %v2034 = vld [vmem:[#allocation2 + $0xb8] sm:$0xff]
    %2035 = vmatprep.subr.mxu0 %v660
    %2036 = vmatpush1.msra.mxu0 %v659
    %2037 = vmatprep.subr.mxu0 %v664
    %2038 = vmatpush1.msra.mxu0 %v663
    %2039 = vmatprep.subr.mxu0 %v668
    %2040 = vmatpush1.msra.mxu0 %v667
    %2041 = vmatprep.subr.mxu0 %v672
    %2042 = vmatpush1.msra.mxu0 %v671
    %2043 = vmatprep.subr.mxu0 %v676
    %2044 = vmatpush1.msra.mxu0 %v675
    %2045 = vmatprep.subr.mxu0 %v680
    %2046 = vmatpush1.msra.mxu0 %v679
    %2047 = vmatprep.subr.mxu0 %v684
    %2048 = vmatpush1.msra.mxu0 %v683
    %2049 = vmatprep.subr.mxu0 %v688
    %2050 = vmatpush1.msra.mxu0 %v687
    %2051 = vmatprep.subr.mxu0 %v692
    %2052 = vmatpush1.msra.mxu0 %v691
    %2053 = vmatprep.subr.mxu0 %v696
    %2054 = vmatpush1.msra.mxu0 %v695
    %2055 = vmatprep.subr.mxu0 %v700
    %2056 = vmatpush1.msra.mxu0 %v699
    %2057 = vmatprep.subr.mxu0 %v704
    %2058 = vmatpush1.msra.mxu0 %v703
    %2059 = vmatprep.subr.mxu0 %v708
    %2060 = vmatpush1.msra.mxu0 %v707
    %2061 = vmatprep.subr.mxu0 %v712
    %2062 = vmatpush1.msra.mxu0 %v711
    %2063 = vmatprep.subr.mxu0 %v716
    %2064 = vmatpush1.msra.mxu0 %v715
    %2065 = vmatprep.subr.mxu0 %v720
    %2066 = vmatpush1.msra.mxu0 %v719
    %2067 = vmatprep.subr.mxu0 0.0
    %2068 = vmatpush1.msra.mxu0 0.0
    %2069 = vmatprep.subr.mxu0 0.0
    %2070 = vmatpush1.msra.mxu0 0.0
    %2071 = vmatprep.subr.mxu0 0.0
    %2072 = vmatpush1.msra.mxu0 0.0
    %2073 = vmatprep.subr.mxu0 0.0
    %2074 = vmatpush1.msra.mxu0 0.0
    %2075 = vmatprep.subr.mxu0 0.0
    %2076 = vmatpush1.msra.mxu0 0.0
    %2077 = vmatprep.subr.mxu0 0.0
    %2078 = vmatpush1.msra.mxu0 0.0
    %2079 = vmatprep.subr.mxu0 0.0
    %2080 = vmatpush1.msra.mxu0 0.0
    %2081 = vmatprep.subr.mxu0 0.0
    %2082 = vmatpush1.msra.mxu0 0.0
    %2083 = vmatprep.subr.mxu0 0.0
    %2084 = vmatpush1.msra.mxu0 0.0
    %2085 = vmatprep.subr.mxu0 0.0
    %2086 = vmatpush1.msra.mxu0 0.0
    %2087 = vmatprep.subr.mxu0 0.0
    %2088 = vmatpush1.msra.mxu0 0.0
    %2089 = vmatprep.subr.mxu0 0.0
    %2090 = vmatpush1.msra.mxu0 0.0
    %2091 = vmatprep.subr.mxu0 0.0
    %2092 = vmatpush1.msra.mxu0 0.0
    %2093 = vmatprep.subr.mxu0 0.0
    %2094 = vmatpush1.msra.mxu0 0.0
    %2095 = vmatprep.subr.mxu0 0.0
    %2096 = vmatpush1.msra.mxu0 0.0
    %2097 = vmatprep.subr.mxu0 0.0
    %2098 = vmatpush1.msra.mxu0 0.0
    %2099 = vmatprep.mubr.f32.mxu0 0.0
    %2100 = vmatmul.mubr.f32.gmra.mrb[0].mxu0 %v1870
    %v2101 = vpop.f32.mrb[0].mxu0
    %v2102 = vadd.f32 0.0, %v2101
    %v2103 = vpop.f32.mrb[0].mxu0
    %v2104 = vadd.f32 0.0, %v2103
    %2105 = vdwg.mxu0
    %2106 = vmatprep.subr.mxu0 %v662
    %2107 = vmatpush1.msra.mxu0 %v661
    %2108 = vmatprep.subr.mxu0 %v666
    %2109 = vmatpush1.msra.mxu0 %v665
    %2110 = vmatprep.subr.mxu0 %v670
    %2111 = vmatpush1.msra.mxu0 %v669
    %2112 = vmatprep.subr.mxu0 %v674
    %2113 = vmatpush1.msra.mxu0 %v673
    %2114 = vmatprep.subr.mxu0 %v678
    %2115 = vmatpush1.msra.mxu0 %v677
    %2116 = vmatprep.subr.mxu0 %v682
    %2117 = vmatpush1.msra.mxu0 %v681
    %2118 = vmatprep.subr.mxu0 %v686
    %2119 = vmatpush1.msra.mxu0 %v685
    %2120 = vmatprep.subr.mxu0 %v690
    %2121 = vmatpush1.msra.mxu0 %v689
    %2122 = vmatprep.subr.mxu0 %v694
    %2123 = vmatpush1.msra.mxu0 %v693
    %2124 = vmatprep.subr.mxu0 %v698
    %2125 = vmatpush1.msra.mxu0 %v697
    %2126 = vmatprep.subr.mxu0 %v702
    %2127 = vmatpush1.msra.mxu0 %v701
    %2128 = vmatprep.subr.mxu0 %v706
    %2129 = vmatpush1.msra.mxu0 %v705
    %2130 = vmatprep.subr.mxu0 %v710
    %2131 = vmatpush1.msra.mxu0 %v709
    %2132 = vmatprep.subr.mxu0 %v714
    %2133 = vmatpush1.msra.mxu0 %v713
    %2134 = vmatprep.subr.mxu0 %v718
    %2135 = vmatpush1.msra.mxu0 %v717
    %2136 = vmatprep.subr.mxu0 %v722
    %2137 = vmatpush1.msra.mxu0 %v721
    %2138 = vmatprep.subr.mxu0 0.0
    %2139 = vmatpush1.msra.mxu0 0.0
    %2140 = vmatprep.subr.mxu0 0.0
    %2141 = vmatpush1.msra.mxu0 0.0
    %2142 = vmatprep.subr.mxu0 0.0
    %2143 = vmatpush1.msra.mxu0 0.0
    %2144 = vmatprep.subr.mxu0 0.0
    %2145 = vmatpush1.msra.mxu0 0.0
    %2146 = vmatprep.subr.mxu0 0.0
    %2147 = vmatpush1.msra.mxu0 0.0
    %2148 = vmatprep.subr.mxu0 0.0
    %2149 = vmatpush1.msra.mxu0 0.0
    %2150 = vmatprep.subr.mxu0 0.0
    %2151 = vmatpush1.msra.mxu0 0.0
    %2152 = vmatprep.subr.mxu0 0.0
    %2153 = vmatpush1.msra.mxu0 0.0
    %2154 = vmatprep.subr.mxu0 0.0
    %2155 = vmatpush1.msra.mxu0 0.0
    %2156 = vmatprep.subr.mxu0 0.0
    %2157 = vmatpush1.msra.mxu0 0.0
    %2158 = vmatprep.subr.mxu0 0.0
    %2159 = vmatpush1.msra.mxu0 0.0
    %2160 = vmatprep.subr.mxu0 0.0
    %2161 = vmatpush1.msra.mxu0 0.0
    %2162 = vmatprep.subr.mxu0 0.0
    %2163 = vmatpush1.msra.mxu0 0.0
    %2164 = vmatprep.subr.mxu0 0.0
    %2165 = vmatpush1.msra.mxu0 0.0
    %2166 = vmatprep.subr.mxu0 0.0
    %2167 = vmatpush1.msra.mxu0 0.0
    %2168 = vmatprep.subr.mxu0 0.0
    %2169 = vmatpush1.msra.mxu0 0.0
    %2170 = vmatprep.mubr.f32.mxu0 0.0
    %2171 = vmatmul.mubr.f32.gmra.mrb[0].mxu0 %v1870
    %v2172 = vpop.f32.mrb[0].mxu0
    %v2173 = vadd.f32 0.0, %v2172
    %v2174 = vpop.f32.mrb[0].mxu0
    %v2175 = vadd.f32 0.0, %v2174
    %2176 = vdwg.mxu0
    %v2177 = vadd.f32 %v2031, %v2102
    %v2178 = vadd.f32 %v2032, %v2104
    %v2179 = vadd.f32 %v2033, %v2173
    %v2180 = vadd.f32 %v2034, %v2175
    %v2181 = vmul.f32 %v2177, 0.5
    %v2182 = vtanh.pop %v2181
    %v2183 = vadd.f32 %v2182, 1.0
    %v2184 = vmul.f32 %v2183, 0.5
    %v2185 = vmul.f32 %v2178, 0.5
    %v2186 = vtanh.pop %v2185
    %v2187 = vadd.f32 %v2186, 1.0
    %v2188 = vmul.f32 %v2187, 0.5
    %v2189 = vmul.f32 %v2179, 0.5
    %v2190 = vtanh.pop %v2189
    %v2191 = vadd.f32 %v2190, 1.0
    %v2192 = vmul.f32 %v2191, 0.5
    %v2193 = vtanh.pop %v2180
    %v2194 = vmul.f32 %v2188, %v1868
    %v2195 = vmul.f32 %v2184, %v2193
    %v2196 = vadd.f32 %v2194, %v2195
    %v2197 = vtanh.pop %v2196
    %v2198 = vmul.f32 %v2192, %v2197
    %v2199 = vmul.f32 %v1956, 0.5
    %v2200 = vtanh.pop %v2199
    %v2201 = vadd.f32 %v2200, 1.0
    %v2202 = vmul.f32 %v2201, 0.5
    %v2203 = vmul.f32 %v1958, 0.5
    %v2204 = vtanh.pop %v2203
    %v2205 = vadd.f32 %v2204, 1.0
    %v2206 = vmul.f32 %v2205, 0.5
    %v2207 = vmul.f32 %v2027, 0.5
    %v2208 = vtanh.pop %v2207
    %v2209 = vadd.f32 %v2208, 1.0
    %v2210 = vmul.f32 %v2209, 0.5
    %v2211 = vtanh.pop %v2029
    %v2212 = vmul.f32 %v2206, %v1886
    %v2213 = vmul.f32 %v2202, %v2211
    %v2214 = vadd.f32 %v2212, %v2213
    %v2215 = vtanh.pop %v2214
    %v2216 = vmul.f32 %v2210, %v2215
    %2217 = vmatprep.subr.mxu0 %v364
    %2218 = vmatpush1.msra.mxu0 %v363
    %2219 = vmatprep.subr.mxu0 %v368
    %2220 = vmatpush1.msra.mxu0 %v367
    %2221 = vmatprep.subr.mxu0 %v372
    %2222 = vmatpush1.msra.mxu0 %v371
    %2223 = vmatprep.subr.mxu0 %v376
    %2224 = vmatpush1.msra.mxu0 %v375
    %2225 = vmatprep.subr.mxu0 %v380
    %2226 = vmatpush1.msra.mxu0 %v379
    %2227 = vmatprep.subr.mxu0 %v384
    %2228 = vmatpush1.msra.mxu0 %v383
    %2229 = vmatprep.subr.mxu0 %v388
    %2230 = vmatpush1.msra.mxu0 %v387
    %2231 = vmatprep.subr.mxu0 %v392
    %2232 = vmatpush1.msra.mxu0 %v391
    %2233 = vmatprep.subr.mxu0 %v396
    %2234 = vmatpush1.msra.mxu0 %v395
    %2235 = vmatprep.subr.mxu0 %v400
    %2236 = vmatpush1.msra.mxu0 %v399
    %2237 = vmatprep.subr.mxu0 %v404
    %2238 = vmatpush1.msra.mxu0 %v403
    %2239 = vmatprep.subr.mxu0 %v408
    %2240 = vmatpush1.msra.mxu0 %v407
    %2241 = vmatprep.subr.mxu0 %v412
    %2242 = vmatpush1.msra.mxu0 %v411
    %2243 = vmatprep.subr.mxu0 %v416
    %2244 = vmatpush1.msra.mxu0 %v415
    %2245 = vmatprep.subr.mxu0 %v420
    %2246 = vmatpush1.msra.mxu0 %v419
    %2247 = vmatprep.subr.mxu0 %v424
    %2248 = vmatpush1.msra.mxu0 %v423
    %2249 = vmatprep.subr.mxu0 %v428
    %2250 = vmatpush1.msra.mxu0 %v427
    %2251 = vmatprep.subr.mxu0 %v432
    %2252 = vmatpush1.msra.mxu0 %v431
    %2253 = vmatprep.subr.mxu0 %v436
    %2254 = vmatpush1.msra.mxu0 %v435
    %2255 = vmatprep.subr.mxu0 %v440
    %2256 = vmatpush1.msra.mxu0 %v439
    %2257 = vmatprep.subr.mxu0 %v444
    %2258 = vmatpush1.msra.mxu0 %v443
    %2259 = vmatprep.subr.mxu0 %v448
    %2260 = vmatpush1.msra.mxu0 %v447
    %2261 = vmatprep.subr.mxu0 %v452
    %2262 = vmatpush1.msra.mxu0 %v451
    %2263 = vmatprep.subr.mxu0 %v456
    %2264 = vmatpush1.msra.mxu0 %v455
    %2265 = vmatprep.subr.mxu0 %v460
    %2266 = vmatpush1.msra.mxu0 %v459
    %2267 = vmatprep.subr.mxu0 %v464
    %2268 = vmatpush1.msra.mxu0 %v463
    %2269 = vmatprep.subr.mxu0 %v468
    %2270 = vmatpush1.msra.mxu0 %v467
    %2271 = vmatprep.subr.mxu0 %v472
    %2272 = vmatpush1.msra.mxu0 %v471
    %2273 = vmatprep.subr.mxu0 %v476
    %2274 = vmatpush1.msra.mxu0 %v475
    %2275 = vmatprep.subr.mxu0 %v480
    %2276 = vmatpush1.msra.mxu0 %v479
    %2277 = vmatprep.subr.mxu0 %v484
    %2278 = vmatpush1.msra.mxu0 %v483
    %2279 = vmatprep.subr.mxu0 %v488
    %2280 = vmatpush1.msra.mxu0 %v487
    %2281 = vmatprep.mubr.f32.mxu0 %v2216
    %2282 = vmatmul.mubr.f32.gmra.mrb[0].mxu0 %v2198
    %v2283 = vpop.f32.mrb[0].mxu0
    %v2284 = vadd.f32 %v496, %v2283
    %v2285 = vpop.f32.mrb[0].mxu0
    %v2286 = vadd.f32 %v500, %v2285
    %2287 = vdwg.mxu0
    %2288 = vmatprep.subr.mxu0 %v366
    %2289 = vmatpush1.msra.mxu0 %v365
    %2290 = vmatprep.subr.mxu0 %v370
    %2291 = vmatpush1.msra.mxu0 %v369
    %2292 = vmatprep.subr.mxu0 %v374
    %2293 = vmatpush1.msra.mxu0 %v373
    %2294 = vmatprep.subr.mxu0 %v378
    %2295 = vmatpush1.msra.mxu0 %v377
    %2296 = vmatprep.subr.mxu0 %v382
    %2297 = vmatpush1.msra.mxu0 %v381
    %2298 = vmatprep.subr.mxu0 %v386
    %2299 = vmatpush1.msra.mxu0 %v385
    %2300 = vmatprep.subr.mxu0 %v390
    %2301 = vmatpush1.msra.mxu0 %v389
    %2302 = vmatprep.subr.mxu0 %v394
    %2303 = vmatpush1.msra.mxu0 %v393
    %2304 = vmatprep.subr.mxu0 %v398
    %2305 = vmatpush1.msra.mxu0 %v397
    %2306 = vmatprep.subr.mxu0 %v402
    %2307 = vmatpush1.msra.mxu0 %v401
    %2308 = vmatprep.subr.mxu0 %v406
    %2309 = vmatpush1.msra.mxu0 %v405
    %2310 = vmatprep.subr.mxu0 %v410
    %2311 = vmatpush1.msra.mxu0 %v409
    %2312 = vmatprep.subr.mxu0 %v414
    %2313 = vmatpush1.msra.mxu0 %v413
    %2314 = vmatprep.subr.mxu0 %v418
    %2315 = vmatpush1.msra.mxu0 %v417
    %2316 = vmatprep.subr.mxu0 %v422
    %2317 = vmatpush1.msra.mxu0 %v421
    %2318 = vmatprep.subr.mxu0 %v426
    %2319 = vmatpush1.msra.mxu0 %v425
    %2320 = vmatprep.subr.mxu0 %v430
    %2321 = vmatpush1.msra.mxu0 %v429
    %2322 = vmatprep.subr.mxu0 %v434
    %2323 = vmatpush1.msra.mxu0 %v433
    %2324 = vmatprep.subr.mxu0 %v438
    %2325 = vmatpush1.msra.mxu0 %v437
    %2326 = vmatprep.subr.mxu0 %v442
    %2327 = vmatpush1.msra.mxu0 %v441
    %2328 = vmatprep.subr.mxu0 %v446
    %2329 = vmatpush1.msra.mxu0 %v445
    %2330 = vmatprep.subr.mxu0 %v450
    %2331 = vmatpush1.msra.mxu0 %v449
    %2332 = vmatprep.subr.mxu0 %v454
    %2333 = vmatpush1.msra.mxu0 %v453
    %2334 = vmatprep.subr.mxu0 %v458
    %2335 = vmatpush1.msra.mxu0 %v457
    %2336 = vmatprep.subr.mxu0 %v462
    %2337 = vmatpush1.msra.mxu0 %v461
    %2338 = vmatprep.subr.mxu0 %v466
    %2339 = vmatpush1.msra.mxu0 %v465
    %2340 = vmatprep.subr.mxu0 %v470
    %2341 = vmatpush1.msra.mxu0 %v469
    %2342 = vmatprep.subr.mxu0 %v474
    %2343 = vmatpush1.msra.mxu0 %v473
    %2344 = vmatprep.subr.mxu0 %v478
    %2345 = vmatpush1.msra.mxu0 %v477
    %2346 = vmatprep.subr.mxu0 %v482
    %2347 = vmatpush1.msra.mxu0 %v481
    %2348 = vmatprep.subr.mxu0 %v486
    %2349 = vmatpush1.msra.mxu0 %v485
    %2350 = vmatprep.subr.mxu0 %v490
    %2351 = vmatpush1.msra.mxu0 %v489
    %2352 = vmatprep.mubr.f32.mxu0 %v2216
    %2353 = vmatmul.mubr.f32.gmra.mrb[0].mxu0 %v2198
    %v2354 = vpop.f32.mrb[0].mxu0
    %v2355 = vadd.f32 %v504, %v2354
    %v2356 = vpop.f32.mrb[0].mxu0
    %v2357 = vadd.f32 %v508, %v2356
    %2358 = vdwg.mxu0
    %v2359 = vld [vmem:[#allocation2 + $0xc0] sm:$0xff]
    %v2360 = vld [vmem:[#allocation2 + $0xc8] sm:$0xff]
    %v2361 = vld [vmem:[#allocation2 + $0xd0] sm:$0xff]
    %v2362 = vld [vmem:[#allocation2 + $0xd8] sm:$0xff]
    %2363 = vmatprep.subr.mxu0 %v660
    %2364 = vmatpush1.msra.mxu0 %v659
    %2365 = vmatprep.subr.mxu0 %v664
    %2366 = vmatpush1.msra.mxu0 %v663
    %2367 = vmatprep.subr.mxu0 %v668
    %2368 = vmatpush1.msra.mxu0 %v667
    %2369 = vmatprep.subr.mxu0 %v672
    %2370 = vmatpush1.msra.mxu0 %v671
    %2371 = vmatprep.subr.mxu0 %v676
    %2372 = vmatpush1.msra.mxu0 %v675
    %2373 = vmatprep.subr.mxu0 %v680
    %2374 = vmatpush1.msra.mxu0 %v679
    %2375 = vmatprep.subr.mxu0 %v684
    %2376 = vmatpush1.msra.mxu0 %v683
    %2377 = vmatprep.subr.mxu0 %v688
    %2378 = vmatpush1.msra.mxu0 %v687
    %2379 = vmatprep.subr.mxu0 %v692
    %2380 = vmatpush1.msra.mxu0 %v691
    %2381 = vmatprep.subr.mxu0 %v696
    %2382 = vmatpush1.msra.mxu0 %v695
    %2383 = vmatprep.subr.mxu0 %v700
    %2384 = vmatpush1.msra.mxu0 %v699
    %2385 = vmatprep.subr.mxu0 %v704
    %2386 = vmatpush1.msra.mxu0 %v703
    %2387 = vmatprep.subr.mxu0 %v708
    %2388 = vmatpush1.msra.mxu0 %v707
    %2389 = vmatprep.subr.mxu0 %v712
    %2390 = vmatpush1.msra.mxu0 %v711
    %2391 = vmatprep.subr.mxu0 %v716
    %2392 = vmatpush1.msra.mxu0 %v715
    %2393 = vmatprep.subr.mxu0 %v720
    %2394 = vmatpush1.msra.mxu0 %v719
    %2395 = vmatprep.subr.mxu0 0.0
    %2396 = vmatpush1.msra.mxu0 0.0
    %2397 = vmatprep.subr.mxu0 0.0
    %2398 = vmatpush1.msra.mxu0 0.0
    %2399 = vmatprep.subr.mxu0 0.0
    %2400 = vmatpush1.msra.mxu0 0.0
    %2401 = vmatprep.subr.mxu0 0.0
    %2402 = vmatpush1.msra.mxu0 0.0
    %2403 = vmatprep.subr.mxu0 0.0
    %2404 = vmatpush1.msra.mxu0 0.0
    %2405 = vmatprep.subr.mxu0 0.0
    %2406 = vmatpush1.msra.mxu0 0.0
    %2407 = vmatprep.subr.mxu0 0.0
    %2408 = vmatpush1.msra.mxu0 0.0
    %2409 = vmatprep.subr.mxu0 0.0
    %2410 = vmatpush1.msra.mxu0 0.0
    %2411 = vmatprep.subr.mxu0 0.0
    %2412 = vmatpush1.msra.mxu0 0.0
    %2413 = vmatprep.subr.mxu0 0.0
    %2414 = vmatpush1.msra.mxu0 0.0
    %2415 = vmatprep.subr.mxu0 0.0
    %2416 = vmatpush1.msra.mxu0 0.0
    %2417 = vmatprep.subr.mxu0 0.0
    %2418 = vmatpush1.msra.mxu0 0.0
    %2419 = vmatprep.subr.mxu0 0.0
    %2420 = vmatpush1.msra.mxu0 0.0
    %2421 = vmatprep.subr.mxu0 0.0
    %2422 = vmatpush1.msra.mxu0 0.0
    %2423 = vmatprep.subr.mxu0 0.0
    %2424 = vmatpush1.msra.mxu0 0.0
    %2425 = vmatprep.subr.mxu0 0.0
    %2426 = vmatpush1.msra.mxu0 0.0
    %2427 = vmatprep.mubr.f32.mxu0 0.0
    %2428 = vmatmul.mubr.f32.gmra.mrb[0].mxu0 %v2198
    %v2429 = vpop.f32.mrb[0].mxu0
    %v2430 = vadd.f32 0.0, %v2429
    %v2431 = vpop.f32.mrb[0].mxu0
    %v2432 = vadd.f32 0.0, %v2431
    %2433 = vdwg.mxu0
    %2434 = vmatprep.subr.mxu0 %v662
    %2435 = vmatpush1.msra.mxu0 %v661
    %2436 = vmatprep.subr.mxu0 %v666
    %2437 = vmatpush1.msra.mxu0 %v665
    %2438 = vmatprep.subr.mxu0 %v670
    %2439 = vmatpush1.msra.mxu0 %v669
    %2440 = vmatprep.subr.mxu0 %v674
    %2441 = vmatpush1.msra.mxu0 %v673
    %2442 = vmatprep.subr.mxu0 %v678
    %2443 = vmatpush1.msra.mxu0 %v677
    %2444 = vmatprep.subr.mxu0 %v682
    %2445 = vmatpush1.msra.mxu0 %v681
    %2446 = vmatprep.subr.mxu0 %v686
    %2447 = vmatpush1.msra.mxu0 %v685
    %2448 = vmatprep.subr.mxu0 %v690
    %2449 = vmatpush1.msra.mxu0 %v689
    %2450 = vmatprep.subr.mxu0 %v694
    %2451 = vmatpush1.msra.mxu0 %v693
    %2452 = vmatprep.subr.mxu0 %v698
    %2453 = vmatpush1.msra.mxu0 %v697
    %2454 = vmatprep.subr.mxu0 %v702
    %2455 = vmatpush1.msra.mxu0 %v701
    %2456 = vmatprep.subr.mxu0 %v706
    %2457 = vmatpush1.msra.mxu0 %v705
    %2458 = vmatprep.subr.mxu0 %v710
    %2459 = vmatpush1.msra.mxu0 %v709
    %2460 = vmatprep.subr.mxu0 %v714
    %2461 = vmatpush1.msra.mxu0 %v713
    %2462 = vmatprep.subr.mxu0 %v718
    %2463 = vmatpush1.msra.mxu0 %v717
    %2464 = vmatprep.subr.mxu0 %v722
    %2465 = vmatpush1.msra.mxu0 %v721
    %2466 = vmatprep.subr.mxu0 0.0
    %2467 = vmatpush1.msra.mxu0 0.0
    %2468 = vmatprep.subr.mxu0 0.0
    %2469 = vmatpush1.msra.mxu0 0.0
    %2470 = vmatprep.subr.mxu0 0.0
    %2471 = vmatpush1.msra.mxu0 0.0
    %2472 = vmatprep.subr.mxu0 0.0
    %2473 = vmatpush1.msra.mxu0 0.0
    %2474 = vmatprep.subr.mxu0 0.0
    %2475 = vmatpush1.msra.mxu0 0.0
    %2476 = vmatprep.subr.mxu0 0.0
    %2477 = vmatpush1.msra.mxu0 0.0
    %2478 = vmatprep.subr.mxu0 0.0
    %2479 = vmatpush1.msra.mxu0 0.0
    %2480 = vmatprep.subr.mxu0 0.0
    %2481 = vmatpush1.msra.mxu0 0.0
    %2482 = vmatprep.subr.mxu0 0.0
    %2483 = vmatpush1.msra.mxu0 0.0
    %2484 = vmatprep.subr.mxu0 0.0
    %2485 = vmatpush1.msra.mxu0 0.0
    %2486 = vmatprep.subr.mxu0 0.0
    %2487 = vmatpush1.msra.mxu0 0.0
    %2488 = vmatprep.subr.mxu0 0.0
    %2489 = vmatpush1.msra.mxu0 0.0
    %2490 = vmatprep.subr.mxu0 0.0
    %2491 = vmatpush1.msra.mxu0 0.0
    %2492 = vmatprep.subr.mxu0 0.0
    %2493 = vmatpush1.msra.mxu0 0.0
    %2494 = vmatprep.subr.mxu0 0.0
    %2495 = vmatpush1.msra.mxu0 0.0
    %2496 = vmatprep.subr.mxu0 0.0
    %2497 = vmatpush1.msra.mxu0 0.0
    %2498 = vmatprep.mubr.f32.mxu0 0.0
    %2499 = vmatmul.mubr.f32.gmra.mrb[0].mxu0 %v2198
    %v2500 = vpop.f32.mrb[0].mxu0
    %v2501 = vadd.f32 0.0, %v2500
    %v2502 = vpop.f32.mrb[0].mxu0
    %v2503 = vadd.f32 0.0, %v2502
    %2504 = vdwg.mxu0
    %v2505 = vadd.f32 %v2359, %v2430
    %v2506 = vadd.f32 %v2360, %v2432
    %v2507 = vadd.f32 %v2361, %v2501
    %v2508 = vadd.f32 %v2362, %v2503
    %v2509 = vmul.f32 %v2505, 0.5
    %v2510 = vtanh.pop %v2509
    %v2511 = vadd.f32 %v2510, 1.0
    %v2512 = vmul.f32 %v2511, 0.5
    %v2513 = vmul.f32 %v2506, 0.5
    %v2514 = vtanh.pop %v2513
    %v2515 = vadd.f32 %v2514, 1.0
    %v2516 = vmul.f32 %v2515, 0.5
    %v2517 = vmul.f32 %v2507, 0.5
    %v2518 = vtanh.pop %v2517
    %v2519 = vadd.f32 %v2518, 1.0
    %v2520 = vmul.f32 %v2519, 0.5
    %v2521 = vtanh.pop %v2508
    %v2522 = vmul.f32 %v2516, %v2196
    %v2523 = vmul.f32 %v2512, %v2521
    %v2524 = vadd.f32 %v2522, %v2523
    %v2525 = vtanh.pop %v2524
    %v2526 = vmul.f32 %v2520, %v2525
    %v2527 = vmul.f32 %v2284, 0.5
    %v2528 = vtanh.pop %v2527
    %v2529 = vadd.f32 %v2528, 1.0
    %v2530 = vmul.f32 %v2529, 0.5
    %v2531 = vmul.f32 %v2286, 0.5
    %v2532 = vtanh.pop %v2531
    %v2533 = vadd.f32 %v2532, 1.0
    %v2534 = vmul.f32 %v2533, 0.5
    %v2535 = vmul.f32 %v2355, 0.5
    %v2536 = vtanh.pop %v2535
    %v2537 = vadd.f32 %v2536, 1.0
    %v2538 = vmul.f32 %v2537, 0.5
    %v2539 = vtanh.pop %v2357
    %v2540 = vmul.f32 %v2534, %v2214
    %v2541 = vmul.f32 %v2530, %v2539
    %v2542 = vadd.f32 %v2540, %v2541
    %v2543 = vtanh.pop %v2542
    %v2544 = vmul.f32 %v2538, %v2543
    %2545 = vmatprep.subr.mxu0 %v364
    %2546 = vmatpush1.msra.mxu0 %v363
    %2547 = vmatprep.subr.mxu0 %v368
    %2548 = vmatpush1.msra.mxu0 %v367
    %2549 = vmatprep.subr.mxu0 %v372
    %2550 = vmatpush1.msra.mxu0 %v371
    %2551 = vmatprep.subr.mxu0 %v376
    %2552 = vmatpush1.msra.mxu0 %v375
    %2553 = vmatprep.subr.mxu0 %v380
    %2554 = vmatpush1.msra.mxu0 %v379
    %2555 = vmatprep.subr.mxu0 %v384
    %2556 = vmatpush1.msra.mxu0 %v383
    %2557 = vmatprep.subr.mxu0 %v388
    %2558 = vmatpush1.msra.mxu0 %v387
    %2559 = vmatprep.subr.mxu0 %v392
    %2560 = vmatpush1.msra.mxu0 %v391
    %2561 = vmatprep.subr.mxu0 %v396
    %2562 = vmatpush1.msra.mxu0 %v395
    %2563 = vmatprep.subr.mxu0 %v400
    %2564 = vmatpush1.msra.mxu0 %v399
    %2565 = vmatprep.subr.mxu0 %v404
    %2566 = vmatpush1.msra.mxu0 %v403
    %2567 = vmatprep.subr.mxu0 %v408
    %2568 = vmatpush1.msra.mxu0 %v407
    %2569 = vmatprep.subr.mxu0 %v412
    %2570 = vmatpush1.msra.mxu0 %v411
    %2571 = vmatprep.subr.mxu0 %v416
    %2572 = vmatpush1.msra.mxu0 %v415
    %2573 = vmatprep.subr.mxu0 %v420
    %2574 = vmatpush1.msra.mxu0 %v419
    %2575 = vmatprep.subr.mxu0 %v424
    %2576 = vmatpush1.msra.mxu0 %v423
    %2577 = vmatprep.subr.mxu0 %v428
    %2578 = vmatpush1.msra.mxu0 %v427
    %2579 = vmatprep.subr.mxu0 %v432
    %2580 = vmatpush1.msra.mxu0 %v431
    %2581 = vmatprep.subr.mxu0 %v436
    %2582 = vmatpush1.msra.mxu0 %v435
    %2583 = vmatprep.subr.mxu0 %v440
    %2584 = vmatpush1.msra.mxu0 %v439
    %2585 = vmatprep.subr.mxu0 %v444
    %2586 = vmatpush1.msra.mxu0 %v443
    %2587 = vmatprep.subr.mxu0 %v448
    %2588 = vmatpush1.msra.mxu0 %v447
    %2589 = vmatprep.subr.mxu0 %v452
    %2590 = vmatpush1.msra.mxu0 %v451
    %2591 = vmatprep.subr.mxu0 %v456
    %2592 = vmatpush1.msra.mxu0 %v455
    %2593 = vmatprep.subr.mxu0 %v460
    %2594 = vmatpush1.msra.mxu0 %v459
    %2595 = vmatprep.subr.mxu0 %v464
    %2596 = vmatpush1.msra.mxu0 %v463
    %2597 = vmatprep.subr.mxu0 %v468
    %2598 = vmatpush1.msra.mxu0 %v467
    %2599 = vmatprep.subr.mxu0 %v472
    %2600 = vmatpush1.msra.mxu0 %v471
    %2601 = vmatprep.subr.mxu0 %v476
    %2602 = vmatpush1.msra.mxu0 %v475
    %2603 = vmatprep.subr.mxu0 %v480
    %2604 = vmatpush1.msra.mxu0 %v479
    %2605 = vmatprep.subr.mxu0 %v484
    %2606 = vmatpush1.msra.mxu0 %v483
    %2607 = vmatprep.subr.mxu0 %v488
    %2608 = vmatpush1.msra.mxu0 %v487
    %2609 = vmatprep.mubr.f32.mxu0 %v2544
    %2610 = vmatmul.mubr.f32.gmra.mrb[0].mxu0 %v2526
    %v2611 = vpop.f32.mrb[0].mxu0
    %v2612 = vadd.f32 %v496, %v2611
    %v2613 = vpop.f32.mrb[0].mxu0
    %v2614 = vadd.f32 %v500, %v2613
    %2615 = vdwg.mxu0
    %2616 = vmatprep.subr.mxu0 %v366
    %2617 = vmatpush1.msra.mxu0 %v365
    %2618 = vmatprep.subr.mxu0 %v370
    %2619 = vmatpush1.msra.mxu0 %v369
    %2620 = vmatprep.subr.mxu0 %v374
    %2621 = vmatpush1.msra.mxu0 %v373
    %2622 = vmatprep.subr.mxu0 %v378
    %2623 = vmatpush1.msra.mxu0 %v377
    %2624 = vmatprep.subr.mxu0 %v382
    %2625 = vmatpush1.msra.mxu0 %v381
    %2626 = vmatprep.subr.mxu0 %v386
    %2627 = vmatpush1.msra.mxu0 %v385
    %2628 = vmatprep.subr.mxu0 %v390
    %2629 = vmatpush1.msra.mxu0 %v389
    %2630 = vmatprep.subr.mxu0 %v394
    %2631 = vmatpush1.msra.mxu0 %v393
    %2632 = vmatprep.subr.mxu0 %v398
    %2633 = vmatpush1.msra.mxu0 %v397
    %2634 = vmatprep.subr.mxu0 %v402
    %2635 = vmatpush1.msra.mxu0 %v401
    %2636 = vmatprep.subr.mxu0 %v406
    %2637 = vmatpush1.msra.mxu0 %v405
    %2638 = vmatprep.subr.mxu0 %v410
    %2639 = vmatpush1.msra.mxu0 %v409
    %2640 = vmatprep.subr.mxu0 %v414
    %2641 = vmatpush1.msra.mxu0 %v413
    %2642 = vmatprep.subr.mxu0 %v418
    %2643 = vmatpush1.msra.mxu0 %v417
    %2644 = vmatprep.subr.mxu0 %v422
    %2645 = vmatpush1.msra.mxu0 %v421
    %2646 = vmatprep.subr.mxu0 %v426
    %2647 = vmatpush1.msra.mxu0 %v425
    %2648 = vmatprep.subr.mxu0 %v430
    %2649 = vmatpush1.msra.mxu0 %v429
    %2650 = vmatprep.subr.mxu0 %v434
    %2651 = vmatpush1.msra.mxu0 %v433
    %2652 = vmatprep.subr.mxu0 %v438
    %2653 = vmatpush1.msra.mxu0 %v437
    %2654 = vmatprep.subr.mxu0 %v442
    %2655 = vmatpush1.msra.mxu0 %v441
    %2656 = vmatprep.subr.mxu0 %v446
    %2657 = vmatpush1.msra.mxu0 %v445
    %2658 = vmatprep.subr.mxu0 %v450
    %2659 = vmatpush1.msra.mxu0 %v449
    %2660 = vmatprep.subr.mxu0 %v454
    %2661 = vmatpush1.msra.mxu0 %v453
    %2662 = vmatprep.subr.mxu0 %v458
    %2663 = vmatpush1.msra.mxu0 %v457
    %2664 = vmatprep.subr.mxu0 %v462
    %2665 = vmatpush1.msra.mxu0 %v461
    %2666 = vmatprep.subr.mxu0 %v466
    %2667 = vmatpush1.msra.mxu0 %v465
    %2668 = vmatprep.subr.mxu0 %v470
    %2669 = vmatpush1.msra.mxu0 %v469
    %2670 = vmatprep.subr.mxu0 %v474
    %2671 = vmatpush1.msra.mxu0 %v473
    %2672 = vmatprep.subr.mxu0 %v478
    %2673 = vmatpush1.msra.mxu0 %v477
    %2674 = vmatprep.subr.mxu0 %v482
    %2675 = vmatpush1.msra.mxu0 %v481
    %2676 = vmatprep.subr.mxu0 %v486
    %2677 = vmatpush1.msra.mxu0 %v485
    %2678 = vmatprep.subr.mxu0 %v490
    %2679 = vmatpush1.msra.mxu0 %v489
    %2680 = vmatprep.mubr.f32.mxu0 %v2544
    %2681 = vmatmul.mubr.f32.gmra.mrb[0].mxu0 %v2526
    %v2682 = vpop.f32.mrb[0].mxu0
    %v2683 = vadd.f32 %v504, %v2682
    %v2684 = vpop.f32.mrb[0].mxu0
    %v2685 = vadd.f32 %v508, %v2684
    %2686 = vdwg.mxu0
    %v2687 = vld [vmem:[#allocation2 + $0xe0] sm:$0xff]
    %v2688 = vld [vmem:[#allocation2 + $0xe8] sm:$0xff]
    %v2689 = vld [vmem:[#allocation2 + $0xf0] sm:$0xff]
    %v2690 = vld [vmem:[#allocation2 + $0xf8] sm:$0xff]
    %2691 = vmatprep.subr.mxu0 %v660
    %2692 = vmatpush1.msra.mxu0 %v659
    %2693 = vmatprep.subr.mxu0 %v664
    %2694 = vmatpush1.msra.mxu0 %v663
    %2695 = vmatprep.subr.mxu0 %v668
    %2696 = vmatpush1.msra.mxu0 %v667
    %2697 = vmatprep.subr.mxu0 %v672
    %2698 = vmatpush1.msra.mxu0 %v671
    %2699 = vmatprep.subr.mxu0 %v676
    %2700 = vmatpush1.msra.mxu0 %v675
    %2701 = vmatprep.subr.mxu0 %v680
    %2702 = vmatpush1.msra.mxu0 %v679
    %2703 = vmatprep.subr.mxu0 %v684
    %2704 = vmatpush1.msra.mxu0 %v683
    %2705 = vmatprep.subr.mxu0 %v688
    %2706 = vmatpush1.msra.mxu0 %v687
    %2707 = vmatprep.subr.mxu0 %v692
    %2708 = vmatpush1.msra.mxu0 %v691
    %2709 = vmatprep.subr.mxu0 %v696
    %2710 = vmatpush1.msra.mxu0 %v695
    %2711 = vmatprep.subr.mxu0 %v700
    %2712 = vmatpush1.msra.mxu0 %v699
    %2713 = vmatprep.subr.mxu0 %v704
    %2714 = vmatpush1.msra.mxu0 %v703
    %2715 = vmatprep.subr.mxu0 %v708
    %2716 = vmatpush1.msra.mxu0 %v707
    %2717 = vmatprep.subr.mxu0 %v712
    %2718 = vmatpush1.msra.mxu0 %v711
    %2719 = vmatprep.subr.mxu0 %v716
    %2720 = vmatpush1.msra.mxu0 %v715
    %2721 = vmatprep.subr.mxu0 %v720
    %2722 = vmatpush1.msra.mxu0 %v719
    %2723 = vmatprep.subr.mxu0 0.0
    %2724 = vmatpush1.msra.mxu0 0.0
    %2725 = vmatprep.subr.mxu0 0.0
    %2726 = vmatpush1.msra.mxu0 0.0
    %2727 = vmatprep.subr.mxu0 0.0
    %2728 = vmatpush1.msra.mxu0 0.0
    %2729 = vmatprep.subr.mxu0 0.0
    %2730 = vmatpush1.msra.mxu0 0.0
    %2731 = vmatprep.subr.mxu0 0.0
    %2732 = vmatpush1.msra.mxu0 0.0
    %2733 = vmatprep.subr.mxu0 0.0
    %2734 = vmatpush1.msra.mxu0 0.0
    %2735 = vmatprep.subr.mxu0 0.0
    %2736 = vmatpush1.msra.mxu0 0.0
    %2737 = vmatprep.subr.mxu0 0.0
    %2738 = vmatpush1.msra.mxu0 0.0
    %2739 = vmatprep.subr.mxu0 0.0
    %2740 = vmatpush1.msra.mxu0 0.0
    %2741 = vmatprep.subr.mxu0 0.0
    %2742 = vmatpush1.msra.mxu0 0.0
    %2743 = vmatprep.subr.mxu0 0.0
    %2744 = vmatpush1.msra.mxu0 0.0
    %2745 = vmatprep.subr.mxu0 0.0
    %2746 = vmatpush1.msra.mxu0 0.0
    %2747 = vmatprep.subr.mxu0 0.0
    %2748 = vmatpush1.msra.mxu0 0.0
    %2749 = vmatprep.subr.mxu0 0.0
    %2750 = vmatpush1.msra.mxu0 0.0
    %2751 = vmatprep.subr.mxu0 0.0
    %2752 = vmatpush1.msra.mxu0 0.0
    %2753 = vmatprep.subr.mxu0 0.0
    %2754 = vmatpush1.msra.mxu0 0.0
    %2755 = vmatprep.mubr.f32.mxu0 0.0
    %2756 = vmatmul.mubr.f32.gmra.mrb[0].mxu0 %v2526
    %v2757 = vpop.f32.mrb[0].mxu0
    %v2758 = vadd.f32 0.0, %v2757
    %v2759 = vpop.f32.mrb[0].mxu0
    %v2760 = vadd.f32 0.0, %v2759
    %2761 = vdwg.mxu0
    %2762 = vmatprep.subr.mxu0 %v662
    %2763 = vmatpush1.msra.mxu0 %v661
    %2764 = vmatprep.subr.mxu0 %v666
    %2765 = vmatpush1.msra.mxu0 %v665
    %2766 = vmatprep.subr.mxu0 %v670
    %2767 = vmatpush1.msra.mxu0 %v669
    %2768 = vmatprep.subr.mxu0 %v674
    %2769 = vmatpush1.msra.mxu0 %v673
    %2770 = vmatprep.subr.mxu0 %v678
    %2771 = vmatpush1.msra.mxu0 %v677
    %2772 = vmatprep.subr.mxu0 %v682
    %2773 = vmatpush1.msra.mxu0 %v681
    %2774 = vmatprep.subr.mxu0 %v686
    %2775 = vmatpush1.msra.mxu0 %v685
    %2776 = vmatprep.subr.mxu0 %v690
    %2777 = vmatpush1.msra.mxu0 %v689
    %2778 = vmatprep.subr.mxu0 %v694
    %2779 = vmatpush1.msra.mxu0 %v693
    %2780 = vmatprep.subr.mxu0 %v698
    %2781 = vmatpush1.msra.mxu0 %v697
    %2782 = vmatprep.subr.mxu0 %v702
    %2783 = vmatpush1.msra.mxu0 %v701
    %2784 = vmatprep.subr.mxu0 %v706
    %2785 = vmatpush1.msra.mxu0 %v705
    %2786 = vmatprep.subr.mxu0 %v710
    %2787 = vmatpush1.msra.mxu0 %v709
    %2788 = vmatprep.subr.mxu0 %v714
    %2789 = vmatpush1.msra.mxu0 %v713
    %2790 = vmatprep.subr.mxu0 %v718
    %2791 = vmatpush1.msra.mxu0 %v717
    %2792 = vmatprep.subr.mxu0 %v722
    %2793 = vmatpush1.msra.mxu0 %v721
    %2794 = vmatprep.subr.mxu0 0.0
    %2795 = vmatpush1.msra.mxu0 0.0
    %2796 = vmatprep.subr.mxu0 0.0
    %2797 = vmatpush1.msra.mxu0 0.0
    %2798 = vmatprep.subr.mxu0 0.0
    %2799 = vmatpush1.msra.mxu0 0.0
    %2800 = vmatprep.subr.mxu0 0.0
    %2801 = vmatpush1.msra.mxu0 0.0
    %2802 = vmatprep.subr.mxu0 0.0
    %2803 = vmatpush1.msra.mxu0 0.0
    %2804 = vmatprep.subr.mxu0 0.0
    %2805 = vmatpush1.msra.mxu0 0.0
    %2806 = vmatprep.subr.mxu0 0.0
    %2807 = vmatpush1.msra.mxu0 0.0
    %2808 = vmatprep.subr.mxu0 0.0
    %2809 = vmatpush1.msra.mxu0 0.0
    %2810 = vmatprep.subr.mxu0 0.0
    %2811 = vmatpush1.msra.mxu0 0.0
    %2812 = vmatprep.subr.mxu0 0.0
    %2813 = vmatpush1.msra.mxu0 0.0
    %2814 = vmatprep.subr.mxu0 0.0
    %2815 = vmatpush1.msra.mxu0 0.0
    %2816 = vmatprep.subr.mxu0 0.0
    %2817 = vmatpush1.msra.mxu0 0.0
    %2818 = vmatprep.subr.mxu0 0.0
    %2819 = vmatpush1.msra.mxu0 0.0
    %2820 = vmatprep.subr.mxu0 0.0
    %2821 = vmatpush1.msra.mxu0 0.0
    %2822 = vmatprep.subr.mxu0 0.0
    %2823 = vmatpush1.msra.mxu0 0.0
    %2824 = vmatprep.subr.mxu0 0.0
    %2825 = vmatpush1.msra.mxu0 0.0
    %2826 = vmatprep.mubr.f32.mxu0 0.0
    %2827 = vmatmul.mubr.f32.gmra.mrb[0].mxu0 %v2526
    %v2828 = vpop.f32.mrb[0].mxu0
    %v2829 = vadd.f32 0.0, %v2828
    %v2830 = vpop.f32.mrb[0].mxu0
    %v2831 = vadd.f32 0.0, %v2830
    %2832 = vdwg.mxu0
    %v2833 = vadd.f32 %v2687, %v2758
    %v2834 = vadd.f32 %v2688, %v2760
    %v2835 = vadd.f32 %v2689, %v2829
    %v2836 = vadd.f32 %v2690, %v2831
    %v2837 = vmul.f32 %v2833, 0.5
    %v2838 = vtanh.pop %v2837
    %v2839 = vadd.f32 %v2838, 1.0
    %v2840 = vmul.f32 %v2839, 0.5
    %v2841 = vmul.f32 %v2834, 0.5
    %v2842 = vtanh.pop %v2841
    %v2843 = vadd.f32 %v2842, 1.0
    %v2844 = vmul.f32 %v2843, 0.5
    %v2845 = vmul.f32 %v2835, 0.5
    %v2846 = vtanh.pop %v2845
    %v2847 = vadd.f32 %v2846, 1.0
    %v2848 = vmul.f32 %v2847, 0.5
    %v2849 = vtanh.pop %v2836
    %v2850 = vmul.f32 %v2844, %v2524
    %v2851 = vmul.f32 %v2840, %v2849
    %v2852 = vadd.f32 %v2850, %v2851
    %v2853 = vtanh.pop %v2852
    %v2854 = vmul.f32 %v2848, %v2853
    %v2855 = vmul.f32 %v2612, 0.5
    %v2856 = vtanh.pop %v2855
    %v2857 = vadd.f32 %v2856, 1.0
    %v2858 = vmul.f32 %v2857, 0.5
    %v2859 = vmul.f32 %v2614, 0.5
    %v2860 = vtanh.pop %v2859
    %v2861 = vadd.f32 %v2860, 1.0
    %v2862 = vmul.f32 %v2861, 0.5
    %v2863 = vmul.f32 %v2683, 0.5
    %v2864 = vtanh.pop %v2863
    %v2865 = vadd.f32 %v2864, 1.0
    %v2866 = vmul.f32 %v2865, 0.5
    %v2867 = vtanh.pop %v2685
    %v2868 = vmul.f32 %v2862, %v2542
    %v2869 = vmul.f32 %v2858, %v2867
    %v2870 = vadd.f32 %v2868, %v2869
    %v2871 = vtanh.pop %v2870
    %v2872 = vmul.f32 %v2866, %v2871
    %2873 = vmatprep.subr.mxu0 %v364
    %2874 = vmatpush1.msra.mxu0 %v363
    %2875 = vmatprep.subr.mxu0 %v368
    %2876 = vmatpush1.msra.mxu0 %v367
    %2877 = vmatprep.subr.mxu0 %v372
    %2878 = vmatpush1.msra.mxu0 %v371
    %2879 = vmatprep.subr.mxu0 %v376
    %2880 = vmatpush1.msra.mxu0 %v375
    %2881 = vmatprep.subr.mxu0 %v380
    %2882 = vmatpush1.msra.mxu0 %v379
    %2883 = vmatprep.subr.mxu0 %v384
    %2884 = vmatpush1.msra.mxu0 %v383
    %2885 = vmatprep.subr.mxu0 %v388
    %2886 = vmatpush1.msra.mxu0 %v387
    %2887 = vmatprep.subr.mxu0 %v392
    %2888 = vmatpush1.msra.mxu0 %v391
    %2889 = vmatprep.subr.mxu0 %v396
    %2890 = vmatpush1.msra.mxu0 %v395
    %2891 = vmatprep.subr.mxu0 %v400
    %2892 = vmatpush1.msra.mxu0 %v399
    %2893 = vmatprep.subr.mxu0 %v404
    %2894 = vmatpush1.msra.mxu0 %v403
    %2895 = vmatprep.subr.mxu0 %v408
    %2896 = vmatpush1.msra.mxu0 %v407
    %2897 = vmatprep.subr.mxu0 %v412
    %2898 = vmatpush1.msra.mxu0 %v411
    %2899 = vmatprep.subr.mxu0 %v416
    %2900 = vmatpush1.msra.mxu0 %v415
    %2901 = vmatprep.subr.mxu0 %v420
    %2902 = vmatpush1.msra.mxu0 %v419
    %2903 = vmatprep.subr.mxu0 %v424
    %2904 = vmatpush1.msra.mxu0 %v423
    %2905 = vmatprep.subr.mxu0 %v428
    %2906 = vmatpush1.msra.mxu0 %v427
    %2907 = vmatprep.subr.mxu0 %v432
    %2908 = vmatpush1.msra.mxu0 %v431
    %2909 = vmatprep.subr.mxu0 %v436
    %2910 = vmatpush1.msra.mxu0 %v435
    %2911 = vmatprep.subr.mxu0 %v440
    %2912 = vmatpush1.msra.mxu0 %v439
    %2913 = vmatprep.subr.mxu0 %v444
    %2914 = vmatpush1.msra.mxu0 %v443
    %2915 = vmatprep.subr.mxu0 %v448
    %2916 = vmatpush1.msra.mxu0 %v447
    %2917 = vmatprep.subr.mxu0 %v452
    %2918 = vmatpush1.msra.mxu0 %v451
    %2919 = vmatprep.subr.mxu0 %v456
    %2920 = vmatpush1.msra.mxu0 %v455
    %2921 = vmatprep.subr.mxu0 %v460
    %2922 = vmatpush1.msra.mxu0 %v459
    %2923 = vmatprep.subr.mxu0 %v464
    %2924 = vmatpush1.msra.mxu0 %v463
    %2925 = vmatprep.subr.mxu0 %v468
    %2926 = vmatpush1.msra.mxu0 %v467
    %2927 = vmatprep.subr.mxu0 %v472
    %2928 = vmatpush1.msra.mxu0 %v471
    %2929 = vmatprep.subr.mxu0 %v476
    %2930 = vmatpush1.msra.mxu0 %v475
    %2931 = vmatprep.subr.mxu0 %v480
    %2932 = vmatpush1.msra.mxu0 %v479
    %2933 = vmatprep.subr.mxu0 %v484
    %2934 = vmatpush1.msra.mxu0 %v483
    %2935 = vmatprep.subr.mxu0 %v488
    %2936 = vmatpush1.msra.mxu0 %v487
    %2937 = vmatprep.mubr.f32.mxu0 %v2872
    %2938 = vmatmul.mubr.f32.gmra.mrb[0].mxu0 %v2854
    %v2939 = vpop.f32.mrb[0].mxu0
    %v2940 = vadd.f32 %v496, %v2939
    %v2941 = vpop.f32.mrb[0].mxu0
    %v2942 = vadd.f32 %v500, %v2941
    %2943 = vdwg.mxu0
    %2944 = vmatprep.subr.mxu0 %v366
    %2945 = vmatpush1.msra.mxu0 %v365
    %2946 = vmatprep.subr.mxu0 %v370
    %2947 = vmatpush1.msra.mxu0 %v369
    %2948 = vmatprep.subr.mxu0 %v374
    %2949 = vmatpush1.msra.mxu0 %v373
    %2950 = vmatprep.subr.mxu0 %v378
    %2951 = vmatpush1.msra.mxu0 %v377
    %2952 = vmatprep.subr.mxu0 %v382
    %2953 = vmatpush1.msra.mxu0 %v381
    %2954 = vmatprep.subr.mxu0 %v386
    %2955 = vmatpush1.msra.mxu0 %v385
    %2956 = vmatprep.subr.mxu0 %v390
    %2957 = vmatpush1.msra.mxu0 %v389
    %2958 = vmatprep.subr.mxu0 %v394
    %2959 = vmatpush1.msra.mxu0 %v393
    %2960 = vmatprep.subr.mxu0 %v398
    %2961 = vmatpush1.msra.mxu0 %v397
    %2962 = vmatprep.subr.mxu0 %v402
    %2963 = vmatpush1.msra.mxu0 %v401
    %2964 = vmatprep.subr.mxu0 %v406
    %2965 = vmatpush1.msra.mxu0 %v405
    %2966 = vmatprep.subr.mxu0 %v410
    %2967 = vmatpush1.msra.mxu0 %v409
    %2968 = vmatprep.subr.mxu0 %v414
    %2969 = vmatpush1.msra.mxu0 %v413
    %2970 = vmatprep.subr.mxu0 %v418
    %2971 = vmatpush1.msra.mxu0 %v417
    %2972 = vmatprep.subr.mxu0 %v422
    %2973 = vmatpush1.msra.mxu0 %v421
    %2974 = vmatprep.subr.mxu0 %v426
    %2975 = vmatpush1.msra.mxu0 %v425
    %2976 = vmatprep.subr.mxu0 %v430
    %2977 = vmatpush1.msra.mxu0 %v429
    %2978 = vmatprep.subr.mxu0 %v434
    %2979 = vmatpush1.msra.mxu0 %v433
    %2980 = vmatprep.subr.mxu0 %v438
    %2981 = vmatpush1.msra.mxu0 %v437
    %2982 = vmatprep.subr.mxu0 %v442
    %2983 = vmatpush1.msra.mxu0 %v441
    %2984 = vmatprep.subr.mxu0 %v446
    %2985 = vmatpush1.msra.mxu0 %v445
    %2986 = vmatprep.subr.mxu0 %v450
    %2987 = vmatpush1.msra.mxu0 %v449
    %2988 = vmatprep.subr.mxu0 %v454
    %2989 = vmatpush1.msra.mxu0 %v453
    %2990 = vmatprep.subr.mxu0 %v458
    %2991 = vmatpush1.msra.mxu0 %v457
    %2992 = vmatprep.subr.mxu0 %v462
    %2993 = vmatpush1.msra.mxu0 %v461
    %2994 = vmatprep.subr.mxu0 %v466
    %2995 = vmatpush1.msra.mxu0 %v465
    %2996 = vmatprep.subr.mxu0 %v470
    %2997 = vmatpush1.msra.mxu0 %v469
    %2998 = vmatprep.subr.mxu0 %v474
    %2999 = vmatpush1.msra.mxu0 %v473
    %3000 = vmatprep.subr.mxu0 %v478
    %3001 = vmatpush1.msra.mxu0 %v477
    %3002 = vmatprep.subr.mxu0 %v482
    %3003 = vmatpush1.msra.mxu0 %v481
    %3004 = vmatprep.subr.mxu0 %v486
    %3005 = vmatpush1.msra.mxu0 %v485
    %3006 = vmatprep.subr.mxu0 %v490
    %3007 = vmatpush1.msra.mxu0 %v489
    %3008 = vmatprep.mubr.f32.mxu0 %v2872
    %3009 = vmatmul.mubr.f32.gmra.mrb[0].mxu0 %v2854
    %v3010 = vpop.f32.mrb[0].mxu0
    %v3011 = vadd.f32 %v504, %v3010
    %v3012 = vpop.f32.mrb[0].mxu0
    %v3013 = vadd.f32 %v508, %v3012
    %3014 = vdwg.mxu0
    %v3015 = vmul.f32 %v2940, 0.5
    %v3016 = vtanh.pop %v3015
    %v3017 = vadd.f32 %v3016, 1.0
    %v3018 = vmul.f32 %v3017, 0.5
    %v3019 = vmul.f32 %v2942, 0.5
    %v3020 = vtanh.pop %v3019
    %v3021 = vadd.f32 %v3020, 1.0
    %v3022 = vmul.f32 %v3021, 0.5
    %v3023 = vmul.f32 %v3011, 0.5
    %v3024 = vtanh.pop %v3023
    %v3025 = vadd.f32 %v3024, 1.0
    %v3026 = vmul.f32 %v3025, 0.5
    %v3027 = vtanh.pop %v3013
    %v3028 = vmul.f32 %v3022, %v2870
    %v3029 = vmul.f32 %v3018, %v3027
    %v3030 = vadd.f32 %v3028, %v3029
    %v3031 = vtanh.pop %v3030
    %v3032 = vmul.f32 %v3026, %v3031
    %v3033 = vld [vmem:[#allocation12] sm:$0xff]
    %v3034 = vld [vmem:[#allocation12 + $0x8] sm:$0xff]
    %v3035 = vld [vmem:[#allocation12 + $0x10] sm:$0xff]
    %v3036 = vld [vmem:[#allocation12 + $0x18] sm:$0xff]
    %v3037 = vld [vmem:[#allocation12 + $0x20] sm:$0xff]
    %v3038 = vld [vmem:[#allocation12 + $0x28] sm:$0xff]
    %v3039 = vld [vmem:[#allocation12 + $0x30] sm:$0xff]
    %v3040 = vld [vmem:[#allocation12 + $0x38] sm:$0xff]
    %v3041 = vld [vmem:[#allocation12 + $0x40] sm:$0xff]
    %v3042 = vld [vmem:[#allocation12 + $0x48] sm:$0xff]
    %v3043 = vld [vmem:[#allocation12 + $0x50] sm:$0xff]
    %v3044 = vld [vmem:[#allocation12 + $0x58] sm:$0xff]
    %v3045 = vld [vmem:[#allocation12 + $0x60] sm:$0xff]
    %v3046 = vld [vmem:[#allocation12 + $0x68] sm:$0xff]
    %v3047 = vld [vmem:[#allocation12 + $0x70] sm:$0xff]
    %v3048 = vld [vmem:[#allocation12 + $0x78] sm:$0xff]
    %v3049 = vld [vmem:[%s6] sm:$0x1]
    %v3051 = vlaneseq
    %v3052 = vshrl.u32 %v3051, 7
    %v3053 = vsub.s32 0, %v3052
    %v3054 = vrot.slane %v3049, %v3053
    %3056 = vmatprep.subr.mxu0 0.0
    %3057 = vmatpush1.msra.mxu0 %v3033
    %3058 = vmatprep.subr.mxu0 0.0
    %3059 = vmatpush1.msra.mxu0 %v3034
    %3060 = vmatprep.subr.mxu0 0.0
    %3061 = vmatpush1.msra.mxu0 %v3035
    %3062 = vmatprep.subr.mxu0 0.0
    %3063 = vmatpush1.msra.mxu0 %v3036
    %3064 = vmatprep.subr.mxu0 0.0
    %3065 = vmatpush1.msra.mxu0 %v3037
    %3066 = vmatprep.subr.mxu0 0.0
    %3067 = vmatpush1.msra.mxu0 %v3038
    %3068 = vmatprep.subr.mxu0 0.0
    %3069 = vmatpush1.msra.mxu0 %v3039
    %3070 = vmatprep.subr.mxu0 0.0
    %3071 = vmatpush1.msra.mxu0 %v3040
    %3072 = vmatprep.subr.mxu0 0.0
    %3073 = vmatpush1.msra.mxu0 %v3041
    %3074 = vmatprep.subr.mxu0 0.0
    %3075 = vmatpush1.msra.mxu0 %v3042
    %3076 = vmatprep.subr.mxu0 0.0
    %3077 = vmatpush1.msra.mxu0 %v3043
    %3078 = vmatprep.subr.mxu0 0.0
    %3079 = vmatpush1.msra.mxu0 %v3044
    %3080 = vmatprep.subr.mxu0 0.0
    %3081 = vmatpush1.msra.mxu0 %v3045
    %3082 = vmatprep.subr.mxu0 0.0
    %3083 = vmatpush1.msra.mxu0 %v3046
    %3084 = vmatprep.subr.mxu0 0.0
    %3085 = vmatpush1.msra.mxu0 %v3047
    %3086 = vmatprep.subr.mxu0 0.0
    %3087 = vmatpush1.msra.mxu0 %v3048
    %3088 = vmatprep.subr.mxu0 0.0
    %3089 = vmatpush1.msra.mxu0 0.0
    %3090 = vmatprep.subr.mxu0 0.0
    %3091 = vmatpush1.msra.mxu0 0.0
    %3092 = vmatprep.subr.mxu0 0.0
    %3093 = vmatpush1.msra.mxu0 0.0
    %3094 = vmatprep.subr.mxu0 0.0
    %3095 = vmatpush1.msra.mxu0 0.0
    %3096 = vmatprep.subr.mxu0 0.0
    %3097 = vmatpush1.msra.mxu0 0.0
    %3098 = vmatprep.subr.mxu0 0.0
    %3099 = vmatpush1.msra.mxu0 0.0
    %3100 = vmatprep.subr.mxu0 0.0
    %3101 = vmatpush1.msra.mxu0 0.0
    %3102 = vmatprep.subr.mxu0 0.0
    %3103 = vmatpush1.msra.mxu0 0.0
    %3104 = vmatprep.subr.mxu0 0.0
    %3105 = vmatpush1.msra.mxu0 0.0
    %3106 = vmatprep.subr.mxu0 0.0
    %3107 = vmatpush1.msra.mxu0 0.0
    %3108 = vmatprep.subr.mxu0 0.0
    %3109 = vmatpush1.msra.mxu0 0.0
    %3110 = vmatprep.subr.mxu0 0.0
    %3111 = vmatpush1.msra.mxu0 0.0
    %3112 = vmatprep.subr.mxu0 0.0
    %3113 = vmatpush1.msra.mxu0 0.0
    %3114 = vmatprep.subr.mxu0 0.0
    %3115 = vmatpush1.msra.mxu0 0.0
    %3116 = vmatprep.subr.mxu0 0.0
    %3117 = vmatpush1.msra.mxu0 0.0
    %3118 = vmatprep.subr.mxu0 0.0
    %3119 = vmatpush1.msra.mxu0 0.0
    %3120 = vmatprep.mubr.f32.mxu0 0.0
    %3121 = vmatmul.mubr.f32.gmra.mrb[0].mxu0 %v3032
    %v3122 = vpop.f32.mrb[0].mxu0
    %v3123 = vadd.f32 %v3054, %v3122
    %v3124 = vpop.f32.mrb[0].mxu0
    %3125 = vdwg.mxu0
    %3126 = vst [vmem:[%s7] sm:$0xff] %v3123
    // Predicated region
    $region54: #{text_lstm_forward.1} parent=1 // pred_check
      _
    $region55: #{text_lstm_forward.1} parent=1 // pred_check_branch
      %3128 = sbr.rel (0) target = $region57
    $region56: #{text_lstm_forward.1} parent=1 // pred_region
      _
    $region57: #{text_lstm_forward.1} parent=1 // pred_fallthru
      _
    // Predicated region
    $region58: #{text_lstm_forward.1} parent=1 // pred_check
      _
    $region59: #{text_lstm_forward.1} parent=1 // pred_check_branch
      %3130 = sbr.rel (0) target = $region61
    $region60: #{text_lstm_forward.1} parent=1 // pred_region
      _
    $region61: #{text_lstm_forward.1} parent=1 // pred_fallthru
      _
    %3131 = vsyncpa [#allocation4], 1
    %3132 = vsyncpa [#allocation8], 1
    %3133 = vsyncpa [#allocation11], 1
    %3134 = vsyncpa [#allocation5], 1

</llo_original>
